<compile_context>
chip_gen: v5e
topology: v5e:2x2
jax: 0.10.0
libtpu: 0.0.40
codegen_flags: <defaults>
</compile_context>

<pallas_src>
import functools

import jax
import jax.numpy as jnp
from jax import lax
from jax.experimental import pallas as pl
from jax.experimental.pallas import tpu as pltpu

NUM_GROUPS = 32
EPS = 1e-5
NEG_INF = -1e5                 # empty-range sentinel (matches the AFSD CUDA kernel)
LANE = 128
MM_DTYPE = jnp.bfloat16        # MXU operand dtype (bf16-native on v6e/v7x); f32 accumulate


# ------------------------------ kernel helpers ------------------------------ #

def _gn_relu(y, p, a_mat, bb, t):
    """bias + GroupNorm + affine + ReLU on a [bb*t, C] tile, stats per batch elem.

    p is [3, C] = (bias, gamma, beta).  a_mat is the precomputed [C, C]
    averaging matrix m.diag(1/(t*group_size)).m^T (zero rows/cols for padded
    channels), so each GN needs only 2 tiny MXU dots; the column sums are XLU
    sublane reduces.  Variance is two-pass (subtract mean first).
    """
    bias, gamma, beta = p[0:1, :], p[1:2, :], p[2:3, :]
    y = y + bias
    outs = []
    for b in range(bb):                                   # static, bb is tiny
        yb = y[b * t:(b + 1) * t, :]                      # aligned static row slice
        colsum = jnp.sum(yb, axis=0, keepdims=True)       # [1, C]  (XLU)
        mean_c = jnp.dot(colsum, a_mat, preferred_element_type=jnp.float32)
        d = yb - mean_c
        var_c = jnp.dot(jnp.sum(d * d, axis=0, keepdims=True), a_mat,
                        preferred_element_type=jnp.float32)
        outs.append(jnp.maximum(d * lax.rsqrt(var_c + EPS) * gamma + beta, 0.0))
    return outs[0] if bb == 1 else jnp.concatenate(outs, axis=0)


def _boundary_max_pool(x, seg):
    """AFSD BoundaryMaxPooling for one batch element, fully on values (vregs).

    x: [T_in, C] f32 value.  seg: [T_out, 4] f32 value.  First C//2 channels
    pool over [floor(seg0), floor(seg1)], second half over
    [floor(seg2), floor(seg3)]; empty ranges yield the -1e5 sentinel.
    Statically unrolled running max over T_in -- no 3-D mask tensors, no
    VMEM round trips.
    """
    t_in, c = x.shape
    t_out = seg.shape[0]
    s = jnp.floor(seg).astype(jnp.int32)
    c_idx = lax.broadcasted_iota(jnp.int32, (t_out, c), 1)
    first_half = c_idx < (c // 2)
    start_tc = jnp.where(first_half, s[:, 0:1], s[:, 2:3])            # [T_out, C]
    end_tc = jnp.where(first_half, s[:, 1:2], s[:, 3:4])              # [T_out, C]
    acc = jnp.full((t_out, c), NEG_INF, jnp.float32)
    for i in range(t_in):                                 # static unroll (16 / 32 iters)
        hit = (i >= start_tc) & (i <= end_tc)
        acc = jnp.maximum(acc, jnp.where(hit, x[i:i + 1, :], NEG_INF))
    return acc


# -------------------------------- fused kernel ------------------------------ #

def _proposal_branch_kernel(
        f_ref, fl_ref, xlc_ref, seg_ref, fseg_ref,
        w1_ref, p1_ref, a1_ref,
        w2_ref, p2_ref, a2_ref,
        w3r_ref, w3f_ref, w3s_ref, w3x_ref, p3_ref, a3_ref,
        o_prop_ref, o_lr_ref, *, bb, t, t_frame):
    pc2 = o_lr_ref.shape[1]                       # 2 * proposal_channels (lr width)

    # --- fused cur_point_conv + lr_conv: one wide bf16 MXU matmul + GN/ReLU ---
    y1 = jnp.dot(f_ref[...].astype(MM_DTYPE), w1_ref[...],
                 preferred_element_type=jnp.float32)                  # [bb*T, 2PC + PC]
    a1 = _gn_relu(y1, p1_ref[...], a1_ref[...], bb, t)
    feat_lr = a1[:, :pc2]                                             # stays in vregs
    o_lr_ref[...] = feat_lr.astype(o_lr_ref.dtype)                    # lane-dense store
    fm_short = a1[:, pc2:]                                            # [bb*T, PC]

    # --- boundary max pooling, per batch element, on values ---
    seg = seg_ref[...]
    fseg = fseg_ref[...]
    fl = fl_ref[...]

    def _pool_batched(x, s, t_in):
        parts = [_boundary_max_pool(x[b * t_in:(b + 1) * t_in, :],
                                    s[b * t:(b + 1) * t, :]) for b in range(bb)]
        return parts[0] if bb == 1 else jnp.concatenate(parts, axis=0)

    prop_feature = _pool_batched(feat_lr, seg, t)                     # [bb*T, 2PC]
    roi_pooled = _pool_batched(fl, fseg, t_frame)                     # [bb*T, PC]

    # --- roi conv + GN + ReLU ---
    y2 = jnp.dot(roi_pooled.astype(MM_DTYPE), w2_ref[...],
                 preferred_element_type=jnp.float32)
    prop_roi = _gn_relu(y2, p2_ref[...], a2_ref[...], bb, t)          # [bb*T, PC]

    # --- proposal conv via split-K accumulation (never materializes the 756-ch concat;
    #     the two 250-ch externals arrive pre-fused as one lane-dense 512 slab) ---
    y3 = jnp.dot(prop_roi.astype(MM_DTYPE), w3r_ref[...], preferred_element_type=jnp.float32)
    y3 = y3 + jnp.dot(prop_feature.astype(MM_DTYPE), w3f_ref[...], preferred_element_type=jnp.float32)
    y3 = y3 + jnp.dot(fm_short.astype(MM_DTYPE), w3s_ref[...], preferred_element_type=jnp.float32)
    y3 = y3 + jnp.dot(xlc_ref[...], w3x_ref[...], preferred_element_type=jnp.float32)
    o_prop_ref[...] = _gn_relu(y3, p3_ref[...], a3_ref[...], bb, t
                               ).astype(o_prop_ref.dtype)             # padding cols == 0


# --------------------------------- wrapper ---------------------------------- #

def _avg_matrix(c, groups, rows):
    """[C, C] GroupNorm averaging matrix: (m @ m.T) / (rows * group_size)."""
    gs = c // groups
    m = (jnp.arange(c)[:, None] // gs == jnp.arange(groups)[None, :]).astype(jnp.float32)
    return (m @ m.T) / float(rows * gs)


def proposal_branch_loc_forward(params, feature, frame_level_feature, segments,
                                frame_segments, feature_lastclass, conf_result_feature,
                                batch_block=None):
    """Forward pass.  Dense tensors follow the PyTorch NCW layout [B, C, T].

    batch_block: batch elements processed per grid step.  Default (None) folds
    the whole batch into one step (best for single-TC v5e/v6e at these sizes);
    on v7x pass B//2 (or 1) to spread batch elements over both TensorCores.
    """
    B, Cin, T = feature.shape
    PC = params["cur_point"]["w"].shape[1]
    PC2 = 2 * PC
    Tf = frame_level_feature.shape[2]
    CL = feature_lastclass.shape[1]
    CC = conf_result_feature.shape[1]
    Cx = CL + CC
    Cxpad = ((Cx + LANE - 1) // LANE) * LANE
    Cout = params["proposal"]["w"].shape[1]
    Cpad = ((Cout + LANE - 1) // LANE) * LANE          # lane-dense proposal output width

    bb = B if batch_block is None else batch_block
    assert B % bb == 0
    nblk = B // bb

    to_tc = lambda a: jnp.transpose(a, (0, 2, 1))      # NCW -> NTC (channels last)
    # TODO(synk): the NCW->NTC transposes stay in XLA; they could be folded into
    # the kernel with transposed-LHS dot_generals if they ever show up in profiles.
    f2 = to_tc(feature).reshape(B * T, Cin)
    fl2 = to_tc(frame_level_feature).reshape(B * Tf, PC)
    # One lane-dense bf16 slab for feature_lastclass ++ ConfResult_feature (500 -> 512).
    xlc = jnp.concatenate([to_tc(feature_lastclass), to_tc(conf_result_feature)], axis=-1)
    xlc2 = jnp.pad(xlc, ((0, 0), (0, 0), (0, Cxpad - Cx))
                   ).reshape(B * T, Cxpad).astype(MM_DTYPE)
    seg2 = segments.reshape(B * T, 4)
    fseg2 = frame_segments.reshape(B * T, 4)

    bf = lambda w: w.astype(MM_DTYPE)

    # fused cur_point + lr conv (lr channels first so the feat_lr slice is vreg
    # aligned); joint GroupNorm via one block-diagonal averaging matrix.
    w1 = bf(jnp.concatenate([params["lr"]["w"], params["cur_point"]["w"]], axis=1))
    p1 = jnp.stack([jnp.concatenate([params["lr"][k], params["cur_point"][k]])
                    for k in ("b", "gamma", "beta")])                            # [3, 3PC]
    A1 = jnp.block(
        [[_avg_matrix(PC2, NUM_GROUPS, T), jnp.zeros((PC2, PC), jnp.float32)],
         [jnp.zeros((PC, PC2), jnp.float32), _avg_matrix(PC, NUM_GROUPS, T)]])

    # roi conv
    w2 = bf(params["roi"]["w"])
    p2 = jnp.stack([params["roi"][k] for k in ("b", "gamma", "beta")])
    A2 = _avg_matrix(PC, NUM_GROUPS, T)

    # proposal conv: pad Cout -> Cpad with zeros (unmasked stores) and split the
    # (4*PC + 500)-row weight into per-source blocks (no channel concat); the
    # lastclass/conf rows are fused into one [512, Cpad] block.
    wp = jnp.pad(params["proposal"]["w"], ((0, 0), (0, Cpad - Cout)))
    o0, o1, o2 = PC, PC + PC2, PC + PC2 + PC
    w3r, w3f, w3s = bf(wp[:o0]), bf(wp[o0:o1]), bf(wp[o1:o2])
    w3x = bf(jnp.pad(wp[o2:], ((0, Cxpad - Cx), (0, 0))))                        # [512, Cpad]
    pad1 = lambda v: jnp.pad(v, (0, Cpad - Cout))
    p3 = jnp.stack([pad1(params["proposal"][k]) for k in ("b", "gamma", "beta")])
    A3 = jnp.pad(_avg_matrix(Cout, NUM_GROUPS, T),
                 ((0, Cpad - Cout), (0, Cpad - Cout)))

    operands = (f2, fl2, xlc2, seg2, fseg2, w1, p1, A1, w2, p2, A2,
                w3r, w3f, w3s, w3x, p3, A3)

    # Advisory cost estimate so XLA can schedule the surrounding transposes.
    conv_kn = [(Cin, PC2 + PC), (PC, PC), (PC, Cpad), (PC2, Cpad), (PC, Cpad), (Cxpad, Cpad)]
    flops = 2 * B * T * sum(k * n for k, n in conv_kn)
    flops += 2 * B * 2 * ((PC2 + PC) ** 2 + PC * PC + Cpad * Cpad)   # GN stat matmuls
    bytes_accessed = sum(int(a.size) * a.dtype.itemsize for a in operands) \
        + B * T * (Cpad + PC2) * 4
    cost = pl.CostEstimate(flops=int(flops),
                           transcendentals=int(B * (PC2 + PC + PC + Cpad)),
                           bytes_accessed=int(bytes_accessed))

    row_spec = lambda r, c: pl.BlockSpec((r, c), lambda g: (g, 0))
    const_spec = lambda shape: pl.BlockSpec(shape, lambda g: (0, 0))

    kernel = functools.partial(_proposal_branch_kernel, bb=bb, t=T, t_frame=Tf)

    prop2, lr2 = pl.pallas_call(
        kernel,
        out_shape=(jax.ShapeDtypeStruct((B * T, Cpad), jnp.float32),
                   jax.ShapeDtypeStruct((B * T, PC2), jnp.float32)),
        grid=(nblk,),
        in_specs=[
            row_spec(bb * T, Cin), row_spec(bb * Tf, PC), row_spec(bb * T, Cxpad),
            row_spec(bb * T, 4), row_spec(bb * T, 4),
            const_spec((Cin, PC2 + PC)), const_spec((3, PC2 + PC)),
            const_spec((PC2 + PC, PC2 + PC)),
            const_spec((PC, PC)), const_spec((3, PC)), const_spec((PC, PC)),
            const_spec((PC, Cpad)), const_spec((PC2, Cpad)), const_spec((PC, Cpad)),
            const_spec((Cxpad, Cpad)), const_spec((3, Cpad)), const_spec((Cpad, Cpad)),
        ],
        out_specs=(row_spec(bb * T, Cpad), row_spec(bb * T, PC2)),
        compiler_params=pltpu.CompilerParams(
            dimension_semantics=("parallel",),
            vmem_limit_bytes=32 * 1024 * 1024),
        cost_estimate=cost,
    )(*operands)

    prop = prop2.reshape(B, T, Cpad)[:, :, :Cout]
    feat_lr = lr2.reshape(B, T, PC2)
    to_ct = lambda a: jnp.transpose(a, (0, 2, 1))
    return to_ct(prop), to_ct(feat_lr)


# ------------------------------ parameter init ------------------------------ #

def init_params(key, in_channels, proposal_channels):
    def conv_p(k, cin, cout):
        k1, k2, k3, k4 = jax.random.split(k, 4)
        return dict(
            w=jax.random.normal(k1, (cin, cout), jnp.float32) / jnp.sqrt(float(cin)),
            b=0.01 * jax.random.normal(k2, (cout,), jnp.float32),
            gamma=1.0 + 0.1 * jax.random.normal(k3, (cout,), jnp.float32),
            beta=0.1 * jax.random.normal(k4, (cout,), jnp.float32),
        )

    k0, k1, k2, k3 = jax.random.split(key, 4)
    return dict(
        cur_point=conv_p(k0, in_channels, proposal_channels),
        lr=conv_p(k1, in_channels, proposal_channels * 2),
        roi=conv_p(k2, proposal_channels, proposal_channels),
        proposal=conv_p(k3, proposal_channels * 4 + 500, in_channels),
    )


# ----------------------------- pure-JAX reference ---------------------------- #

def _ref_conv_gn_relu(x, w, b, gamma, beta):
    y = jnp.einsum("btc,cd->btd", x.astype(MM_DTYPE), w.astype(MM_DTYPE),
                   preferred_element_type=jnp.float32) + b
    B, T, C = y.shape
    yg = y.reshape(B, T, NUM_GROUPS, C // NUM_GROUPS)
    mean = yg.mean(axis=(1, 3), keepdims=True)
    var = yg.var(axis=(1, 3), keepdims=True)
    yn = ((yg - mean) / jnp.sqrt(var + EPS)).reshape(B, T, C)
    return jnp.maximum(yn * gamma + beta, 0.0)


def _ref_boundary_pool(x, seg):
    B, T_in, C = x.shape
    s = jnp.floor(seg).astype(jnp.int32)
    first = (jnp.arange(C) < C // 2)[None, None, :]
    start = jnp.where(first, s[:, :, 0:1], s[:, :, 2:3])              # [B, T_out, C]
    end = jnp.where(first, s[:, :, 1:2], s[:, :, 3:4])
    i = jnp.arange(T_in)[None, None, :, None]
    mask = (i >= start[:, :, None, :]) & (i <= end[:, :, None, :])
    return jnp.where(mask, x[:, None, :, :], NEG_INF).max(axis=2)


def _ref_forward(params, feature, frame_level_feature, segments,
                 frame_segments, feature_lastclass, conf_result_feature):
    to_tc = lambda a: jnp.transpose(a, (0, 2, 1))
    to_ct = lambda a: jnp.transpose(a, (0, 2, 1))
    f, fl = to_tc(feature), to_tc(frame_level_feature)
    fm_short = _ref_conv_gn_relu(f, **params["cur_point"])
    feat_lr = _ref_conv_gn_relu(f, **params["lr"])
    prop_feature = _ref_boundary_pool(feat_lr, segments)
    prop_roi = _ref_conv_gn_relu(_ref_boundary_pool(fl, frame_segments), **params["roi"])
    cat = jnp.concatenate([prop_roi, prop_feature, fm_short,
                           to_tc(feature_lastclass), to_tc(conf_result_feature)], axis=-1)
    return to_ct(_ref_conv_gn_relu(cat, **params["proposal"])), to_ct(feat_lr)


# ----------------------------------- main ------------------------------------ #

if __name__ == "__main__":
    B = 2
    in_channels = 64            # must be divisible by 32 (GroupNorm)
    proposal_channels = 64      # must be divisible by 32 (GroupNorm)
    T = 16                      # coarse temporal length
    T_frame = 32                # frame-level temporal length
    C_last, C_conf = 250, 250   # feature_lastclass + ConfResult_feature = 500 channels

    key = jax.random.PRNGKey(0)
    kp, k1, k2, k3, k4, k5, k6 = jax.random.split(key, 7)

    params = init_params(kp, in_channels, proposal_channels)

    feature = jax.random.normal(k1, (B, in_channels, T), jnp.float32)
    frame_level_feature = jax.random.normal(k2, (B, proposal_channels, T_frame), jnp.float32)
    feature_lastclass = jax.random.normal(k3, (B, C_last, T), jnp.float32)
    conf_result_feature = jax.random.normal(k4, (B, C_conf, T), jnp.float32)

    def make_segments(k, T_out, T_in):
        ka, kb = jax.random.split(k)
        starts = jax.random.uniform(ka, (B, T_out, 2), minval=0.0, maxval=T_in / 2)
        lengths = jax.random.uniform(kb, (B, T_out, 2), minval=1.0, maxval=T_in / 2)
        ends = jnp.minimum(starts + lengths, float(T_in - 1))
        return jnp.stack([starts[..., 0], ends[..., 0],
                          starts[..., 1], ends[..., 1]], axis=-1)  # [B, T_out, 4]

    segments = make_segments(k5, T, T)
    frame_segments = make_segments(k6, T, T_frame)

    fwd = jax.jit(proposal_branch_loc_forward)
    prop_out, feat_lr = fwd(params, feature, frame_level_feature, segments,
                            frame_segments, feature_lastclass, conf_result_feature)
    jax.block_until_ready((prop_out, feat_lr))

    # Sanity check against a pure-JAX reference (same bf16 matmul operands).
    # NOTE: empty segments produce the -1e5 sentinel which rounds to ~-99840 in
    # bf16 before the downstream matmuls; the reference does the same.
    ref_prop, ref_lr = jax.jit(_ref_forward)(
        params, feature, frame_level_feature, segments, frame_segments,
        feature_lastclass, conf_result_feature)
    jax.block_until_ready((ref_prop, ref_lr))

    assert prop_out.shape == (B, in_channels, T)
    assert feat_lr.shape == (B, 2 * proposal_channels, T)
    assert jnp.allclose(prop_out, ref_prop, atol=5e-3, rtol=5e-3)
    assert jnp.allclose(feat_lr, ref_lr, atol=5e-3, rtol=5e-3)

    print("KERNEL_OK")
</pallas_src>

<mosaic_0001>
module attributes {stable_mosaic.version = 11 : i64} {
  func.func @_proposal_branch_kernel(%arg0: i32, %arg1: memref<32x64xf32, #tpu.memory_space<vmem>>, %arg2: memref<64x64xf32, #tpu.memory_space<vmem>>, %arg3: memref<32x512xbf16, #tpu.memory_space<vmem>>, %arg4: memref<32x4xf32, #tpu.memory_space<vmem>>, %arg5: memref<32x4xf32, #tpu.memory_space<vmem>>, %arg6: memref<64x192xbf16, #tpu.memory_space<vmem>>, %arg7: memref<3x192xf32, #tpu.memory_space<vmem>>, %arg8: memref<192x192xf32, #tpu.memory_space<vmem>>, %arg9: memref<64x64xbf16, #tpu.memory_space<vmem>>, %arg10: memref<3x64xf32, #tpu.memory_space<vmem>>, %arg11: memref<64x64xf32, #tpu.memory_space<vmem>>, %arg12: memref<64x128xbf16, #tpu.memory_space<vmem>>, %arg13: memref<128x128xbf16, #tpu.memory_space<vmem>>, %arg14: memref<64x128xbf16, #tpu.memory_space<vmem>>, %arg15: memref<512x128xbf16, #tpu.memory_space<vmem>>, %arg16: memref<3x128xf32, #tpu.memory_space<vmem>>, %arg17: memref<128x128xf32, #tpu.memory_space<vmem>>, %arg18: memref<32x128xf32, #tpu.memory_space<vmem>>, %arg19: memref<32x128xf32, #tpu.memory_space<vmem>>) attributes {dimension_semantics = [#tpu.dimension_semantics<parallel>], iteration_bounds = array<i64: 1>, scalar_prefetch = 0 : i64, scratch_operands = 0 : i64, tpu.core_type = #tpu.core_type<tc>, window_params = [{transform_indices = @transform_0, window_bounds = array<i64: 32, 64>}, {transform_indices = @transform_1, window_bounds = array<i64: 64, 64>}, {transform_indices = @transform_2, window_bounds = array<i64: 32, 512>}, {transform_indices = @transform_3, window_bounds = array<i64: 32, 4>}, {transform_indices = @transform_4, window_bounds = array<i64: 32, 4>}, {pipeline_mode = #tpu.pipeline_mode<synchronous>, transform_indices = @transform_5, window_bounds = array<i64: 64, 192>}, {pipeline_mode = #tpu.pipeline_mode<synchronous>, transform_indices = @transform_6, window_bounds = array<i64: 3, 192>}, {pipeline_mode = #tpu.pipeline_mode<synchronous>, transform_indices = @transform_7, window_bounds = array<i64: 192, 192>}, {pipeline_mode = #tpu.pipeline_mode<synchronous>, transform_indices = @transform_8, window_bounds = array<i64: 64, 64>}, {pipeline_mode = #tpu.pipeline_mode<synchronous>, transform_indices = @transform_9, window_bounds = array<i64: 3, 64>}, {pipeline_mode = #tpu.pipeline_mode<synchronous>, transform_indices = @transform_10, window_bounds = array<i64: 64, 64>}, {pipeline_mode = #tpu.pipeline_mode<synchronous>, transform_indices = @transform_11, window_bounds = array<i64: 64, 128>}, {pipeline_mode = #tpu.pipeline_mode<synchronous>, transform_indices = @transform_12, window_bounds = array<i64: 128, 128>}, {pipeline_mode = #tpu.pipeline_mode<synchronous>, transform_indices = @transform_13, window_bounds = array<i64: 64, 128>}, {pipeline_mode = #tpu.pipeline_mode<synchronous>, transform_indices = @transform_14, window_bounds = array<i64: 512, 128>}, {pipeline_mode = #tpu.pipeline_mode<synchronous>, transform_indices = @transform_15, window_bounds = array<i64: 3, 128>}, {pipeline_mode = #tpu.pipeline_mode<synchronous>, transform_indices = @transform_16, window_bounds = array<i64: 128, 128>}, {transform_indices = @transform_17, window_bounds = array<i64: 32, 128>}, {transform_indices = @transform_18, window_bounds = array<i64: 32, 128>}]} {
    %c0 = arith.constant 0 : index
    %c0_0 = arith.constant 0 : index
    %0 = vector.load %arg1[%c0, %c0_0] : memref<32x64xf32, #tpu.memory_space<vmem>>, vector<32x64xf32>
    %1 = arith.truncf %0 : vector<32x64xf32> to vector<32x64xbf16>
    %c0_1 = arith.constant 0 : index
    %c0_2 = arith.constant 0 : index
    %2 = vector.load %arg6[%c0_1, %c0_2] : memref<64x192xbf16, #tpu.memory_space<vmem>>, vector<64x192xbf16>
    %cst = arith.constant dense<0.000000e+00> : vector<32x192xf32>
    %3 = tpu.matmul %1, %2, %cst {dimension_numbers = #tpu.dot_dimension_numbers<[1], [0], [0], [1], [0, 0, 1, 1], [], []>} : vector<32x64xbf16>, vector<64x192xbf16>, vector<32x192xf32> -> vector<32x192xf32>
    %c0_3 = arith.constant 0 : index
    %c0_4 = arith.constant 0 : index
    %4 = vector.load %arg7[%c0_3, %c0_4] : memref<3x192xf32, #tpu.memory_space<vmem>>, vector<3x192xf32>
    %c0_5 = arith.constant 0 : index
    %c0_6 = arith.constant 0 : index
    %5 = vector.load %arg8[%c0_5, %c0_6] : memref<192x192xf32, #tpu.memory_space<vmem>>, vector<192x192xf32>
    %6 = vector.extract_strided_slice %4 {offsets = [0, 0], sizes = [1, 192], strides = [1, 1]} : vector<3x192xf32> to vector<1x192xf32>
    %7 = vector.extract_strided_slice %4 {offsets = [1, 0], sizes = [1, 192], strides = [1, 1]} : vector<3x192xf32> to vector<1x192xf32>
    %8 = vector.extract_strided_slice %4 {offsets = [2, 0], sizes = [1, 192], strides = [1, 1]} : vector<3x192xf32> to vector<1x192xf32>
    %9 = vector.broadcast %6 : vector<1x192xf32> to vector<32x192xf32>
    %10 = arith.addf %3, %9 : vector<32x192xf32>
    %11 = vector.extract_strided_slice %10 {offsets = [0, 0], sizes = [16, 192], strides = [1, 1]} : vector<32x192xf32> to vector<16x192xf32>
    %cst_7 = arith.constant dense<0.000000e+00> : vector<192xf32>
    %12 = vector.multi_reduction <add>, %11, %cst_7 [0] : vector<16x192xf32> to vector<192xf32>
    %13 = vector.shape_cast %12 : vector<192xf32> to vector<1x192xf32>
    %cst_8 = arith.constant dense<0.000000e+00> : vector<1x192xf32>
    %14 = tpu.matmul %13, %5, %cst_8 {dimension_numbers = #tpu.dot_dimension_numbers<[1], [0], [0], [1], [0, 0, 1, 1], [], []>} : vector<1x192xf32>, vector<192x192xf32>, vector<1x192xf32> -> vector<1x192xf32>
    %15 = vector.broadcast %14 : vector<1x192xf32> to vector<16x192xf32>
    %16 = arith.subf %11, %15 : vector<16x192xf32>
    %17 = arith.mulf %16, %16 : vector<16x192xf32>
    %cst_9 = arith.constant dense<0.000000e+00> : vector<192xf32>
    %18 = vector.multi_reduction <add>, %17, %cst_9 [0] : vector<16x192xf32> to vector<192xf32>
    %19 = vector.shape_cast %18 : vector<192xf32> to vector<1x192xf32>
    %cst_10 = arith.constant dense<0.000000e+00> : vector<1x192xf32>
    %20 = tpu.matmul %19, %5, %cst_10 {dimension_numbers = #tpu.dot_dimension_numbers<[1], [0], [0], [1], [0, 0, 1, 1], [], []>} : vector<1x192xf32>, vector<192x192xf32>, vector<1x192xf32> -> vector<1x192xf32>
    %cst_11 = arith.constant 9.99999974E-6 : f32
    %21 = vector.broadcast %cst_11 : f32 to vector<1x192xf32>
    %22 = arith.addf %20, %21 : vector<1x192xf32>
    %23 = math.rsqrt %22 : vector<1x192xf32>
    %24 = vector.broadcast %23 : vector<1x192xf32> to vector<16x192xf32>
    %25 = arith.mulf %16, %24 : vector<16x192xf32>
    %26 = vector.broadcast %7 : vector<1x192xf32> to vector<16x192xf32>
    %27 = arith.mulf %25, %26 : vector<16x192xf32>
    %28 = vector.broadcast %8 : vector<1x192xf32> to vector<16x192xf32>
    %29 = arith.addf %27, %28 : vector<16x192xf32>
    %cst_12 = arith.constant 0.000000e+00 : f32
    %30 = vector.broadcast %cst_12 : f32 to vector<16x192xf32>
    %31 = arith.maximumf %29, %30 : vector<16x192xf32>
    %32 = vector.extract_strided_slice %10 {offsets = [16, 0], sizes = [16, 192], strides = [1, 1]} : vector<32x192xf32> to vector<16x192xf32>
    %cst_13 = arith.constant dense<0.000000e+00> : vector<192xf32>
    %33 = vector.multi_reduction <add>, %32, %cst_13 [0] : vector<16x192xf32> to vector<192xf32>
    %34 = vector.shape_cast %33 : vector<192xf32> to vector<1x192xf32>
    %cst_14 = arith.constant dense<0.000000e+00> : vector<1x192xf32>
    %35 = tpu.matmul %34, %5, %cst_14 {dimension_numbers = #tpu.dot_dimension_numbers<[1], [0], [0], [1], [0, 0, 1, 1], [], []>} : vector<1x192xf32>, vector<192x192xf32>, vector<1x192xf32> -> vector<1x192xf32>
    %36 = vector.broadcast %35 : vector<1x192xf32> to vector<16x192xf32>
    %37 = arith.subf %32, %36 : vector<16x192xf32>
    %38 = arith.mulf %37, %37 : vector<16x192xf32>
    %cst_15 = arith.constant dense<0.000000e+00> : vector<192xf32>
    %39 = vector.multi_reduction <add>, %38, %cst_15 [0] : vector<16x192xf32> to vector<192xf32>
    %40 = vector.shape_cast %39 : vector<192xf32> to vector<1x192xf32>
    %cst_16 = arith.constant dense<0.000000e+00> : vector<1x192xf32>
    %41 = tpu.matmul %40, %5, %cst_16 {dimension_numbers = #tpu.dot_dimension_numbers<[1], [0], [0], [1], [0, 0, 1, 1], [], []>} : vector<1x192xf32>, vector<192x192xf32>, vector<1x192xf32> -> vector<1x192xf32>
    %cst_17 = arith.constant 9.99999974E-6 : f32
    %42 = vector.broadcast %cst_17 : f32 to vector<1x192xf32>
    %43 = arith.addf %41, %42 : vector<1x192xf32>
    %44 = math.rsqrt %43 : vector<1x192xf32>
    %45 = vector.broadcast %44 : vector<1x192xf32> to vector<16x192xf32>
    %46 = arith.mulf %37, %45 : vector<16x192xf32>
    %47 = vector.broadcast %7 : vector<1x192xf32> to vector<16x192xf32>
    %48 = arith.mulf %46, %47 : vector<16x192xf32>
    %49 = vector.broadcast %8 : vector<1x192xf32> to vector<16x192xf32>
    %50 = arith.addf %48, %49 : vector<16x192xf32>
    %cst_18 = arith.constant 0.000000e+00 : f32
    %51 = vector.broadcast %cst_18 : f32 to vector<16x192xf32>
    %52 = arith.maximumf %50, %51 : vector<16x192xf32>
    %53 = tpu.concatenate %31, %52 in 0 : vector<16x192xf32>, vector<16x192xf32> -> vector<32x192xf32>
    %54 = vector.extract_strided_slice %53 {offsets = [0, 0], sizes = [32, 128], strides = [1, 1]} : vector<32x192xf32> to vector<32x128xf32>
    %c0_19 = arith.constant 0 : index
    %c0_20 = arith.constant 0 : index
    %55 = vector.load %arg19[%c0_19, %c0_20] : memref<32x128xf32, #tpu.memory_space<vmem>>, vector<32x128xf32>
    tpu.vector_store %arg19[%c0_19, %c0_20], %54 {strides = array<i32>} : memref<32x128xf32, #tpu.memory_space<vmem>>, vector<32x128xf32>,
    %56 = vector.extract_strided_slice %53 {offsets = [0, 128], sizes = [32, 64], strides = [1, 1]} : vector<32x192xf32> to vector<32x64xf32>
    %c0_21 = arith.constant 0 : index
    %c0_22 = arith.constant 0 : index
    %57 = vector.load %arg4[%c0_21, %c0_22] : memref<32x4xf32, #tpu.memory_space<vmem>>, vector<32x4xf32>
    %c0_23 = arith.constant 0 : index
    %c0_24 = arith.constant 0 : index
    %58 = vector.load %arg5[%c0_23, %c0_24] : memref<32x4xf32, #tpu.memory_space<vmem>>, vector<32x4xf32>
    %c0_25 = arith.constant 0 : index
    %c0_26 = arith.constant 0 : index
    %59 = vector.load %arg2[%c0_25, %c0_26] : memref<64x64xf32, #tpu.memory_space<vmem>>, vector<64x64xf32>
    %60 = vector.extract_strided_slice %54 {offsets = [0, 0], sizes = [16, 128], strides = [1, 1]} : vector<32x128xf32> to vector<16x128xf32>
    %61 = vector.extract_strided_slice %57 {offsets = [0, 0], sizes = [16, 4], strides = [1, 1]} : vector<32x4xf32> to vector<16x4xf32>
    %62 = math.floor %61 : vector<16x4xf32>
    %63 = arith.fptosi %62 : vector<16x4xf32> to vector<16x4xi32>
    %64 = tpu.iota {dimensions = array<i32: 1>} : vector<16x128xi32>
    %c64_i32 = arith.constant 64 : i32
    %65 = vector.broadcast %c64_i32 : i32 to vector<16x128xi32>
    %66 = arith.cmpi slt, %64, %65 : vector<16x128xi32>
    %67 = vector.extract_strided_slice %63 {offsets = [0, 0], sizes = [16, 1], strides = [1, 1]} : vector<16x4xi32> to vector<16x1xi32>
    %68 = vector.extract_strided_slice %63 {offsets = [0, 2], sizes = [16, 1], strides = [1, 1]} : vector<16x4xi32> to vector<16x1xi32>
    %69 = vector.shape_cast %67 : vector<16x1xi32> to vector<16x1xi32>
    %70 = vector.broadcast %69 : vector<16x1xi32> to vector<16x128xi32>
    %71 = vector.shape_cast %68 : vector<16x1xi32> to vector<16x1xi32>
    %72 = vector.broadcast %71 : vector<16x1xi32> to vector<16x128xi32>
    %73 = arith.select %66, %70, %72 : vector<16x128xi1>, vector<16x128xi32>
    %74 = vector.extract_strided_slice %63 {offsets = [0, 1], sizes = [16, 1], strides = [1, 1]} : vector<16x4xi32> to vector<16x1xi32>
    %75 = vector.extract_strided_slice %63 {offsets = [0, 3], sizes = [16, 1], strides = [1, 1]} : vector<16x4xi32> to vector<16x1xi32>
    %76 = vector.shape_cast %74 : vector<16x1xi32> to vector<16x1xi32>
    %77 = vector.broadcast %76 : vector<16x1xi32> to vector<16x128xi32>
    %78 = vector.shape_cast %75 : vector<16x1xi32> to vector<16x1xi32>
    %79 = vector.broadcast %78 : vector<16x1xi32> to vector<16x128xi32>
    %80 = arith.select %66, %77, %79 : vector<16x128xi1>, vector<16x128xi32>
    %cst_27 = arith.constant -1.000000e+05 : f32
    %81 = vector.broadcast %cst_27 : f32 to vector<16x128xf32>
    %c0_i32 = arith.constant 0 : i32
    %82 = vector.broadcast %c0_i32 : i32 to vector<16x128xi32>
    %83 = arith.cmpi sle, %73, %82 : vector<16x128xi32>
    %c0_i32_28 = arith.constant 0 : i32
    %84 = vector.broadcast %c0_i32_28 : i32 to vector<16x128xi32>
    %85 = arith.cmpi sge, %80, %84 : vector<16x128xi32>
    %86 = arith.andi %83, %85 : vector<16x128xi1>
    %87 = vector.extract_strided_slice %60 {offsets = [0, 0], sizes = [1, 128], strides = [1, 1]} : vector<16x128xf32> to vector<1x128xf32>
    %cst_29 = arith.constant -1.000000e+05 : f32
    %88 = vector.shape_cast %87 : vector<1x128xf32> to vector<1x128xf32>
    %89 = vector.broadcast %88 : vector<1x128xf32> to vector<16x128xf32>
    %90 = vector.broadcast %cst_29 : f32 to vector<16x128xf32>
    %91 = arith.select %86, %89, %90 : vector<16x128xi1>, vector<16x128xf32>
    %92 = arith.maximumf %81, %91 : vector<16x128xf32>
    %c1_i32 = arith.constant 1 : i32
    %93 = vector.broadcast %c1_i32 : i32 to vector<16x128xi32>
    %94 = arith.cmpi sle, %73, %93 : vector<16x128xi32>
    %c1_i32_30 = arith.constant 1 : i32
    %95 = vector.broadcast %c1_i32_30 : i32 to vector<16x128xi32>
    %96 = arith.cmpi sge, %80, %95 : vector<16x128xi32>
    %97 = arith.andi %94, %96 : vector<16x128xi1>
    %98 = vector.extract_strided_slice %60 {offsets = [1, 0], sizes = [1, 128], strides = [1, 1]} : vector<16x128xf32> to vector<1x128xf32>
    %cst_31 = arith.constant -1.000000e+05 : f32
    %99 = vector.shape_cast %98 : vector<1x128xf32> to vector<1x128xf32>
    %100 = vector.broadcast %99 : vector<1x128xf32> to vector<16x128xf32>
    %101 = vector.broadcast %cst_31 : f32 to vector<16x128xf32>
    %102 = arith.select %97, %100, %101 : vector<16x128xi1>, vector<16x128xf32>
    %103 = arith.maximumf %92, %102 : vector<16x128xf32>
    %c2_i32 = arith.constant 2 : i32
    %104 = vector.broadcast %c2_i32 : i32 to vector<16x128xi32>
    %105 = arith.cmpi sle, %73, %104 : vector<16x128xi32>
    %c2_i32_32 = arith.constant 2 : i32
    %106 = vector.broadcast %c2_i32_32 : i32 to vector<16x128xi32>
    %107 = arith.cmpi sge, %80, %106 : vector<16x128xi32>
    %108 = arith.andi %105, %107 : vector<16x128xi1>
    %109 = vector.extract_strided_slice %60 {offsets = [2, 0], sizes = [1, 128], strides = [1, 1]} : vector<16x128xf32> to vector<1x128xf32>
    %cst_33 = arith.constant -1.000000e+05 : f32
    %110 = vector.shape_cast %109 : vector<1x128xf32> to vector<1x128xf32>
    %111 = vector.broadcast %110 : vector<1x128xf32> to vector<16x128xf32>
    %112 = vector.broadcast %cst_33 : f32 to vector<16x128xf32>
    %113 = arith.select %108, %111, %112 : vector<16x128xi1>, vector<16x128xf32>
    %114 = arith.maximumf %103, %113 : vector<16x128xf32>
    %c3_i32 = arith.constant 3 : i32
    %115 = vector.broadcast %c3_i32 : i32 to vector<16x128xi32>
    %116 = arith.cmpi sle, %73, %115 : vector<16x128xi32>
    %c3_i32_34 = arith.constant 3 : i32
    %117 = vector.broadcast %c3_i32_34 : i32 to vector<16x128xi32>
    %118 = arith.cmpi sge, %80, %117 : vector<16x128xi32>
    %119 = arith.andi %116, %118 : vector<16x128xi1>
    %120 = vector.extract_strided_slice %60 {offsets = [3, 0], sizes = [1, 128], strides = [1, 1]} : vector<16x128xf32> to vector<1x128xf32>
    %cst_35 = arith.constant -1.000000e+05 : f32
    %121 = vector.shape_cast %120 : vector<1x128xf32> to vector<1x128xf32>
    %122 = vector.broadcast %121 : vector<1x128xf32> to vector<16x128xf32>
    %123 = vector.broadcast %cst_35 : f32 to vector<16x128xf32>
    %124 = arith.select %119, %122, %123 : vector<16x128xi1>, vector<16x128xf32>
    %125 = arith.maximumf %114, %124 : vector<16x128xf32>
    %c4_i32 = arith.constant 4 : i32
    %126 = vector.broadcast %c4_i32 : i32 to vector<16x128xi32>
    %127 = arith.cmpi sle, %73, %126 : vector<16x128xi32>
    %c4_i32_36 = arith.constant 4 : i32
    %128 = vector.broadcast %c4_i32_36 : i32 to vector<16x128xi32>
    %129 = arith.cmpi sge, %80, %128 : vector<16x128xi32>
    %130 = arith.andi %127, %129 : vector<16x128xi1>
    %131 = vector.extract_strided_slice %60 {offsets = [4, 0], sizes = [1, 128], strides = [1, 1]} : vector<16x128xf32> to vector<1x128xf32>
    %cst_37 = arith.constant -1.000000e+05 : f32
    %132 = vector.shape_cast %131 : vector<1x128xf32> to vector<1x128xf32>
    %133 = vector.broadcast %132 : vector<1x128xf32> to vector<16x128xf32>
    %134 = vector.broadcast %cst_37 : f32 to vector<16x128xf32>
    %135 = arith.select %130, %133, %134 : vector<16x128xi1>, vector<16x128xf32>
    %136 = arith.maximumf %125, %135 : vector<16x128xf32>
    %c5_i32 = arith.constant 5 : i32
    %137 = vector.broadcast %c5_i32 : i32 to vector<16x128xi32>
    %138 = arith.cmpi sle, %73, %137 : vector<16x128xi32>
    %c5_i32_38 = arith.constant 5 : i32
    %139 = vector.broadcast %c5_i32_38 : i32 to vector<16x128xi32>
    %140 = arith.cmpi sge, %80, %139 : vector<16x128xi32>
    %141 = arith.andi %138, %140 : vector<16x128xi1>
    %142 = vector.extract_strided_slice %60 {offsets = [5, 0], sizes = [1, 128], strides = [1, 1]} : vector<16x128xf32> to vector<1x128xf32>
    %cst_39 = arith.constant -1.000000e+05 : f32
    %143 = vector.shape_cast %142 : vector<1x128xf32> to vector<1x128xf32>
    %144 = vector.broadcast %143 : vector<1x128xf32> to vector<16x128xf32>
    %145 = vector.broadcast %cst_39 : f32 to vector<16x128xf32>
    %146 = arith.select %141, %144, %145 : vector<16x128xi1>, vector<16x128xf32>
    %147 = arith.maximumf %136, %146 : vector<16x128xf32>
    %c6_i32 = arith.constant 6 : i32
    %148 = vector.broadcast %c6_i32 : i32 to vector<16x128xi32>
    %149 = arith.cmpi sle, %73, %148 : vector<16x128xi32>
    %c6_i32_40 = arith.constant 6 : i32
    %150 = vector.broadcast %c6_i32_40 : i32 to vector<16x128xi32>
    %151 = arith.cmpi sge, %80, %150 : vector<16x128xi32>
    %152 = arith.andi %149, %151 : vector<16x128xi1>
    %153 = vector.extract_strided_slice %60 {offsets = [6, 0], sizes = [1, 128], strides = [1, 1]} : vector<16x128xf32> to vector<1x128xf32>
    %cst_41 = arith.constant -1.000000e+05 : f32
    %154 = vector.shape_cast %153 : vector<1x128xf32> to vector<1x128xf32>
    %155 = vector.broadcast %154 : vector<1x128xf32> to vector<16x128xf32>
    %156 = vector.broadcast %cst_41 : f32 to vector<16x128xf32>
    %157 = arith.select %152, %155, %156 : vector<16x128xi1>, vector<16x128xf32>
    %158 = arith.maximumf %147, %157 : vector<16x128xf32>
    %c7_i32 = arith.constant 7 : i32
    %159 = vector.broadcast %c7_i32 : i32 to vector<16x128xi32>
    %160 = arith.cmpi sle, %73, %159 : vector<16x128xi32>
    %c7_i32_42 = arith.constant 7 : i32
    %161 = vector.broadcast %c7_i32_42 : i32 to vector<16x128xi32>
    %162 = arith.cmpi sge, %80, %161 : vector<16x128xi32>
    %163 = arith.andi %160, %162 : vector<16x128xi1>
    %164 = vector.extract_strided_slice %60 {offsets = [7, 0], sizes = [1, 128], strides = [1, 1]} : vector<16x128xf32> to vector<1x128xf32>
    %cst_43 = arith.constant -1.000000e+05 : f32
    %165 = vector.shape_cast %164 : vector<1x128xf32> to vector<1x128xf32>
    %166 = vector.broadcast %165 : vector<1x128xf32> to vector<16x128xf32>
    %167 = vector.broadcast %cst_43 : f32 to vector<16x128xf32>
    %168 = arith.select %163, %166, %167 : vector<16x128xi1>, vector<16x128xf32>
    %169 = arith.maximumf %158, %168 : vector<16x128xf32>
    %c8_i32 = arith.constant 8 : i32
    %170 = vector.broadcast %c8_i32 : i32 to vector<16x128xi32>
    %171 = arith.cmpi sle, %73, %170 : vector<16x128xi32>
    %c8_i32_44 = arith.constant 8 : i32
    %172 = vector.broadcast %c8_i32_44 : i32 to vector<16x128xi32>
    %173 = arith.cmpi sge, %80, %172 : vector<16x128xi32>
    %174 = arith.andi %171, %173 : vector<16x128xi1>
    %175 = vector.extract_strided_slice %60 {offsets = [8, 0], sizes = [1, 128], strides = [1, 1]} : vector<16x128xf32> to vector<1x128xf32>
    %cst_45 = arith.constant -1.000000e+05 : f32
    %176 = vector.shape_cast %175 : vector<1x128xf32> to vector<1x128xf32>
    %177 = vector.broadcast %176 : vector<1x128xf32> to vector<16x128xf32>
    %178 = vector.broadcast %cst_45 : f32 to vector<16x128xf32>
    %179 = arith.select %174, %177, %178 : vector<16x128xi1>, vector<16x128xf32>
    %180 = arith.maximumf %169, %179 : vector<16x128xf32>
    %c9_i32 = arith.constant 9 : i32
    %181 = vector.broadcast %c9_i32 : i32 to vector<16x128xi32>
    %182 = arith.cmpi sle, %73, %181 : vector<16x128xi32>
    %c9_i32_46 = arith.constant 9 : i32
    %183 = vector.broadcast %c9_i32_46 : i32 to vector<16x128xi32>
    %184 = arith.cmpi sge, %80, %183 : vector<16x128xi32>
    %185 = arith.andi %182, %184 : vector<16x128xi1>
    %186 = vector.extract_strided_slice %60 {offsets = [9, 0], sizes = [1, 128], strides = [1, 1]} : vector<16x128xf32> to vector<1x128xf32>
    %cst_47 = arith.constant -1.000000e+05 : f32
    %187 = vector.shape_cast %186 : vector<1x128xf32> to vector<1x128xf32>
    %188 = vector.broadcast %187 : vector<1x128xf32> to vector<16x128xf32>
    %189 = vector.broadcast %cst_47 : f32 to vector<16x128xf32>
    %190 = arith.select %185, %188, %189 : vector<16x128xi1>, vector<16x128xf32>
    %191 = arith.maximumf %180, %190 : vector<16x128xf32>
    %c10_i32 = arith.constant 10 : i32
    %192 = vector.broadcast %c10_i32 : i32 to vector<16x128xi32>
    %193 = arith.cmpi sle, %73, %192 : vector<16x128xi32>
    %c10_i32_48 = arith.constant 10 : i32
    %194 = vector.broadcast %c10_i32_48 : i32 to vector<16x128xi32>
    %195 = arith.cmpi sge, %80, %194 : vector<16x128xi32>
    %196 = arith.andi %193, %195 : vector<16x128xi1>
    %197 = vector.extract_strided_slice %60 {offsets = [10, 0], sizes = [1, 128], strides = [1, 1]} : vector<16x128xf32> to vector<1x128xf32>
    %cst_49 = arith.constant -1.000000e+05 : f32
    %198 = vector.shape_cast %197 : vector<1x128xf32> to vector<1x128xf32>
    %199 = vector.broadcast %198 : vector<1x128xf32> to vector<16x128xf32>
    %200 = vector.broadcast %cst_49 : f32 to vector<16x128xf32>
    %201 = arith.select %196, %199, %200 : vector<16x128xi1>, vector<16x128xf32>
    %202 = arith.maximumf %191, %201 : vector<16x128xf32>
    %c11_i32 = arith.constant 11 : i32
    %203 = vector.broadcast %c11_i32 : i32 to vector<16x128xi32>
    %204 = arith.cmpi sle, %73, %203 : vector<16x128xi32>
    %c11_i32_50 = arith.constant 11 : i32
    %205 = vector.broadcast %c11_i32_50 : i32 to vector<16x128xi32>
    %206 = arith.cmpi sge, %80, %205 : vector<16x128xi32>
    %207 = arith.andi %204, %206 : vector<16x128xi1>
    %208 = vector.extract_strided_slice %60 {offsets = [11, 0], sizes = [1, 128], strides = [1, 1]} : vector<16x128xf32> to vector<1x128xf32>
    %cst_51 = arith.constant -1.000000e+05 : f32
    %209 = vector.shape_cast %208 : vector<1x128xf32> to vector<1x128xf32>
    %210 = vector.broadcast %209 : vector<1x128xf32> to vector<16x128xf32>
    %211 = vector.broadcast %cst_51 : f32 to vector<16x128xf32>
    %212 = arith.select %207, %210, %211 : vector<16x128xi1>, vector<16x128xf32>
    %213 = arith.maximumf %202, %212 : vector<16x128xf32>
    %c12_i32 = arith.constant 12 : i32
    %214 = vector.broadcast %c12_i32 : i32 to vector<16x128xi32>
    %215 = arith.cmpi sle, %73, %214 : vector<16x128xi32>
    %c12_i32_52 = arith.constant 12 : i32
    %216 = vector.broadcast %c12_i32_52 : i32 to vector<16x128xi32>
    %217 = arith.cmpi sge, %80, %216 : vector<16x128xi32>
    %218 = arith.andi %215, %217 : vector<16x128xi1>
    %219 = vector.extract_strided_slice %60 {offsets = [12, 0], sizes = [1, 128], strides = [1, 1]} : vector<16x128xf32> to vector<1x128xf32>
    %cst_53 = arith.constant -1.000000e+05 : f32
    %220 = vector.shape_cast %219 : vector<1x128xf32> to vector<1x128xf32>
    %221 = vector.broadcast %220 : vector<1x128xf32> to vector<16x128xf32>
    %222 = vector.broadcast %cst_53 : f32 to vector<16x128xf32>
    %223 = arith.select %218, %221, %222 : vector<16x128xi1>, vector<16x128xf32>
    %224 = arith.maximumf %213, %223 : vector<16x128xf32>
    %c13_i32 = arith.constant 13 : i32
    %225 = vector.broadcast %c13_i32 : i32 to vector<16x128xi32>
    %226 = arith.cmpi sle, %73, %225 : vector<16x128xi32>
    %c13_i32_54 = arith.constant 13 : i32
    %227 = vector.broadcast %c13_i32_54 : i32 to vector<16x128xi32>
    %228 = arith.cmpi sge, %80, %227 : vector<16x128xi32>
    %229 = arith.andi %226, %228 : vector<16x128xi1>
    %230 = vector.extract_strided_slice %60 {offsets = [13, 0], sizes = [1, 128], strides = [1, 1]} : vector<16x128xf32> to vector<1x128xf32>
    %cst_55 = arith.constant -1.000000e+05 : f32
    %231 = vector.shape_cast %230 : vector<1x128xf32> to vector<1x128xf32>
    %232 = vector.broadcast %231 : vector<1x128xf32> to vector<16x128xf32>
    %233 = vector.broadcast %cst_55 : f32 to vector<16x128xf32>
    %234 = arith.select %229, %232, %233 : vector<16x128xi1>, vector<16x128xf32>
    %235 = arith.maximumf %224, %234 : vector<16x128xf32>
    %c14_i32 = arith.constant 14 : i32
    %236 = vector.broadcast %c14_i32 : i32 to vector<16x128xi32>
    %237 = arith.cmpi sle, %73, %236 : vector<16x128xi32>
    %c14_i32_56 = arith.constant 14 : i32
    %238 = vector.broadcast %c14_i32_56 : i32 to vector<16x128xi32>
    %239 = arith.cmpi sge, %80, %238 : vector<16x128xi32>
    %240 = arith.andi %237, %239 : vector<16x128xi1>
    %241 = vector.extract_strided_slice %60 {offsets = [14, 0], sizes = [1, 128], strides = [1, 1]} : vector<16x128xf32> to vector<1x128xf32>
    %cst_57 = arith.constant -1.000000e+05 : f32
    %242 = vector.shape_cast %241 : vector<1x128xf32> to vector<1x128xf32>
    %243 = vector.broadcast %242 : vector<1x128xf32> to vector<16x128xf32>
    %244 = vector.broadcast %cst_57 : f32 to vector<16x128xf32>
    %245 = arith.select %240, %243, %244 : vector<16x128xi1>, vector<16x128xf32>
    %246 = arith.maximumf %235, %245 : vector<16x128xf32>
    %c15_i32 = arith.constant 15 : i32
    %247 = vector.broadcast %c15_i32 : i32 to vector<16x128xi32>
    %248 = arith.cmpi sle, %73, %247 : vector<16x128xi32>
    %c15_i32_58 = arith.constant 15 : i32
    %249 = vector.broadcast %c15_i32_58 : i32 to vector<16x128xi32>
    %250 = arith.cmpi sge, %80, %249 : vector<16x128xi32>
    %251 = arith.andi %248, %250 : vector<16x128xi1>
    %252 = vector.extract_strided_slice %60 {offsets = [15, 0], sizes = [1, 128], strides = [1, 1]} : vector<16x128xf32> to vector<1x128xf32>
    %cst_59 = arith.constant -1.000000e+05 : f32
    %253 = vector.shape_cast %252 : vector<1x128xf32> to vector<1x128xf32>
    %254 = vector.broadcast %253 : vector<1x128xf32> to vector<16x128xf32>
    %255 = vector.broadcast %cst_59 : f32 to vector<16x128xf32>
    %256 = arith.select %251, %254, %255 : vector<16x128xi1>, vector<16x128xf32>
    %257 = arith.maximumf %246, %256 : vector<16x128xf32>
    %258 = vector.extract_strided_slice %54 {offsets = [16, 0], sizes = [16, 128], strides = [1, 1]} : vector<32x128xf32> to vector<16x128xf32>
    %259 = vector.extract_strided_slice %57 {offsets = [16, 0], sizes = [16, 4], strides = [1, 1]} : vector<32x4xf32> to vector<16x4xf32>
    %260 = math.floor %259 : vector<16x4xf32>
    %261 = arith.fptosi %260 : vector<16x4xf32> to vector<16x4xi32>
    %262 = tpu.iota {dimensions = array<i32: 1>} : vector<16x128xi32>
    %c64_i32_60 = arith.constant 64 : i32
    %263 = vector.broadcast %c64_i32_60 : i32 to vector<16x128xi32>
    %264 = arith.cmpi slt, %262, %263 : vector<16x128xi32>
    %265 = vector.extract_strided_slice %261 {offsets = [0, 0], sizes = [16, 1], strides = [1, 1]} : vector<16x4xi32> to vector<16x1xi32>
    %266 = vector.extract_strided_slice %261 {offsets = [0, 2], sizes = [16, 1], strides = [1, 1]} : vector<16x4xi32> to vector<16x1xi32>
    %267 = vector.shape_cast %265 : vector<16x1xi32> to vector<16x1xi32>
    %268 = vector.broadcast %267 : vector<16x1xi32> to vector<16x128xi32>
    %269 = vector.shape_cast %266 : vector<16x1xi32> to vector<16x1xi32>
    %270 = vector.broadcast %269 : vector<16x1xi32> to vector<16x128xi32>
    %271 = arith.select %264, %268, %270 : vector<16x128xi1>, vector<16x128xi32>
    %272 = vector.extract_strided_slice %261 {offsets = [0, 1], sizes = [16, 1], strides = [1, 1]} : vector<16x4xi32> to vector<16x1xi32>
    %273 = vector.extract_strided_slice %261 {offsets = [0, 3], sizes = [16, 1], strides = [1, 1]} : vector<16x4xi32> to vector<16x1xi32>
    %274 = vector.shape_cast %272 : vector<16x1xi32> to vector<16x1xi32>
    %275 = vector.broadcast %274 : vector<16x1xi32> to vector<16x128xi32>
    %276 = vector.shape_cast %273 : vector<16x1xi32> to vector<16x1xi32>
    %277 = vector.broadcast %276 : vector<16x1xi32> to vector<16x128xi32>
    %278 = arith.select %264, %275, %277 : vector<16x128xi1>, vector<16x128xi32>
    %cst_61 = arith.constant -1.000000e+05 : f32
    %279 = vector.broadcast %cst_61 : f32 to vector<16x128xf32>
    %c0_i32_62 = arith.constant 0 : i32
    %280 = vector.broadcast %c0_i32_62 : i32 to vector<16x128xi32>
    %281 = arith.cmpi sle, %271, %280 : vector<16x128xi32>
    %c0_i32_63 = arith.constant 0 : i32
    %282 = vector.broadcast %c0_i32_63 : i32 to vector<16x128xi32>
    %283 = arith.cmpi sge, %278, %282 : vector<16x128xi32>
    %284 = arith.andi %281, %283 : vector<16x128xi1>
    %285 = vector.extract_strided_slice %258 {offsets = [0, 0], sizes = [1, 128], strides = [1, 1]} : vector<16x128xf32> to vector<1x128xf32>
    %cst_64 = arith.constant -1.000000e+05 : f32
    %286 = vector.shape_cast %285 : vector<1x128xf32> to vector<1x128xf32>
    %287 = vector.broadcast %286 : vector<1x128xf32> to vector<16x128xf32>
    %288 = vector.broadcast %cst_64 : f32 to vector<16x128xf32>
    %289 = arith.select %284, %287, %288 : vector<16x128xi1>, vector<16x128xf32>
    %290 = arith.maximumf %279, %289 : vector<16x128xf32>
    %c1_i32_65 = arith.constant 1 : i32
    %291 = vector.broadcast %c1_i32_65 : i32 to vector<16x128xi32>
    %292 = arith.cmpi sle, %271, %291 : vector<16x128xi32>
    %c1_i32_66 = arith.constant 1 : i32
    %293 = vector.broadcast %c1_i32_66 : i32 to vector<16x128xi32>
    %294 = arith.cmpi sge, %278, %293 : vector<16x128xi32>
    %295 = arith.andi %292, %294 : vector<16x128xi1>
    %296 = vector.extract_strided_slice %258 {offsets = [1, 0], sizes = [1, 128], strides = [1, 1]} : vector<16x128xf32> to vector<1x128xf32>
    %cst_67 = arith.constant -1.000000e+05 : f32
    %297 = vector.shape_cast %296 : vector<1x128xf32> to vector<1x128xf32>
    %298 = vector.broadcast %297 : vector<1x128xf32> to vector<16x128xf32>
    %299 = vector.broadcast %cst_67 : f32 to vector<16x128xf32>
    %300 = arith.select %295, %298, %299 : vector<16x128xi1>, vector<16x128xf32>
    %301 = arith.maximumf %290, %300 : vector<16x128xf32>
    %c2_i32_68 = arith.constant 2 : i32
    %302 = vector.broadcast %c2_i32_68 : i32 to vector<16x128xi32>
    %303 = arith.cmpi sle, %271, %302 : vector<16x128xi32>
    %c2_i32_69 = arith.constant 2 : i32
    %304 = vector.broadcast %c2_i32_69 : i32 to vector<16x128xi32>
    %305 = arith.cmpi sge, %278, %304 : vector<16x128xi32>
    %306 = arith.andi %303, %305 : vector<16x128xi1>
    %307 = vector.extract_strided_slice %258 {offsets = [2, 0], sizes = [1, 128], strides = [1, 1]} : vector<16x128xf32> to vector<1x128xf32>
    %cst_70 = arith.constant -1.000000e+05 : f32
    %308 = vector.shape_cast %307 : vector<1x128xf32> to vector<1x128xf32>
    %309 = vector.broadcast %308 : vector<1x128xf32> to vector<16x128xf32>
    %310 = vector.broadcast %cst_70 : f32 to vector<16x128xf32>
    %311 = arith.select %306, %309, %310 : vector<16x128xi1>, vector<16x128xf32>
    %312 = arith.maximumf %301, %311 : vector<16x128xf32>
    %c3_i32_71 = arith.constant 3 : i32
    %313 = vector.broadcast %c3_i32_71 : i32 to vector<16x128xi32>
    %314 = arith.cmpi sle, %271, %313 : vector<16x128xi32>
    %c3_i32_72 = arith.constant 3 : i32
    %315 = vector.broadcast %c3_i32_72 : i32 to vector<16x128xi32>
    %316 = arith.cmpi sge, %278, %315 : vector<16x128xi32>
    %317 = arith.andi %314, %316 : vector<16x128xi1>
    %318 = vector.extract_strided_slice %258 {offsets = [3, 0], sizes = [1, 128], strides = [1, 1]} : vector<16x128xf32> to vector<1x128xf32>
    %cst_73 = arith.constant -1.000000e+05 : f32
    %319 = vector.shape_cast %318 : vector<1x128xf32> to vector<1x128xf32>
    %320 = vector.broadcast %319 : vector<1x128xf32> to vector<16x128xf32>
    %321 = vector.broadcast %cst_73 : f32 to vector<16x128xf32>
    %322 = arith.select %317, %320, %321 : vector<16x128xi1>, vector<16x128xf32>
    %323 = arith.maximumf %312, %322 : vector<16x128xf32>
    %c4_i32_74 = arith.constant 4 : i32
    %324 = vector.broadcast %c4_i32_74 : i32 to vector<16x128xi32>
    %325 = arith.cmpi sle, %271, %324 : vector<16x128xi32>
    %c4_i32_75 = arith.constant 4 : i32
    %326 = vector.broadcast %c4_i32_75 : i32 to vector<16x128xi32>
    %327 = arith.cmpi sge, %278, %326 : vector<16x128xi32>
    %328 = arith.andi %325, %327 : vector<16x128xi1>
    %329 = vector.extract_strided_slice %258 {offsets = [4, 0], sizes = [1, 128], strides = [1, 1]} : vector<16x128xf32> to vector<1x128xf32>
    %cst_76 = arith.constant -1.000000e+05 : f32
    %330 = vector.shape_cast %329 : vector<1x128xf32> to vector<1x128xf32>
    %331 = vector.broadcast %330 : vector<1x128xf32> to vector<16x128xf32>
    %332 = vector.broadcast %cst_76 : f32 to vector<16x128xf32>
    %333 = arith.select %328, %331, %332 : vector<16x128xi1>, vector<16x128xf32>
    %334 = arith.maximumf %323, %333 : vector<16x128xf32>
    %c5_i32_77 = arith.constant 5 : i32
    %335 = vector.broadcast %c5_i32_77 : i32 to vector<16x128xi32>
    %336 = arith.cmpi sle, %271, %335 : vector<16x128xi32>
    %c5_i32_78 = arith.constant 5 : i32
    %337 = vector.broadcast %c5_i32_78 : i32 to vector<16x128xi32>
    %338 = arith.cmpi sge, %278, %337 : vector<16x128xi32>
    %339 = arith.andi %336, %338 : vector<16x128xi1>
    %340 = vector.extract_strided_slice %258 {offsets = [5, 0], sizes = [1, 128], strides = [1, 1]} : vector<16x128xf32> to vector<1x128xf32>
    %cst_79 = arith.constant -1.000000e+05 : f32
    %341 = vector.shape_cast %340 : vector<1x128xf32> to vector<1x128xf32>
    %342 = vector.broadcast %341 : vector<1x128xf32> to vector<16x128xf32>
    %343 = vector.broadcast %cst_79 : f32 to vector<16x128xf32>
    %344 = arith.select %339, %342, %343 : vector<16x128xi1>, vector<16x128xf32>
    %345 = arith.maximumf %334, %344 : vector<16x128xf32>
    %c6_i32_80 = arith.constant 6 : i32
    %346 = vector.broadcast %c6_i32_80 : i32 to vector<16x128xi32>
    %347 = arith.cmpi sle, %271, %346 : vector<16x128xi32>
    %c6_i32_81 = arith.constant 6 : i32
    %348 = vector.broadcast %c6_i32_81 : i32 to vector<16x128xi32>
    %349 = arith.cmpi sge, %278, %348 : vector<16x128xi32>
    %350 = arith.andi %347, %349 : vector<16x128xi1>
    %351 = vector.extract_strided_slice %258 {offsets = [6, 0], sizes = [1, 128], strides = [1, 1]} : vector<16x128xf32> to vector<1x128xf32>
    %cst_82 = arith.constant -1.000000e+05 : f32
    %352 = vector.shape_cast %351 : vector<1x128xf32> to vector<1x128xf32>
    %353 = vector.broadcast %352 : vector<1x128xf32> to vector<16x128xf32>
    %354 = vector.broadcast %cst_82 : f32 to vector<16x128xf32>
    %355 = arith.select %350, %353, %354 : vector<16x128xi1>, vector<16x128xf32>
    %356 = arith.maximumf %345, %355 : vector<16x128xf32>
    %c7_i32_83 = arith.constant 7 : i32
    %357 = vector.broadcast %c7_i32_83 : i32 to vector<16x128xi32>
    %358 = arith.cmpi sle, %271, %357 : vector<16x128xi32>
    %c7_i32_84 = arith.constant 7 : i32
    %359 = vector.broadcast %c7_i32_84 : i32 to vector<16x128xi32>
    %360 = arith.cmpi sge, %278, %359 : vector<16x128xi32>
    %361 = arith.andi %358, %360 : vector<16x128xi1>
    %362 = vector.extract_strided_slice %258 {offsets = [7, 0], sizes = [1, 128], strides = [1, 1]} : vector<16x128xf32> to vector<1x128xf32>
    %cst_85 = arith.constant -1.000000e+05 : f32
    %363 = vector.shape_cast %362 : vector<1x128xf32> to vector<1x128xf32>
    %364 = vector.broadcast %363 : vector<1x128xf32> to vector<16x128xf32>
    %365 = vector.broadcast %cst_85 : f32 to vector<16x128xf32>
    %366 = arith.select %361, %364, %365 : vector<16x128xi1>, vector<16x128xf32>
    %367 = arith.maximumf %356, %366 : vector<16x128xf32>
    %c8_i32_86 = arith.constant 8 : i32
    %368 = vector.broadcast %c8_i32_86 : i32 to vector<16x128xi32>
    %369 = arith.cmpi sle, %271, %368 : vector<16x128xi32>
    %c8_i32_87 = arith.constant 8 : i32
    %370 = vector.broadcast %c8_i32_87 : i32 to vector<16x128xi32>
    %371 = arith.cmpi sge, %278, %370 : vector<16x128xi32>
    %372 = arith.andi %369, %371 : vector<16x128xi1>
    %373 = vector.extract_strided_slice %258 {offsets = [8, 0], sizes = [1, 128], strides = [1, 1]} : vector<16x128xf32> to vector<1x128xf32>
    %cst_88 = arith.constant -1.000000e+05 : f32
    %374 = vector.shape_cast %373 : vector<1x128xf32> to vector<1x128xf32>
    %375 = vector.broadcast %374 : vector<1x128xf32> to vector<16x128xf32>
    %376 = vector.broadcast %cst_88 : f32 to vector<16x128xf32>
    %377 = arith.select %372, %375, %376 : vector<16x128xi1>, vector<16x128xf32>
    %378 = arith.maximumf %367, %377 : vector<16x128xf32>
    %c9_i32_89 = arith.constant 9 : i32
    %379 = vector.broadcast %c9_i32_89 : i32 to vector<16x128xi32>
    %380 = arith.cmpi sle, %271, %379 : vector<16x128xi32>
    %c9_i32_90 = arith.constant 9 : i32
    %381 = vector.broadcast %c9_i32_90 : i32 to vector<16x128xi32>
    %382 = arith.cmpi sge, %278, %381 : vector<16x128xi32>
    %383 = arith.andi %380, %382 : vector<16x128xi1>
    %384 = vector.extract_strided_slice %258 {offsets = [9, 0], sizes = [1, 128], strides = [1, 1]} : vector<16x128xf32> to vector<1x128xf32>
    %cst_91 = arith.constant -1.000000e+05 : f32
    %385 = vector.shape_cast %384 : vector<1x128xf32> to vector<1x128xf32>
    %386 = vector.broadcast %385 : vector<1x128xf32> to vector<16x128xf32>
    %387 = vector.broadcast %cst_91 : f32 to vector<16x128xf32>
    %388 = arith.select %383, %386, %387 : vector<16x128xi1>, vector<16x128xf32>
    %389 = arith.maximumf %378, %388 : vector<16x128xf32>
    %c10_i32_92 = arith.constant 10 : i32
    %390 = vector.broadcast %c10_i32_92 : i32 to vector<16x128xi32>
    %391 = arith.cmpi sle, %271, %390 : vector<16x128xi32>
    %c10_i32_93 = arith.constant 10 : i32
    %392 = vector.broadcast %c10_i32_93 : i32 to vector<16x128xi32>
    %393 = arith.cmpi sge, %278, %392 : vector<16x128xi32>
    %394 = arith.andi %391, %393 : vector<16x128xi1>
    %395 = vector.extract_strided_slice %258 {offsets = [10, 0], sizes = [1, 128], strides = [1, 1]} : vector<16x128xf32> to vector<1x128xf32>
    %cst_94 = arith.constant -1.000000e+05 : f32
    %396 = vector.shape_cast %395 : vector<1x128xf32> to vector<1x128xf32>
    %397 = vector.broadcast %396 : vector<1x128xf32> to vector<16x128xf32>
    %398 = vector.broadcast %cst_94 : f32 to vector<16x128xf32>
    %399 = arith.select %394, %397, %398 : vector<16x128xi1>, vector<16x128xf32>
    %400 = arith.maximumf %389, %399 : vector<16x128xf32>
    %c11_i32_95 = arith.constant 11 : i32
    %401 = vector.broadcast %c11_i32_95 : i32 to vector<16x128xi32>
    %402 = arith.cmpi sle, %271, %401 : vector<16x128xi32>
    %c11_i32_96 = arith.constant 11 : i32
    %403 = vector.broadcast %c11_i32_96 : i32 to vector<16x128xi32>
    %404 = arith.cmpi sge, %278, %403 : vector<16x128xi32>
    %405 = arith.andi %402, %404 : vector<16x128xi1>
    %406 = vector.extract_strided_slice %258 {offsets = [11, 0], sizes = [1, 128], strides = [1, 1]} : vector<16x128xf32> to vector<1x128xf32>
    %cst_97 = arith.constant -1.000000e+05 : f32
    %407 = vector.shape_cast %406 : vector<1x128xf32> to vector<1x128xf32>
    %408 = vector.broadcast %407 : vector<1x128xf32> to vector<16x128xf32>
    %409 = vector.broadcast %cst_97 : f32 to vector<16x128xf32>
    %410 = arith.select %405, %408, %409 : vector<16x128xi1>, vector<16x128xf32>
    %411 = arith.maximumf %400, %410 : vector<16x128xf32>
    %c12_i32_98 = arith.constant 12 : i32
    %412 = vector.broadcast %c12_i32_98 : i32 to vector<16x128xi32>
    %413 = arith.cmpi sle, %271, %412 : vector<16x128xi32>
    %c12_i32_99 = arith.constant 12 : i32
    %414 = vector.broadcast %c12_i32_99 : i32 to vector<16x128xi32>
    %415 = arith.cmpi sge, %278, %414 : vector<16x128xi32>
    %416 = arith.andi %413, %415 : vector<16x128xi1>
    %417 = vector.extract_strided_slice %258 {offsets = [12, 0], sizes = [1, 128], strides = [1, 1]} : vector<16x128xf32> to vector<1x128xf32>
    %cst_100 = arith.constant -1.000000e+05 : f32
    %418 = vector.shape_cast %417 : vector<1x128xf32> to vector<1x128xf32>
    %419 = vector.broadcast %418 : vector<1x128xf32> to vector<16x128xf32>
    %420 = vector.broadcast %cst_100 : f32 to vector<16x128xf32>
    %421 = arith.select %416, %419, %420 : vector<16x128xi1>, vector<16x128xf32>
    %422 = arith.maximumf %411, %421 : vector<16x128xf32>
    %c13_i32_101 = arith.constant 13 : i32
    %423 = vector.broadcast %c13_i32_101 : i32 to vector<16x128xi32>
    %424 = arith.cmpi sle, %271, %423 : vector<16x128xi32>
    %c13_i32_102 = arith.constant 13 : i32
    %425 = vector.broadcast %c13_i32_102 : i32 to vector<16x128xi32>
    %426 = arith.cmpi sge, %278, %425 : vector<16x128xi32>
    %427 = arith.andi %424, %426 : vector<16x128xi1>
    %428 = vector.extract_strided_slice %258 {offsets = [13, 0], sizes = [1, 128], strides = [1, 1]} : vector<16x128xf32> to vector<1x128xf32>
    %cst_103 = arith.constant -1.000000e+05 : f32
    %429 = vector.shape_cast %428 : vector<1x128xf32> to vector<1x128xf32>
    %430 = vector.broadcast %429 : vector<1x128xf32> to vector<16x128xf32>
    %431 = vector.broadcast %cst_103 : f32 to vector<16x128xf32>
    %432 = arith.select %427, %430, %431 : vector<16x128xi1>, vector<16x128xf32>
    %433 = arith.maximumf %422, %432 : vector<16x128xf32>
    %c14_i32_104 = arith.constant 14 : i32
    %434 = vector.broadcast %c14_i32_104 : i32 to vector<16x128xi32>
    %435 = arith.cmpi sle, %271, %434 : vector<16x128xi32>
    %c14_i32_105 = arith.constant 14 : i32
    %436 = vector.broadcast %c14_i32_105 : i32 to vector<16x128xi32>
    %437 = arith.cmpi sge, %278, %436 : vector<16x128xi32>
    %438 = arith.andi %435, %437 : vector<16x128xi1>
    %439 = vector.extract_strided_slice %258 {offsets = [14, 0], sizes = [1, 128], strides = [1, 1]} : vector<16x128xf32> to vector<1x128xf32>
    %cst_106 = arith.constant -1.000000e+05 : f32
    %440 = vector.shape_cast %439 : vector<1x128xf32> to vector<1x128xf32>
    %441 = vector.broadcast %440 : vector<1x128xf32> to vector<16x128xf32>
    %442 = vector.broadcast %cst_106 : f32 to vector<16x128xf32>
    %443 = arith.select %438, %441, %442 : vector<16x128xi1>, vector<16x128xf32>
    %444 = arith.maximumf %433, %443 : vector<16x128xf32>
    %c15_i32_107 = arith.constant 15 : i32
    %445 = vector.broadcast %c15_i32_107 : i32 to vector<16x128xi32>
    %446 = arith.cmpi sle, %271, %445 : vector<16x128xi32>
    %c15_i32_108 = arith.constant 15 : i32
    %447 = vector.broadcast %c15_i32_108 : i32 to vector<16x128xi32>
    %448 = arith.cmpi sge, %278, %447 : vector<16x128xi32>
    %449 = arith.andi %446, %448 : vector<16x128xi1>
    %450 = vector.extract_strided_slice %258 {offsets = [15, 0], sizes = [1, 128], strides = [1, 1]} : vector<16x128xf32> to vector<1x128xf32>
    %cst_109 = arith.constant -1.000000e+05 : f32
    %451 = vector.shape_cast %450 : vector<1x128xf32> to vector<1x128xf32>
    %452 = vector.broadcast %451 : vector<1x128xf32> to vector<16x128xf32>
    %453 = vector.broadcast %cst_109 : f32 to vector<16x128xf32>
    %454 = arith.select %449, %452, %453 : vector<16x128xi1>, vector<16x128xf32>
    %455 = arith.maximumf %444, %454 : vector<16x128xf32>
    %456 = tpu.concatenate %257, %455 in 0 : vector<16x128xf32>, vector<16x128xf32> -> vector<32x128xf32>
    %457 = vector.extract_strided_slice %59 {offsets = [0, 0], sizes = [32, 64], strides = [1, 1]} : vector<64x64xf32> to vector<32x64xf32>
    %458 = vector.extract_strided_slice %58 {offsets = [0, 0], sizes = [16, 4], strides = [1, 1]} : vector<32x4xf32> to vector<16x4xf32>
    %459 = math.floor %458 : vector<16x4xf32>
    %460 = arith.fptosi %459 : vector<16x4xf32> to vector<16x4xi32>
    %461 = tpu.iota {dimensions = array<i32: 1>} : vector<16x64xi32>
    %c32_i32 = arith.constant 32 : i32
    %462 = vector.broadcast %c32_i32 : i32 to vector<16x64xi32>
    %463 = arith.cmpi slt, %461, %462 : vector<16x64xi32>
    %464 = vector.extract_strided_slice %460 {offsets = [0, 0], sizes = [16, 1], strides = [1, 1]} : vector<16x4xi32> to vector<16x1xi32>
    %465 = vector.extract_strided_slice %460 {offsets = [0, 2], sizes = [16, 1], strides = [1, 1]} : vector<16x4xi32> to vector<16x1xi32>
    %466 = vector.shape_cast %464 : vector<16x1xi32> to vector<16x1xi32>
    %467 = vector.broadcast %466 : vector<16x1xi32> to vector<16x64xi32>
    %468 = vector.shape_cast %465 : vector<16x1xi32> to vector<16x1xi32>
    %469 = vector.broadcast %468 : vector<16x1xi32> to vector<16x64xi32>
    %470 = arith.select %463, %467, %469 : vector<16x64xi1>, vector<16x64xi32>
    %471 = vector.extract_strided_slice %460 {offsets = [0, 1], sizes = [16, 1], strides = [1, 1]} : vector<16x4xi32> to vector<16x1xi32>
    %472 = vector.extract_strided_slice %460 {offsets = [0, 3], sizes = [16, 1], strides = [1, 1]} : vector<16x4xi32> to vector<16x1xi32>
    %473 = vector.shape_cast %471 : vector<16x1xi32> to vector<16x1xi32>
    %474 = vector.broadcast %473 : vector<16x1xi32> to vector<16x64xi32>
    %475 = vector.shape_cast %472 : vector<16x1xi32> to vector<16x1xi32>
    %476 = vector.broadcast %475 : vector<16x1xi32> to vector<16x64xi32>
    %477 = arith.select %463, %474, %476 : vector<16x64xi1>, vector<16x64xi32>
    %cst_110 = arith.constant -1.000000e+05 : f32
    %478 = vector.broadcast %cst_110 : f32 to vector<16x64xf32>
    %c0_i32_111 = arith.constant 0 : i32
    %479 = vector.broadcast %c0_i32_111 : i32 to vector<16x64xi32>
    %480 = arith.cmpi sle, %470, %479 : vector<16x64xi32>
    %c0_i32_112 = arith.constant 0 : i32
    %481 = vector.broadcast %c0_i32_112 : i32 to vector<16x64xi32>
    %482 = arith.cmpi sge, %477, %481 : vector<16x64xi32>
    %483 = arith.andi %480, %482 : vector<16x64xi1>
    %484 = vector.extract_strided_slice %457 {offsets = [0, 0], sizes = [1, 64], strides = [1, 1]} : vector<32x64xf32> to vector<1x64xf32>
    %cst_113 = arith.constant -1.000000e+05 : f32
    %485 = vector.shape_cast %484 : vector<1x64xf32> to vector<1x64xf32>
    %486 = vector.broadcast %485 : vector<1x64xf32> to vector<16x64xf32>
    %487 = vector.broadcast %cst_113 : f32 to vector<16x64xf32>
    %488 = arith.select %483, %486, %487 : vector<16x64xi1>, vector<16x64xf32>
    %489 = arith.maximumf %478, %488 : vector<16x64xf32>
    %c1_i32_114 = arith.constant 1 : i32
    %490 = vector.broadcast %c1_i32_114 : i32 to vector<16x64xi32>
    %491 = arith.cmpi sle, %470, %490 : vector<16x64xi32>
    %c1_i32_115 = arith.constant 1 : i32
    %492 = vector.broadcast %c1_i32_115 : i32 to vector<16x64xi32>
    %493 = arith.cmpi sge, %477, %492 : vector<16x64xi32>
    %494 = arith.andi %491, %493 : vector<16x64xi1>
    %495 = vector.extract_strided_slice %457 {offsets = [1, 0], sizes = [1, 64], strides = [1, 1]} : vector<32x64xf32> to vector<1x64xf32>
    %cst_116 = arith.constant -1.000000e+05 : f32
    %496 = vector.shape_cast %495 : vector<1x64xf32> to vector<1x64xf32>
    %497 = vector.broadcast %496 : vector<1x64xf32> to vector<16x64xf32>
    %498 = vector.broadcast %cst_116 : f32 to vector<16x64xf32>
    %499 = arith.select %494, %497, %498 : vector<16x64xi1>, vector<16x64xf32>
    %500 = arith.maximumf %489, %499 : vector<16x64xf32>
    %c2_i32_117 = arith.constant 2 : i32
    %501 = vector.broadcast %c2_i32_117 : i32 to vector<16x64xi32>
    %502 = arith.cmpi sle, %470, %501 : vector<16x64xi32>
    %c2_i32_118 = arith.constant 2 : i32
    %503 = vector.broadcast %c2_i32_118 : i32 to vector<16x64xi32>
    %504 = arith.cmpi sge, %477, %503 : vector<16x64xi32>
    %505 = arith.andi %502, %504 : vector<16x64xi1>
    %506 = vector.extract_strided_slice %457 {offsets = [2, 0], sizes = [1, 64], strides = [1, 1]} : vector<32x64xf32> to vector<1x64xf32>
    %cst_119 = arith.constant -1.000000e+05 : f32
    %507 = vector.shape_cast %506 : vector<1x64xf32> to vector<1x64xf32>
    %508 = vector.broadcast %507 : vector<1x64xf32> to vector<16x64xf32>
    %509 = vector.broadcast %cst_119 : f32 to vector<16x64xf32>
    %510 = arith.select %505, %508, %509 : vector<16x64xi1>, vector<16x64xf32>
    %511 = arith.maximumf %500, %510 : vector<16x64xf32>
    %c3_i32_120 = arith.constant 3 : i32
    %512 = vector.broadcast %c3_i32_120 : i32 to vector<16x64xi32>
    %513 = arith.cmpi sle, %470, %512 : vector<16x64xi32>
    %c3_i32_121 = arith.constant 3 : i32
    %514 = vector.broadcast %c3_i32_121 : i32 to vector<16x64xi32>
    %515 = arith.cmpi sge, %477, %514 : vector<16x64xi32>
    %516 = arith.andi %513, %515 : vector<16x64xi1>
    %517 = vector.extract_strided_slice %457 {offsets = [3, 0], sizes = [1, 64], strides = [1, 1]} : vector<32x64xf32> to vector<1x64xf32>
    %cst_122 = arith.constant -1.000000e+05 : f32
    %518 = vector.shape_cast %517 : vector<1x64xf32> to vector<1x64xf32>
    %519 = vector.broadcast %518 : vector<1x64xf32> to vector<16x64xf32>
    %520 = vector.broadcast %cst_122 : f32 to vector<16x64xf32>
    %521 = arith.select %516, %519, %520 : vector<16x64xi1>, vector<16x64xf32>
    %522 = arith.maximumf %511, %521 : vector<16x64xf32>
    %c4_i32_123 = arith.constant 4 : i32
    %523 = vector.broadcast %c4_i32_123 : i32 to vector<16x64xi32>
    %524 = arith.cmpi sle, %470, %523 : vector<16x64xi32>
    %c4_i32_124 = arith.constant 4 : i32
    %525 = vector.broadcast %c4_i32_124 : i32 to vector<16x64xi32>
    %526 = arith.cmpi sge, %477, %525 : vector<16x64xi32>
    %527 = arith.andi %524, %526 : vector<16x64xi1>
    %528 = vector.extract_strided_slice %457 {offsets = [4, 0], sizes = [1, 64], strides = [1, 1]} : vector<32x64xf32> to vector<1x64xf32>
    %cst_125 = arith.constant -1.000000e+05 : f32
    %529 = vector.shape_cast %528 : vector<1x64xf32> to vector<1x64xf32>
    %530 = vector.broadcast %529 : vector<1x64xf32> to vector<16x64xf32>
    %531 = vector.broadcast %cst_125 : f32 to vector<16x64xf32>
    %532 = arith.select %527, %530, %531 : vector<16x64xi1>, vector<16x64xf32>
    %533 = arith.maximumf %522, %532 : vector<16x64xf32>
    %c5_i32_126 = arith.constant 5 : i32
    %534 = vector.broadcast %c5_i32_126 : i32 to vector<16x64xi32>
    %535 = arith.cmpi sle, %470, %534 : vector<16x64xi32>
    %c5_i32_127 = arith.constant 5 : i32
    %536 = vector.broadcast %c5_i32_127 : i32 to vector<16x64xi32>
    %537 = arith.cmpi sge, %477, %536 : vector<16x64xi32>
    %538 = arith.andi %535, %537 : vector<16x64xi1>
    %539 = vector.extract_strided_slice %457 {offsets = [5, 0], sizes = [1, 64], strides = [1, 1]} : vector<32x64xf32> to vector<1x64xf32>
    %cst_128 = arith.constant -1.000000e+05 : f32
    %540 = vector.shape_cast %539 : vector<1x64xf32> to vector<1x64xf32>
    %541 = vector.broadcast %540 : vector<1x64xf32> to vector<16x64xf32>
    %542 = vector.broadcast %cst_128 : f32 to vector<16x64xf32>
    %543 = arith.select %538, %541, %542 : vector<16x64xi1>, vector<16x64xf32>
    %544 = arith.maximumf %533, %543 : vector<16x64xf32>
    %c6_i32_129 = arith.constant 6 : i32
    %545 = vector.broadcast %c6_i32_129 : i32 to vector<16x64xi32>
    %546 = arith.cmpi sle, %470, %545 : vector<16x64xi32>
    %c6_i32_130 = arith.constant 6 : i32
    %547 = vector.broadcast %c6_i32_130 : i32 to vector<16x64xi32>
    %548 = arith.cmpi sge, %477, %547 : vector<16x64xi32>
    %549 = arith.andi %546, %548 : vector<16x64xi1>
    %550 = vector.extract_strided_slice %457 {offsets = [6, 0], sizes = [1, 64], strides = [1, 1]} : vector<32x64xf32> to vector<1x64xf32>
    %cst_131 = arith.constant -1.000000e+05 : f32
    %551 = vector.shape_cast %550 : vector<1x64xf32> to vector<1x64xf32>
    %552 = vector.broadcast %551 : vector<1x64xf32> to vector<16x64xf32>
    %553 = vector.broadcast %cst_131 : f32 to vector<16x64xf32>
    %554 = arith.select %549, %552, %553 : vector<16x64xi1>, vector<16x64xf32>
    %555 = arith.maximumf %544, %554 : vector<16x64xf32>
    %c7_i32_132 = arith.constant 7 : i32
    %556 = vector.broadcast %c7_i32_132 : i32 to vector<16x64xi32>
    %557 = arith.cmpi sle, %470, %556 : vector<16x64xi32>
    %c7_i32_133 = arith.constant 7 : i32
    %558 = vector.broadcast %c7_i32_133 : i32 to vector<16x64xi32>
    %559 = arith.cmpi sge, %477, %558 : vector<16x64xi32>
    %560 = arith.andi %557, %559 : vector<16x64xi1>
    %561 = vector.extract_strided_slice %457 {offsets = [7, 0], sizes = [1, 64], strides = [1, 1]} : vector<32x64xf32> to vector<1x64xf32>
    %cst_134 = arith.constant -1.000000e+05 : f32
    %562 = vector.shape_cast %561 : vector<1x64xf32> to vector<1x64xf32>
    %563 = vector.broadcast %562 : vector<1x64xf32> to vector<16x64xf32>
    %564 = vector.broadcast %cst_134 : f32 to vector<16x64xf32>
    %565 = arith.select %560, %563, %564 : vector<16x64xi1>, vector<16x64xf32>
    %566 = arith.maximumf %555, %565 : vector<16x64xf32>
    %c8_i32_135 = arith.constant 8 : i32
    %567 = vector.broadcast %c8_i32_135 : i32 to vector<16x64xi32>
    %568 = arith.cmpi sle, %470, %567 : vector<16x64xi32>
    %c8_i32_136 = arith.constant 8 : i32
    %569 = vector.broadcast %c8_i32_136 : i32 to vector<16x64xi32>
    %570 = arith.cmpi sge, %477, %569 : vector<16x64xi32>
    %571 = arith.andi %568, %570 : vector<16x64xi1>
    %572 = vector.extract_strided_slice %457 {offsets = [8, 0], sizes = [1, 64], strides = [1, 1]} : vector<32x64xf32> to vector<1x64xf32>
    %cst_137 = arith.constant -1.000000e+05 : f32
    %573 = vector.shape_cast %572 : vector<1x64xf32> to vector<1x64xf32>
    %574 = vector.broadcast %573 : vector<1x64xf32> to vector<16x64xf32>
    %575 = vector.broadcast %cst_137 : f32 to vector<16x64xf32>
    %576 = arith.select %571, %574, %575 : vector<16x64xi1>, vector<16x64xf32>
    %577 = arith.maximumf %566, %576 : vector<16x64xf32>
    %c9_i32_138 = arith.constant 9 : i32
    %578 = vector.broadcast %c9_i32_138 : i32 to vector<16x64xi32>
    %579 = arith.cmpi sle, %470, %578 : vector<16x64xi32>
    %c9_i32_139 = arith.constant 9 : i32
    %580 = vector.broadcast %c9_i32_139 : i32 to vector<16x64xi32>
    %581 = arith.cmpi sge, %477, %580 : vector<16x64xi32>
    %582 = arith.andi %579, %581 : vector<16x64xi1>
    %583 = vector.extract_strided_slice %457 {offsets = [9, 0], sizes = [1, 64], strides = [1, 1]} : vector<32x64xf32> to vector<1x64xf32>
    %cst_140 = arith.constant -1.000000e+05 : f32
    %584 = vector.shape_cast %583 : vector<1x64xf32> to vector<1x64xf32>
    %585 = vector.broadcast %584 : vector<1x64xf32> to vector<16x64xf32>
    %586 = vector.broadcast %cst_140 : f32 to vector<16x64xf32>
    %587 = arith.select %582, %585, %586 : vector<16x64xi1>, vector<16x64xf32>
    %588 = arith.maximumf %577, %587 : vector<16x64xf32>
    %c10_i32_141 = arith.constant 10 : i32
    %589 = vector.broadcast %c10_i32_141 : i32 to vector<16x64xi32>
    %590 = arith.cmpi sle, %470, %589 : vector<16x64xi32>
    %c10_i32_142 = arith.constant 10 : i32
    %591 = vector.broadcast %c10_i32_142 : i32 to vector<16x64xi32>
    %592 = arith.cmpi sge, %477, %591 : vector<16x64xi32>
    %593 = arith.andi %590, %592 : vector<16x64xi1>
    %594 = vector.extract_strided_slice %457 {offsets = [10, 0], sizes = [1, 64], strides = [1, 1]} : vector<32x64xf32> to vector<1x64xf32>
    %cst_143 = arith.constant -1.000000e+05 : f32
    %595 = vector.shape_cast %594 : vector<1x64xf32> to vector<1x64xf32>
    %596 = vector.broadcast %595 : vector<1x64xf32> to vector<16x64xf32>
    %597 = vector.broadcast %cst_143 : f32 to vector<16x64xf32>
    %598 = arith.select %593, %596, %597 : vector<16x64xi1>, vector<16x64xf32>
    %599 = arith.maximumf %588, %598 : vector<16x64xf32>
    %c11_i32_144 = arith.constant 11 : i32
    %600 = vector.broadcast %c11_i32_144 : i32 to vector<16x64xi32>
    %601 = arith.cmpi sle, %470, %600 : vector<16x64xi32>
    %c11_i32_145 = arith.constant 11 : i32
    %602 = vector.broadcast %c11_i32_145 : i32 to vector<16x64xi32>
    %603 = arith.cmpi sge, %477, %602 : vector<16x64xi32>
    %604 = arith.andi %601, %603 : vector<16x64xi1>
    %605 = vector.extract_strided_slice %457 {offsets = [11, 0], sizes = [1, 64], strides = [1, 1]} : vector<32x64xf32> to vector<1x64xf32>
    %cst_146 = arith.constant -1.000000e+05 : f32
    %606 = vector.shape_cast %605 : vector<1x64xf32> to vector<1x64xf32>
    %607 = vector.broadcast %606 : vector<1x64xf32> to vector<16x64xf32>
    %608 = vector.broadcast %cst_146 : f32 to vector<16x64xf32>
    %609 = arith.select %604, %607, %608 : vector<16x64xi1>, vector<16x64xf32>
    %610 = arith.maximumf %599, %609 : vector<16x64xf32>
    %c12_i32_147 = arith.constant 12 : i32
    %611 = vector.broadcast %c12_i32_147 : i32 to vector<16x64xi32>
    %612 = arith.cmpi sle, %470, %611 : vector<16x64xi32>
    %c12_i32_148 = arith.constant 12 : i32
    %613 = vector.broadcast %c12_i32_148 : i32 to vector<16x64xi32>
    %614 = arith.cmpi sge, %477, %613 : vector<16x64xi32>
    %615 = arith.andi %612, %614 : vector<16x64xi1>
    %616 = vector.extract_strided_slice %457 {offsets = [12, 0], sizes = [1, 64], strides = [1, 1]} : vector<32x64xf32> to vector<1x64xf32>
    %cst_149 = arith.constant -1.000000e+05 : f32
    %617 = vector.shape_cast %616 : vector<1x64xf32> to vector<1x64xf32>
    %618 = vector.broadcast %617 : vector<1x64xf32> to vector<16x64xf32>
    %619 = vector.broadcast %cst_149 : f32 to vector<16x64xf32>
    %620 = arith.select %615, %618, %619 : vector<16x64xi1>, vector<16x64xf32>
    %621 = arith.maximumf %610, %620 : vector<16x64xf32>
    %c13_i32_150 = arith.constant 13 : i32
    %622 = vector.broadcast %c13_i32_150 : i32 to vector<16x64xi32>
    %623 = arith.cmpi sle, %470, %622 : vector<16x64xi32>
    %c13_i32_151 = arith.constant 13 : i32
    %624 = vector.broadcast %c13_i32_151 : i32 to vector<16x64xi32>
    %625 = arith.cmpi sge, %477, %624 : vector<16x64xi32>
    %626 = arith.andi %623, %625 : vector<16x64xi1>
    %627 = vector.extract_strided_slice %457 {offsets = [13, 0], sizes = [1, 64], strides = [1, 1]} : vector<32x64xf32> to vector<1x64xf32>
    %cst_152 = arith.constant -1.000000e+05 : f32
    %628 = vector.shape_cast %627 : vector<1x64xf32> to vector<1x64xf32>
    %629 = vector.broadcast %628 : vector<1x64xf32> to vector<16x64xf32>
    %630 = vector.broadcast %cst_152 : f32 to vector<16x64xf32>
    %631 = arith.select %626, %629, %630 : vector<16x64xi1>, vector<16x64xf32>
    %632 = arith.maximumf %621, %631 : vector<16x64xf32>
    %c14_i32_153 = arith.constant 14 : i32
    %633 = vector.broadcast %c14_i32_153 : i32 to vector<16x64xi32>
    %634 = arith.cmpi sle, %470, %633 : vector<16x64xi32>
    %c14_i32_154 = arith.constant 14 : i32
    %635 = vector.broadcast %c14_i32_154 : i32 to vector<16x64xi32>
    %636 = arith.cmpi sge, %477, %635 : vector<16x64xi32>
    %637 = arith.andi %634, %636 : vector<16x64xi1>
    %638 = vector.extract_strided_slice %457 {offsets = [14, 0], sizes = [1, 64], strides = [1, 1]} : vector<32x64xf32> to vector<1x64xf32>
    %cst_155 = arith.constant -1.000000e+05 : f32
    %639 = vector.shape_cast %638 : vector<1x64xf32> to vector<1x64xf32>
    %640 = vector.broadcast %639 : vector<1x64xf32> to vector<16x64xf32>
    %641 = vector.broadcast %cst_155 : f32 to vector<16x64xf32>
    %642 = arith.select %637, %640, %641 : vector<16x64xi1>, vector<16x64xf32>
    %643 = arith.maximumf %632, %642 : vector<16x64xf32>
    %c15_i32_156 = arith.constant 15 : i32
    %644 = vector.broadcast %c15_i32_156 : i32 to vector<16x64xi32>
    %645 = arith.cmpi sle, %470, %644 : vector<16x64xi32>
    %c15_i32_157 = arith.constant 15 : i32
    %646 = vector.broadcast %c15_i32_157 : i32 to vector<16x64xi32>
    %647 = arith.cmpi sge, %477, %646 : vector<16x64xi32>
    %648 = arith.andi %645, %647 : vector<16x64xi1>
    %649 = vector.extract_strided_slice %457 {offsets = [15, 0], sizes = [1, 64], strides = [1, 1]} : vector<32x64xf32> to vector<1x64xf32>
    %cst_158 = arith.constant -1.000000e+05 : f32
    %650 = vector.shape_cast %649 : vector<1x64xf32> to vector<1x64xf32>
    %651 = vector.broadcast %650 : vector<1x64xf32> to vector<16x64xf32>
    %652 = vector.broadcast %cst_158 : f32 to vector<16x64xf32>
    %653 = arith.select %648, %651, %652 : vector<16x64xi1>, vector<16x64xf32>
    %654 = arith.maximumf %643, %653 : vector<16x64xf32>
    %c16_i32 = arith.constant 16 : i32
    %655 = vector.broadcast %c16_i32 : i32 to vector<16x64xi32>
    %656 = arith.cmpi sle, %470, %655 : vector<16x64xi32>
    %c16_i32_159 = arith.constant 16 : i32
    %657 = vector.broadcast %c16_i32_159 : i32 to vector<16x64xi32>
    %658 = arith.cmpi sge, %477, %657 : vector<16x64xi32>
    %659 = arith.andi %656, %658 : vector<16x64xi1>
    %660 = vector.extract_strided_slice %457 {offsets = [16, 0], sizes = [1, 64], strides = [1, 1]} : vector<32x64xf32> to vector<1x64xf32>
    %cst_160 = arith.constant -1.000000e+05 : f32
    %661 = vector.shape_cast %660 : vector<1x64xf32> to vector<1x64xf32>
    %662 = vector.broadcast %661 : vector<1x64xf32> to vector<16x64xf32>
    %663 = vector.broadcast %cst_160 : f32 to vector<16x64xf32>
    %664 = arith.select %659, %662, %663 : vector<16x64xi1>, vector<16x64xf32>
    %665 = arith.maximumf %654, %664 : vector<16x64xf32>
    %c17_i32 = arith.constant 17 : i32
    %666 = vector.broadcast %c17_i32 : i32 to vector<16x64xi32>
    %667 = arith.cmpi sle, %470, %666 : vector<16x64xi32>
    %c17_i32_161 = arith.constant 17 : i32
    %668 = vector.broadcast %c17_i32_161 : i32 to vector<16x64xi32>
    %669 = arith.cmpi sge, %477, %668 : vector<16x64xi32>
    %670 = arith.andi %667, %669 : vector<16x64xi1>
    %671 = vector.extract_strided_slice %457 {offsets = [17, 0], sizes = [1, 64], strides = [1, 1]} : vector<32x64xf32> to vector<1x64xf32>
    %cst_162 = arith.constant -1.000000e+05 : f32
    %672 = vector.shape_cast %671 : vector<1x64xf32> to vector<1x64xf32>
    %673 = vector.broadcast %672 : vector<1x64xf32> to vector<16x64xf32>
    %674 = vector.broadcast %cst_162 : f32 to vector<16x64xf32>
    %675 = arith.select %670, %673, %674 : vector<16x64xi1>, vector<16x64xf32>
    %676 = arith.maximumf %665, %675 : vector<16x64xf32>
    %c18_i32 = arith.constant 18 : i32
    %677 = vector.broadcast %c18_i32 : i32 to vector<16x64xi32>
    %678 = arith.cmpi sle, %470, %677 : vector<16x64xi32>
    %c18_i32_163 = arith.constant 18 : i32
    %679 = vector.broadcast %c18_i32_163 : i32 to vector<16x64xi32>
    %680 = arith.cmpi sge, %477, %679 : vector<16x64xi32>
    %681 = arith.andi %678, %680 : vector<16x64xi1>
    %682 = vector.extract_strided_slice %457 {offsets = [18, 0], sizes = [1, 64], strides = [1, 1]} : vector<32x64xf32> to vector<1x64xf32>
    %cst_164 = arith.constant -1.000000e+05 : f32
    %683 = vector.shape_cast %682 : vector<1x64xf32> to vector<1x64xf32>
    %684 = vector.broadcast %683 : vector<1x64xf32> to vector<16x64xf32>
    %685 = vector.broadcast %cst_164 : f32 to vector<16x64xf32>
    %686 = arith.select %681, %684, %685 : vector<16x64xi1>, vector<16x64xf32>
    %687 = arith.maximumf %676, %686 : vector<16x64xf32>
    %c19_i32 = arith.constant 19 : i32
    %688 = vector.broadcast %c19_i32 : i32 to vector<16x64xi32>
    %689 = arith.cmpi sle, %470, %688 : vector<16x64xi32>
    %c19_i32_165 = arith.constant 19 : i32
    %690 = vector.broadcast %c19_i32_165 : i32 to vector<16x64xi32>
    %691 = arith.cmpi sge, %477, %690 : vector<16x64xi32>
    %692 = arith.andi %689, %691 : vector<16x64xi1>
    %693 = vector.extract_strided_slice %457 {offsets = [19, 0], sizes = [1, 64], strides = [1, 1]} : vector<32x64xf32> to vector<1x64xf32>
    %cst_166 = arith.constant -1.000000e+05 : f32
    %694 = vector.shape_cast %693 : vector<1x64xf32> to vector<1x64xf32>
    %695 = vector.broadcast %694 : vector<1x64xf32> to vector<16x64xf32>
    %696 = vector.broadcast %cst_166 : f32 to vector<16x64xf32>
    %697 = arith.select %692, %695, %696 : vector<16x64xi1>, vector<16x64xf32>
    %698 = arith.maximumf %687, %697 : vector<16x64xf32>
    %c20_i32 = arith.constant 20 : i32
    %699 = vector.broadcast %c20_i32 : i32 to vector<16x64xi32>
    %700 = arith.cmpi sle, %470, %699 : vector<16x64xi32>
    %c20_i32_167 = arith.constant 20 : i32
    %701 = vector.broadcast %c20_i32_167 : i32 to vector<16x64xi32>
    %702 = arith.cmpi sge, %477, %701 : vector<16x64xi32>
    %703 = arith.andi %700, %702 : vector<16x64xi1>
    %704 = vector.extract_strided_slice %457 {offsets = [20, 0], sizes = [1, 64], strides = [1, 1]} : vector<32x64xf32> to vector<1x64xf32>
    %cst_168 = arith.constant -1.000000e+05 : f32
    %705 = vector.shape_cast %704 : vector<1x64xf32> to vector<1x64xf32>
    %706 = vector.broadcast %705 : vector<1x64xf32> to vector<16x64xf32>
    %707 = vector.broadcast %cst_168 : f32 to vector<16x64xf32>
    %708 = arith.select %703, %706, %707 : vector<16x64xi1>, vector<16x64xf32>
    %709 = arith.maximumf %698, %708 : vector<16x64xf32>
    %c21_i32 = arith.constant 21 : i32
    %710 = vector.broadcast %c21_i32 : i32 to vector<16x64xi32>
    %711 = arith.cmpi sle, %470, %710 : vector<16x64xi32>
    %c21_i32_169 = arith.constant 21 : i32
    %712 = vector.broadcast %c21_i32_169 : i32 to vector<16x64xi32>
    %713 = arith.cmpi sge, %477, %712 : vector<16x64xi32>
    %714 = arith.andi %711, %713 : vector<16x64xi1>
    %715 = vector.extract_strided_slice %457 {offsets = [21, 0], sizes = [1, 64], strides = [1, 1]} : vector<32x64xf32> to vector<1x64xf32>
    %cst_170 = arith.constant -1.000000e+05 : f32
    %716 = vector.shape_cast %715 : vector<1x64xf32> to vector<1x64xf32>
    %717 = vector.broadcast %716 : vector<1x64xf32> to vector<16x64xf32>
    %718 = vector.broadcast %cst_170 : f32 to vector<16x64xf32>
    %719 = arith.select %714, %717, %718 : vector<16x64xi1>, vector<16x64xf32>
    %720 = arith.maximumf %709, %719 : vector<16x64xf32>
    %c22_i32 = arith.constant 22 : i32
    %721 = vector.broadcast %c22_i32 : i32 to vector<16x64xi32>
    %722 = arith.cmpi sle, %470, %721 : vector<16x64xi32>
    %c22_i32_171 = arith.constant 22 : i32
    %723 = vector.broadcast %c22_i32_171 : i32 to vector<16x64xi32>
    %724 = arith.cmpi sge, %477, %723 : vector<16x64xi32>
    %725 = arith.andi %722, %724 : vector<16x64xi1>
    %726 = vector.extract_strided_slice %457 {offsets = [22, 0], sizes = [1, 64], strides = [1, 1]} : vector<32x64xf32> to vector<1x64xf32>
    %cst_172 = arith.constant -1.000000e+05 : f32
    %727 = vector.shape_cast %726 : vector<1x64xf32> to vector<1x64xf32>
    %728 = vector.broadcast %727 : vector<1x64xf32> to vector<16x64xf32>
    %729 = vector.broadcast %cst_172 : f32 to vector<16x64xf32>
    %730 = arith.select %725, %728, %729 : vector<16x64xi1>, vector<16x64xf32>
    %731 = arith.maximumf %720, %730 : vector<16x64xf32>
    %c23_i32 = arith.constant 23 : i32
    %732 = vector.broadcast %c23_i32 : i32 to vector<16x64xi32>
    %733 = arith.cmpi sle, %470, %732 : vector<16x64xi32>
    %c23_i32_173 = arith.constant 23 : i32
    %734 = vector.broadcast %c23_i32_173 : i32 to vector<16x64xi32>
    %735 = arith.cmpi sge, %477, %734 : vector<16x64xi32>
    %736 = arith.andi %733, %735 : vector<16x64xi1>
    %737 = vector.extract_strided_slice %457 {offsets = [23, 0], sizes = [1, 64], strides = [1, 1]} : vector<32x64xf32> to vector<1x64xf32>
    %cst_174 = arith.constant -1.000000e+05 : f32
    %738 = vector.shape_cast %737 : vector<1x64xf32> to vector<1x64xf32>
    %739 = vector.broadcast %738 : vector<1x64xf32> to vector<16x64xf32>
    %740 = vector.broadcast %cst_174 : f32 to vector<16x64xf32>
    %741 = arith.select %736, %739, %740 : vector<16x64xi1>, vector<16x64xf32>
    %742 = arith.maximumf %731, %741 : vector<16x64xf32>
    %c24_i32 = arith.constant 24 : i32
    %743 = vector.broadcast %c24_i32 : i32 to vector<16x64xi32>
    %744 = arith.cmpi sle, %470, %743 : vector<16x64xi32>
    %c24_i32_175 = arith.constant 24 : i32
    %745 = vector.broadcast %c24_i32_175 : i32 to vector<16x64xi32>
    %746 = arith.cmpi sge, %477, %745 : vector<16x64xi32>
    %747 = arith.andi %744, %746 : vector<16x64xi1>
    %748 = vector.extract_strided_slice %457 {offsets = [24, 0], sizes = [1, 64], strides = [1, 1]} : vector<32x64xf32> to vector<1x64xf32>
    %cst_176 = arith.constant -1.000000e+05 : f32
    %749 = vector.shape_cast %748 : vector<1x64xf32> to vector<1x64xf32>
    %750 = vector.broadcast %749 : vector<1x64xf32> to vector<16x64xf32>
    %751 = vector.broadcast %cst_176 : f32 to vector<16x64xf32>
    %752 = arith.select %747, %750, %751 : vector<16x64xi1>, vector<16x64xf32>
    %753 = arith.maximumf %742, %752 : vector<16x64xf32>
    %c25_i32 = arith.constant 25 : i32
    %754 = vector.broadcast %c25_i32 : i32 to vector<16x64xi32>
    %755 = arith.cmpi sle, %470, %754 : vector<16x64xi32>
    %c25_i32_177 = arith.constant 25 : i32
    %756 = vector.broadcast %c25_i32_177 : i32 to vector<16x64xi32>
    %757 = arith.cmpi sge, %477, %756 : vector<16x64xi32>
    %758 = arith.andi %755, %757 : vector<16x64xi1>
    %759 = vector.extract_strided_slice %457 {offsets = [25, 0], sizes = [1, 64], strides = [1, 1]} : vector<32x64xf32> to vector<1x64xf32>
    %cst_178 = arith.constant -1.000000e+05 : f32
    %760 = vector.shape_cast %759 : vector<1x64xf32> to vector<1x64xf32>
    %761 = vector.broadcast %760 : vector<1x64xf32> to vector<16x64xf32>
    %762 = vector.broadcast %cst_178 : f32 to vector<16x64xf32>
    %763 = arith.select %758, %761, %762 : vector<16x64xi1>, vector<16x64xf32>
    %764 = arith.maximumf %753, %763 : vector<16x64xf32>
    %c26_i32 = arith.constant 26 : i32
    %765 = vector.broadcast %c26_i32 : i32 to vector<16x64xi32>
    %766 = arith.cmpi sle, %470, %765 : vector<16x64xi32>
    %c26_i32_179 = arith.constant 26 : i32
    %767 = vector.broadcast %c26_i32_179 : i32 to vector<16x64xi32>
    %768 = arith.cmpi sge, %477, %767 : vector<16x64xi32>
    %769 = arith.andi %766, %768 : vector<16x64xi1>
    %770 = vector.extract_strided_slice %457 {offsets = [26, 0], sizes = [1, 64], strides = [1, 1]} : vector<32x64xf32> to vector<1x64xf32>
    %cst_180 = arith.constant -1.000000e+05 : f32
    %771 = vector.shape_cast %770 : vector<1x64xf32> to vector<1x64xf32>
    %772 = vector.broadcast %771 : vector<1x64xf32> to vector<16x64xf32>
    %773 = vector.broadcast %cst_180 : f32 to vector<16x64xf32>
    %774 = arith.select %769, %772, %773 : vector<16x64xi1>, vector<16x64xf32>
    %775 = arith.maximumf %764, %774 : vector<16x64xf32>
    %c27_i32 = arith.constant 27 : i32
    %776 = vector.broadcast %c27_i32 : i32 to vector<16x64xi32>
    %777 = arith.cmpi sle, %470, %776 : vector<16x64xi32>
    %c27_i32_181 = arith.constant 27 : i32
    %778 = vector.broadcast %c27_i32_181 : i32 to vector<16x64xi32>
    %779 = arith.cmpi sge, %477, %778 : vector<16x64xi32>
    %780 = arith.andi %777, %779 : vector<16x64xi1>
    %781 = vector.extract_strided_slice %457 {offsets = [27, 0], sizes = [1, 64], strides = [1, 1]} : vector<32x64xf32> to vector<1x64xf32>
    %cst_182 = arith.constant -1.000000e+05 : f32
    %782 = vector.shape_cast %781 : vector<1x64xf32> to vector<1x64xf32>
    %783 = vector.broadcast %782 : vector<1x64xf32> to vector<16x64xf32>
    %784 = vector.broadcast %cst_182 : f32 to vector<16x64xf32>
    %785 = arith.select %780, %783, %784 : vector<16x64xi1>, vector<16x64xf32>
    %786 = arith.maximumf %775, %785 : vector<16x64xf32>
    %c28_i32 = arith.constant 28 : i32
    %787 = vector.broadcast %c28_i32 : i32 to vector<16x64xi32>
    %788 = arith.cmpi sle, %470, %787 : vector<16x64xi32>
    %c28_i32_183 = arith.constant 28 : i32
    %789 = vector.broadcast %c28_i32_183 : i32 to vector<16x64xi32>
    %790 = arith.cmpi sge, %477, %789 : vector<16x64xi32>
    %791 = arith.andi %788, %790 : vector<16x64xi1>
    %792 = vector.extract_strided_slice %457 {offsets = [28, 0], sizes = [1, 64], strides = [1, 1]} : vector<32x64xf32> to vector<1x64xf32>
    %cst_184 = arith.constant -1.000000e+05 : f32
    %793 = vector.shape_cast %792 : vector<1x64xf32> to vector<1x64xf32>
    %794 = vector.broadcast %793 : vector<1x64xf32> to vector<16x64xf32>
    %795 = vector.broadcast %cst_184 : f32 to vector<16x64xf32>
    %796 = arith.select %791, %794, %795 : vector<16x64xi1>, vector<16x64xf32>
    %797 = arith.maximumf %786, %796 : vector<16x64xf32>
    %c29_i32 = arith.constant 29 : i32
    %798 = vector.broadcast %c29_i32 : i32 to vector<16x64xi32>
    %799 = arith.cmpi sle, %470, %798 : vector<16x64xi32>
    %c29_i32_185 = arith.constant 29 : i32
    %800 = vector.broadcast %c29_i32_185 : i32 to vector<16x64xi32>
    %801 = arith.cmpi sge, %477, %800 : vector<16x64xi32>
    %802 = arith.andi %799, %801 : vector<16x64xi1>
    %803 = vector.extract_strided_slice %457 {offsets = [29, 0], sizes = [1, 64], strides = [1, 1]} : vector<32x64xf32> to vector<1x64xf32>
    %cst_186 = arith.constant -1.000000e+05 : f32
    %804 = vector.shape_cast %803 : vector<1x64xf32> to vector<1x64xf32>
    %805 = vector.broadcast %804 : vector<1x64xf32> to vector<16x64xf32>
    %806 = vector.broadcast %cst_186 : f32 to vector<16x64xf32>
    %807 = arith.select %802, %805, %806 : vector<16x64xi1>, vector<16x64xf32>
    %808 = arith.maximumf %797, %807 : vector<16x64xf32>
    %c30_i32 = arith.constant 30 : i32
    %809 = vector.broadcast %c30_i32 : i32 to vector<16x64xi32>
    %810 = arith.cmpi sle, %470, %809 : vector<16x64xi32>
    %c30_i32_187 = arith.constant 30 : i32
    %811 = vector.broadcast %c30_i32_187 : i32 to vector<16x64xi32>
    %812 = arith.cmpi sge, %477, %811 : vector<16x64xi32>
    %813 = arith.andi %810, %812 : vector<16x64xi1>
    %814 = vector.extract_strided_slice %457 {offsets = [30, 0], sizes = [1, 64], strides = [1, 1]} : vector<32x64xf32> to vector<1x64xf32>
    %cst_188 = arith.constant -1.000000e+05 : f32
    %815 = vector.shape_cast %814 : vector<1x64xf32> to vector<1x64xf32>
    %816 = vector.broadcast %815 : vector<1x64xf32> to vector<16x64xf32>
    %817 = vector.broadcast %cst_188 : f32 to vector<16x64xf32>
    %818 = arith.select %813, %816, %817 : vector<16x64xi1>, vector<16x64xf32>
    %819 = arith.maximumf %808, %818 : vector<16x64xf32>
    %c31_i32 = arith.constant 31 : i32
    %820 = vector.broadcast %c31_i32 : i32 to vector<16x64xi32>
    %821 = arith.cmpi sle, %470, %820 : vector<16x64xi32>
    %c31_i32_189 = arith.constant 31 : i32
    %822 = vector.broadcast %c31_i32_189 : i32 to vector<16x64xi32>
    %823 = arith.cmpi sge, %477, %822 : vector<16x64xi32>
    %824 = arith.andi %821, %823 : vector<16x64xi1>
    %825 = vector.extract_strided_slice %457 {offsets = [31, 0], sizes = [1, 64], strides = [1, 1]} : vector<32x64xf32> to vector<1x64xf32>
    %cst_190 = arith.constant -1.000000e+05 : f32
    %826 = vector.shape_cast %825 : vector<1x64xf32> to vector<1x64xf32>
    %827 = vector.broadcast %826 : vector<1x64xf32> to vector<16x64xf32>
    %828 = vector.broadcast %cst_190 : f32 to vector<16x64xf32>
    %829 = arith.select %824, %827, %828 : vector<16x64xi1>, vector<16x64xf32>
    %830 = arith.maximumf %819, %829 : vector<16x64xf32>
    %831 = vector.extract_strided_slice %59 {offsets = [32, 0], sizes = [32, 64], strides = [1, 1]} : vector<64x64xf32> to vector<32x64xf32>
    %832 = vector.extract_strided_slice %58 {offsets = [16, 0], sizes = [16, 4], strides = [1, 1]} : vector<32x4xf32> to vector<16x4xf32>
    %833 = math.floor %832 : vector<16x4xf32>
    %834 = arith.fptosi %833 : vector<16x4xf32> to vector<16x4xi32>
    %835 = tpu.iota {dimensions = array<i32: 1>} : vector<16x64xi32>
    %c32_i32_191 = arith.constant 32 : i32
    %836 = vector.broadcast %c32_i32_191 : i32 to vector<16x64xi32>
    %837 = arith.cmpi slt, %835, %836 : vector<16x64xi32>
    %838 = vector.extract_strided_slice %834 {offsets = [0, 0], sizes = [16, 1], strides = [1, 1]} : vector<16x4xi32> to vector<16x1xi32>
    %839 = vector.extract_strided_slice %834 {offsets = [0, 2], sizes = [16, 1], strides = [1, 1]} : vector<16x4xi32> to vector<16x1xi32>
    %840 = vector.shape_cast %838 : vector<16x1xi32> to vector<16x1xi32>
    %841 = vector.broadcast %840 : vector<16x1xi32> to vector<16x64xi32>
    %842 = vector.shape_cast %839 : vector<16x1xi32> to vector<16x1xi32>
    %843 = vector.broadcast %842 : vector<16x1xi32> to vector<16x64xi32>
    %844 = arith.select %837, %841, %843 : vector<16x64xi1>, vector<16x64xi32>
    %845 = vector.extract_strided_slice %834 {offsets = [0, 1], sizes = [16, 1], strides = [1, 1]} : vector<16x4xi32> to vector<16x1xi32>
    %846 = vector.extract_strided_slice %834 {offsets = [0, 3], sizes = [16, 1], strides = [1, 1]} : vector<16x4xi32> to vector<16x1xi32>
    %847 = vector.shape_cast %845 : vector<16x1xi32> to vector<16x1xi32>
    %848 = vector.broadcast %847 : vector<16x1xi32> to vector<16x64xi32>
    %849 = vector.shape_cast %846 : vector<16x1xi32> to vector<16x1xi32>
    %850 = vector.broadcast %849 : vector<16x1xi32> to vector<16x64xi32>
    %851 = arith.select %837, %848, %850 : vector<16x64xi1>, vector<16x64xi32>
    %cst_192 = arith.constant -1.000000e+05 : f32
    %852 = vector.broadcast %cst_192 : f32 to vector<16x64xf32>
    %c0_i32_193 = arith.constant 0 : i32
    %853 = vector.broadcast %c0_i32_193 : i32 to vector<16x64xi32>
    %854 = arith.cmpi sle, %844, %853 : vector<16x64xi32>
    %c0_i32_194 = arith.constant 0 : i32
    %855 = vector.broadcast %c0_i32_194 : i32 to vector<16x64xi32>
    %856 = arith.cmpi sge, %851, %855 : vector<16x64xi32>
    %857 = arith.andi %854, %856 : vector<16x64xi1>
    %858 = vector.extract_strided_slice %831 {offsets = [0, 0], sizes = [1, 64], strides = [1, 1]} : vector<32x64xf32> to vector<1x64xf32>
    %cst_195 = arith.constant -1.000000e+05 : f32
    %859 = vector.shape_cast %858 : vector<1x64xf32> to vector<1x64xf32>
    %860 = vector.broadcast %859 : vector<1x64xf32> to vector<16x64xf32>
    %861 = vector.broadcast %cst_195 : f32 to vector<16x64xf32>
    %862 = arith.select %857, %860, %861 : vector<16x64xi1>, vector<16x64xf32>
    %863 = arith.maximumf %852, %862 : vector<16x64xf32>
    %c1_i32_196 = arith.constant 1 : i32
    %864 = vector.broadcast %c1_i32_196 : i32 to vector<16x64xi32>
    %865 = arith.cmpi sle, %844, %864 : vector<16x64xi32>
    %c1_i32_197 = arith.constant 1 : i32
    %866 = vector.broadcast %c1_i32_197 : i32 to vector<16x64xi32>
    %867 = arith.cmpi sge, %851, %866 : vector<16x64xi32>
    %868 = arith.andi %865, %867 : vector<16x64xi1>
    %869 = vector.extract_strided_slice %831 {offsets = [1, 0], sizes = [1, 64], strides = [1, 1]} : vector<32x64xf32> to vector<1x64xf32>
    %cst_198 = arith.constant -1.000000e+05 : f32
    %870 = vector.shape_cast %869 : vector<1x64xf32> to vector<1x64xf32>
    %871 = vector.broadcast %870 : vector<1x64xf32> to vector<16x64xf32>
    %872 = vector.broadcast %cst_198 : f32 to vector<16x64xf32>
    %873 = arith.select %868, %871, %872 : vector<16x64xi1>, vector<16x64xf32>
    %874 = arith.maximumf %863, %873 : vector<16x64xf32>
    %c2_i32_199 = arith.constant 2 : i32
    %875 = vector.broadcast %c2_i32_199 : i32 to vector<16x64xi32>
    %876 = arith.cmpi sle, %844, %875 : vector<16x64xi32>
    %c2_i32_200 = arith.constant 2 : i32
    %877 = vector.broadcast %c2_i32_200 : i32 to vector<16x64xi32>
    %878 = arith.cmpi sge, %851, %877 : vector<16x64xi32>
    %879 = arith.andi %876, %878 : vector<16x64xi1>
    %880 = vector.extract_strided_slice %831 {offsets = [2, 0], sizes = [1, 64], strides = [1, 1]} : vector<32x64xf32> to vector<1x64xf32>
    %cst_201 = arith.constant -1.000000e+05 : f32
    %881 = vector.shape_cast %880 : vector<1x64xf32> to vector<1x64xf32>
    %882 = vector.broadcast %881 : vector<1x64xf32> to vector<16x64xf32>
    %883 = vector.broadcast %cst_201 : f32 to vector<16x64xf32>
    %884 = arith.select %879, %882, %883 : vector<16x64xi1>, vector<16x64xf32>
    %885 = arith.maximumf %874, %884 : vector<16x64xf32>
    %c3_i32_202 = arith.constant 3 : i32
    %886 = vector.broadcast %c3_i32_202 : i32 to vector<16x64xi32>
    %887 = arith.cmpi sle, %844, %886 : vector<16x64xi32>
    %c3_i32_203 = arith.constant 3 : i32
    %888 = vector.broadcast %c3_i32_203 : i32 to vector<16x64xi32>
    %889 = arith.cmpi sge, %851, %888 : vector<16x64xi32>
    %890 = arith.andi %887, %889 : vector<16x64xi1>
    %891 = vector.extract_strided_slice %831 {offsets = [3, 0], sizes = [1, 64], strides = [1, 1]} : vector<32x64xf32> to vector<1x64xf32>
    %cst_204 = arith.constant -1.000000e+05 : f32
    %892 = vector.shape_cast %891 : vector<1x64xf32> to vector<1x64xf32>
    %893 = vector.broadcast %892 : vector<1x64xf32> to vector<16x64xf32>
    %894 = vector.broadcast %cst_204 : f32 to vector<16x64xf32>
    %895 = arith.select %890, %893, %894 : vector<16x64xi1>, vector<16x64xf32>
    %896 = arith.maximumf %885, %895 : vector<16x64xf32>
    %c4_i32_205 = arith.constant 4 : i32
    %897 = vector.broadcast %c4_i32_205 : i32 to vector<16x64xi32>
    %898 = arith.cmpi sle, %844, %897 : vector<16x64xi32>
    %c4_i32_206 = arith.constant 4 : i32
    %899 = vector.broadcast %c4_i32_206 : i32 to vector<16x64xi32>
    %900 = arith.cmpi sge, %851, %899 : vector<16x64xi32>
    %901 = arith.andi %898, %900 : vector<16x64xi1>
    %902 = vector.extract_strided_slice %831 {offsets = [4, 0], sizes = [1, 64], strides = [1, 1]} : vector<32x64xf32> to vector<1x64xf32>
    %cst_207 = arith.constant -1.000000e+05 : f32
    %903 = vector.shape_cast %902 : vector<1x64xf32> to vector<1x64xf32>
    %904 = vector.broadcast %903 : vector<1x64xf32> to vector<16x64xf32>
    %905 = vector.broadcast %cst_207 : f32 to vector<16x64xf32>
    %906 = arith.select %901, %904, %905 : vector<16x64xi1>, vector<16x64xf32>
    %907 = arith.maximumf %896, %906 : vector<16x64xf32>
    %c5_i32_208 = arith.constant 5 : i32
    %908 = vector.broadcast %c5_i32_208 : i32 to vector<16x64xi32>
    %909 = arith.cmpi sle, %844, %908 : vector<16x64xi32>
    %c5_i32_209 = arith.constant 5 : i32
    %910 = vector.broadcast %c5_i32_209 : i32 to vector<16x64xi32>
    %911 = arith.cmpi sge, %851, %910 : vector<16x64xi32>
    %912 = arith.andi %909, %911 : vector<16x64xi1>
    %913 = vector.extract_strided_slice %831 {offsets = [5, 0], sizes = [1, 64], strides = [1, 1]} : vector<32x64xf32> to vector<1x64xf32>
    %cst_210 = arith.constant -1.000000e+05 : f32
    %914 = vector.shape_cast %913 : vector<1x64xf32> to vector<1x64xf32>
    %915 = vector.broadcast %914 : vector<1x64xf32> to vector<16x64xf32>
    %916 = vector.broadcast %cst_210 : f32 to vector<16x64xf32>
    %917 = arith.select %912, %915, %916 : vector<16x64xi1>, vector<16x64xf32>
    %918 = arith.maximumf %907, %917 : vector<16x64xf32>
    %c6_i32_211 = arith.constant 6 : i32
    %919 = vector.broadcast %c6_i32_211 : i32 to vector<16x64xi32>
    %920 = arith.cmpi sle, %844, %919 : vector<16x64xi32>
    %c6_i32_212 = arith.constant 6 : i32
    %921 = vector.broadcast %c6_i32_212 : i32 to vector<16x64xi32>
    %922 = arith.cmpi sge, %851, %921 : vector<16x64xi32>
    %923 = arith.andi %920, %922 : vector<16x64xi1>
    %924 = vector.extract_strided_slice %831 {offsets = [6, 0], sizes = [1, 64], strides = [1, 1]} : vector<32x64xf32> to vector<1x64xf32>
    %cst_213 = arith.constant -1.000000e+05 : f32
    %925 = vector.shape_cast %924 : vector<1x64xf32> to vector<1x64xf32>
    %926 = vector.broadcast %925 : vector<1x64xf32> to vector<16x64xf32>
    %927 = vector.broadcast %cst_213 : f32 to vector<16x64xf32>
    %928 = arith.select %923, %926, %927 : vector<16x64xi1>, vector<16x64xf32>
    %929 = arith.maximumf %918, %928 : vector<16x64xf32>
    %c7_i32_214 = arith.constant 7 : i32
    %930 = vector.broadcast %c7_i32_214 : i32 to vector<16x64xi32>
    %931 = arith.cmpi sle, %844, %930 : vector<16x64xi32>
    %c7_i32_215 = arith.constant 7 : i32
    %932 = vector.broadcast %c7_i32_215 : i32 to vector<16x64xi32>
    %933 = arith.cmpi sge, %851, %932 : vector<16x64xi32>
    %934 = arith.andi %931, %933 : vector<16x64xi1>
    %935 = vector.extract_strided_slice %831 {offsets = [7, 0], sizes = [1, 64], strides = [1, 1]} : vector<32x64xf32> to vector<1x64xf32>
    %cst_216 = arith.constant -1.000000e+05 : f32
    %936 = vector.shape_cast %935 : vector<1x64xf32> to vector<1x64xf32>
    %937 = vector.broadcast %936 : vector<1x64xf32> to vector<16x64xf32>
    %938 = vector.broadcast %cst_216 : f32 to vector<16x64xf32>
    %939 = arith.select %934, %937, %938 : vector<16x64xi1>, vector<16x64xf32>
    %940 = arith.maximumf %929, %939 : vector<16x64xf32>
    %c8_i32_217 = arith.constant 8 : i32
    %941 = vector.broadcast %c8_i32_217 : i32 to vector<16x64xi32>
    %942 = arith.cmpi sle, %844, %941 : vector<16x64xi32>
    %c8_i32_218 = arith.constant 8 : i32
    %943 = vector.broadcast %c8_i32_218 : i32 to vector<16x64xi32>
    %944 = arith.cmpi sge, %851, %943 : vector<16x64xi32>
    %945 = arith.andi %942, %944 : vector<16x64xi1>
    %946 = vector.extract_strided_slice %831 {offsets = [8, 0], sizes = [1, 64], strides = [1, 1]} : vector<32x64xf32> to vector<1x64xf32>
    %cst_219 = arith.constant -1.000000e+05 : f32
    %947 = vector.shape_cast %946 : vector<1x64xf32> to vector<1x64xf32>
    %948 = vector.broadcast %947 : vector<1x64xf32> to vector<16x64xf32>
    %949 = vector.broadcast %cst_219 : f32 to vector<16x64xf32>
    %950 = arith.select %945, %948, %949 : vector<16x64xi1>, vector<16x64xf32>
    %951 = arith.maximumf %940, %950 : vector<16x64xf32>
    %c9_i32_220 = arith.constant 9 : i32
    %952 = vector.broadcast %c9_i32_220 : i32 to vector<16x64xi32>
    %953 = arith.cmpi sle, %844, %952 : vector<16x64xi32>
    %c9_i32_221 = arith.constant 9 : i32
    %954 = vector.broadcast %c9_i32_221 : i32 to vector<16x64xi32>
    %955 = arith.cmpi sge, %851, %954 : vector<16x64xi32>
    %956 = arith.andi %953, %955 : vector<16x64xi1>
    %957 = vector.extract_strided_slice %831 {offsets = [9, 0], sizes = [1, 64], strides = [1, 1]} : vector<32x64xf32> to vector<1x64xf32>
    %cst_222 = arith.constant -1.000000e+05 : f32
    %958 = vector.shape_cast %957 : vector<1x64xf32> to vector<1x64xf32>
    %959 = vector.broadcast %958 : vector<1x64xf32> to vector<16x64xf32>
    %960 = vector.broadcast %cst_222 : f32 to vector<16x64xf32>
    %961 = arith.select %956, %959, %960 : vector<16x64xi1>, vector<16x64xf32>
    %962 = arith.maximumf %951, %961 : vector<16x64xf32>
    %c10_i32_223 = arith.constant 10 : i32
    %963 = vector.broadcast %c10_i32_223 : i32 to vector<16x64xi32>
    %964 = arith.cmpi sle, %844, %963 : vector<16x64xi32>
    %c10_i32_224 = arith.constant 10 : i32
    %965 = vector.broadcast %c10_i32_224 : i32 to vector<16x64xi32>
    %966 = arith.cmpi sge, %851, %965 : vector<16x64xi32>
    %967 = arith.andi %964, %966 : vector<16x64xi1>
    %968 = vector.extract_strided_slice %831 {offsets = [10, 0], sizes = [1, 64], strides = [1, 1]} : vector<32x64xf32> to vector<1x64xf32>
    %cst_225 = arith.constant -1.000000e+05 : f32
    %969 = vector.shape_cast %968 : vector<1x64xf32> to vector<1x64xf32>
    %970 = vector.broadcast %969 : vector<1x64xf32> to vector<16x64xf32>
    %971 = vector.broadcast %cst_225 : f32 to vector<16x64xf32>
    %972 = arith.select %967, %970, %971 : vector<16x64xi1>, vector<16x64xf32>
    %973 = arith.maximumf %962, %972 : vector<16x64xf32>
    %c11_i32_226 = arith.constant 11 : i32
    %974 = vector.broadcast %c11_i32_226 : i32 to vector<16x64xi32>
    %975 = arith.cmpi sle, %844, %974 : vector<16x64xi32>
    %c11_i32_227 = arith.constant 11 : i32
    %976 = vector.broadcast %c11_i32_227 : i32 to vector<16x64xi32>
    %977 = arith.cmpi sge, %851, %976 : vector<16x64xi32>
    %978 = arith.andi %975, %977 : vector<16x64xi1>
    %979 = vector.extract_strided_slice %831 {offsets = [11, 0], sizes = [1, 64], strides = [1, 1]} : vector<32x64xf32> to vector<1x64xf32>
    %cst_228 = arith.constant -1.000000e+05 : f32
    %980 = vector.shape_cast %979 : vector<1x64xf32> to vector<1x64xf32>
    %981 = vector.broadcast %980 : vector<1x64xf32> to vector<16x64xf32>
    %982 = vector.broadcast %cst_228 : f32 to vector<16x64xf32>
    %983 = arith.select %978, %981, %982 : vector<16x64xi1>, vector<16x64xf32>
    %984 = arith.maximumf %973, %983 : vector<16x64xf32>
    %c12_i32_229 = arith.constant 12 : i32
    %985 = vector.broadcast %c12_i32_229 : i32 to vector<16x64xi32>
    %986 = arith.cmpi sle, %844, %985 : vector<16x64xi32>
    %c12_i32_230 = arith.constant 12 : i32
    %987 = vector.broadcast %c12_i32_230 : i32 to vector<16x64xi32>
    %988 = arith.cmpi sge, %851, %987 : vector<16x64xi32>
    %989 = arith.andi %986, %988 : vector<16x64xi1>
    %990 = vector.extract_strided_slice %831 {offsets = [12, 0], sizes = [1, 64], strides = [1, 1]} : vector<32x64xf32> to vector<1x64xf32>
    %cst_231 = arith.constant -1.000000e+05 : f32
    %991 = vector.shape_cast %990 : vector<1x64xf32> to vector<1x64xf32>
    %992 = vector.broadcast %991 : vector<1x64xf32> to vector<16x64xf32>
    %993 = vector.broadcast %cst_231 : f32 to vector<16x64xf32>
    %994 = arith.select %989, %992, %993 : vector<16x64xi1>, vector<16x64xf32>
    %995 = arith.maximumf %984, %994 : vector<16x64xf32>
    %c13_i32_232 = arith.constant 13 : i32
    %996 = vector.broadcast %c13_i32_232 : i32 to vector<16x64xi32>
    %997 = arith.cmpi sle, %844, %996 : vector<16x64xi32>
    %c13_i32_233 = arith.constant 13 : i32
    %998 = vector.broadcast %c13_i32_233 : i32 to vector<16x64xi32>
    %999 = arith.cmpi sge, %851, %998 : vector<16x64xi32>
    %1000 = arith.andi %997, %999 : vector<16x64xi1>
    %1001 = vector.extract_strided_slice %831 {offsets = [13, 0], sizes = [1, 64], strides = [1, 1]} : vector<32x64xf32> to vector<1x64xf32>
    %cst_234 = arith.constant -1.000000e+05 : f32
    %1002 = vector.shape_cast %1001 : vector<1x64xf32> to vector<1x64xf32>
    %1003 = vector.broadcast %1002 : vector<1x64xf32> to vector<16x64xf32>
    %1004 = vector.broadcast %cst_234 : f32 to vector<16x64xf32>
    %1005 = arith.select %1000, %1003, %1004 : vector<16x64xi1>, vector<16x64xf32>
    %1006 = arith.maximumf %995, %1005 : vector<16x64xf32>
    %c14_i32_235 = arith.constant 14 : i32
    %1007 = vector.broadcast %c14_i32_235 : i32 to vector<16x64xi32>
    %1008 = arith.cmpi sle, %844, %1007 : vector<16x64xi32>
    %c14_i32_236 = arith.constant 14 : i32
    %1009 = vector.broadcast %c14_i32_236 : i32 to vector<16x64xi32>
    %1010 = arith.cmpi sge, %851, %1009 : vector<16x64xi32>
    %1011 = arith.andi %1008, %1010 : vector<16x64xi1>
    %1012 = vector.extract_strided_slice %831 {offsets = [14, 0], sizes = [1, 64], strides = [1, 1]} : vector<32x64xf32> to vector<1x64xf32>
    %cst_237 = arith.constant -1.000000e+05 : f32
    %1013 = vector.shape_cast %1012 : vector<1x64xf32> to vector<1x64xf32>
    %1014 = vector.broadcast %1013 : vector<1x64xf32> to vector<16x64xf32>
    %1015 = vector.broadcast %cst_237 : f32 to vector<16x64xf32>
    %1016 = arith.select %1011, %1014, %1015 : vector<16x64xi1>, vector<16x64xf32>
    %1017 = arith.maximumf %1006, %1016 : vector<16x64xf32>
    %c15_i32_238 = arith.constant 15 : i32
    %1018 = vector.broadcast %c15_i32_238 : i32 to vector<16x64xi32>
    %1019 = arith.cmpi sle, %844, %1018 : vector<16x64xi32>
    %c15_i32_239 = arith.constant 15 : i32
    %1020 = vector.broadcast %c15_i32_239 : i32 to vector<16x64xi32>
    %1021 = arith.cmpi sge, %851, %1020 : vector<16x64xi32>
    %1022 = arith.andi %1019, %1021 : vector<16x64xi1>
    %1023 = vector.extract_strided_slice %831 {offsets = [15, 0], sizes = [1, 64], strides = [1, 1]} : vector<32x64xf32> to vector<1x64xf32>
    %cst_240 = arith.constant -1.000000e+05 : f32
    %1024 = vector.shape_cast %1023 : vector<1x64xf32> to vector<1x64xf32>
    %1025 = vector.broadcast %1024 : vector<1x64xf32> to vector<16x64xf32>
    %1026 = vector.broadcast %cst_240 : f32 to vector<16x64xf32>
    %1027 = arith.select %1022, %1025, %1026 : vector<16x64xi1>, vector<16x64xf32>
    %1028 = arith.maximumf %1017, %1027 : vector<16x64xf32>
    %c16_i32_241 = arith.constant 16 : i32
    %1029 = vector.broadcast %c16_i32_241 : i32 to vector<16x64xi32>
    %1030 = arith.cmpi sle, %844, %1029 : vector<16x64xi32>
    %c16_i32_242 = arith.constant 16 : i32
    %1031 = vector.broadcast %c16_i32_242 : i32 to vector<16x64xi32>
    %1032 = arith.cmpi sge, %851, %1031 : vector<16x64xi32>
    %1033 = arith.andi %1030, %1032 : vector<16x64xi1>
    %1034 = vector.extract_strided_slice %831 {offsets = [16, 0], sizes = [1, 64], strides = [1, 1]} : vector<32x64xf32> to vector<1x64xf32>
    %cst_243 = arith.constant -1.000000e+05 : f32
    %1035 = vector.shape_cast %1034 : vector<1x64xf32> to vector<1x64xf32>
    %1036 = vector.broadcast %1035 : vector<1x64xf32> to vector<16x64xf32>
    %1037 = vector.broadcast %cst_243 : f32 to vector<16x64xf32>
    %1038 = arith.select %1033, %1036, %1037 : vector<16x64xi1>, vector<16x64xf32>
    %1039 = arith.maximumf %1028, %1038 : vector<16x64xf32>
    %c17_i32_244 = arith.constant 17 : i32
    %1040 = vector.broadcast %c17_i32_244 : i32 to vector<16x64xi32>
    %1041 = arith.cmpi sle, %844, %1040 : vector<16x64xi32>
    %c17_i32_245 = arith.constant 17 : i32
    %1042 = vector.broadcast %c17_i32_245 : i32 to vector<16x64xi32>
    %1043 = arith.cmpi sge, %851, %1042 : vector<16x64xi32>
    %1044 = arith.andi %1041, %1043 : vector<16x64xi1>
    %1045 = vector.extract_strided_slice %831 {offsets = [17, 0], sizes = [1, 64], strides = [1, 1]} : vector<32x64xf32> to vector<1x64xf32>
    %cst_246 = arith.constant -1.000000e+05 : f32
    %1046 = vector.shape_cast %1045 : vector<1x64xf32> to vector<1x64xf32>
    %1047 = vector.broadcast %1046 : vector<1x64xf32> to vector<16x64xf32>
    %1048 = vector.broadcast %cst_246 : f32 to vector<16x64xf32>
    %1049 = arith.select %1044, %1047, %1048 : vector<16x64xi1>, vector<16x64xf32>
    %1050 = arith.maximumf %1039, %1049 : vector<16x64xf32>
    %c18_i32_247 = arith.constant 18 : i32
    %1051 = vector.broadcast %c18_i32_247 : i32 to vector<16x64xi32>
    %1052 = arith.cmpi sle, %844, %1051 : vector<16x64xi32>
    %c18_i32_248 = arith.constant 18 : i32
    %1053 = vector.broadcast %c18_i32_248 : i32 to vector<16x64xi32>
    %1054 = arith.cmpi sge, %851, %1053 : vector<16x64xi32>
    %1055 = arith.andi %1052, %1054 : vector<16x64xi1>
    %1056 = vector.extract_strided_slice %831 {offsets = [18, 0], sizes = [1, 64], strides = [1, 1]} : vector<32x64xf32> to vector<1x64xf32>
    %cst_249 = arith.constant -1.000000e+05 : f32
    %1057 = vector.shape_cast %1056 : vector<1x64xf32> to vector<1x64xf32>
    %1058 = vector.broadcast %1057 : vector<1x64xf32> to vector<16x64xf32>
    %1059 = vector.broadcast %cst_249 : f32 to vector<16x64xf32>
    %1060 = arith.select %1055, %1058, %1059 : vector<16x64xi1>, vector<16x64xf32>
    %1061 = arith.maximumf %1050, %1060 : vector<16x64xf32>
    %c19_i32_250 = arith.constant 19 : i32
    %1062 = vector.broadcast %c19_i32_250 : i32 to vector<16x64xi32>
    %1063 = arith.cmpi sle, %844, %1062 : vector<16x64xi32>
    %c19_i32_251 = arith.constant 19 : i32
    %1064 = vector.broadcast %c19_i32_251 : i32 to vector<16x64xi32>
    %1065 = arith.cmpi sge, %851, %1064 : vector<16x64xi32>
    %1066 = arith.andi %1063, %1065 : vector<16x64xi1>
    %1067 = vector.extract_strided_slice %831 {offsets = [19, 0], sizes = [1, 64], strides = [1, 1]} : vector<32x64xf32> to vector<1x64xf32>
    %cst_252 = arith.constant -1.000000e+05 : f32
    %1068 = vector.shape_cast %1067 : vector<1x64xf32> to vector<1x64xf32>
    %1069 = vector.broadcast %1068 : vector<1x64xf32> to vector<16x64xf32>
    %1070 = vector.broadcast %cst_252 : f32 to vector<16x64xf32>
    %1071 = arith.select %1066, %1069, %1070 : vector<16x64xi1>, vector<16x64xf32>
    %1072 = arith.maximumf %1061, %1071 : vector<16x64xf32>
    %c20_i32_253 = arith.constant 20 : i32
    %1073 = vector.broadcast %c20_i32_253 : i32 to vector<16x64xi32>
    %1074 = arith.cmpi sle, %844, %1073 : vector<16x64xi32>
    %c20_i32_254 = arith.constant 20 : i32
    %1075 = vector.broadcast %c20_i32_254 : i32 to vector<16x64xi32>
    %1076 = arith.cmpi sge, %851, %1075 : vector<16x64xi32>
    %1077 = arith.andi %1074, %1076 : vector<16x64xi1>
    %1078 = vector.extract_strided_slice %831 {offsets = [20, 0], sizes = [1, 64], strides = [1, 1]} : vector<32x64xf32> to vector<1x64xf32>
    %cst_255 = arith.constant -1.000000e+05 : f32
    %1079 = vector.shape_cast %1078 : vector<1x64xf32> to vector<1x64xf32>
    %1080 = vector.broadcast %1079 : vector<1x64xf32> to vector<16x64xf32>
    %1081 = vector.broadcast %cst_255 : f32 to vector<16x64xf32>
    %1082 = arith.select %1077, %1080, %1081 : vector<16x64xi1>, vector<16x64xf32>
    %1083 = arith.maximumf %1072, %1082 : vector<16x64xf32>
    %c21_i32_256 = arith.constant 21 : i32
    %1084 = vector.broadcast %c21_i32_256 : i32 to vector<16x64xi32>
    %1085 = arith.cmpi sle, %844, %1084 : vector<16x64xi32>
    %c21_i32_257 = arith.constant 21 : i32
    %1086 = vector.broadcast %c21_i32_257 : i32 to vector<16x64xi32>
    %1087 = arith.cmpi sge, %851, %1086 : vector<16x64xi32>
    %1088 = arith.andi %1085, %1087 : vector<16x64xi1>
    %1089 = vector.extract_strided_slice %831 {offsets = [21, 0], sizes = [1, 64], strides = [1, 1]} : vector<32x64xf32> to vector<1x64xf32>
    %cst_258 = arith.constant -1.000000e+05 : f32
    %1090 = vector.shape_cast %1089 : vector<1x64xf32> to vector<1x64xf32>
    %1091 = vector.broadcast %1090 : vector<1x64xf32> to vector<16x64xf32>
    %1092 = vector.broadcast %cst_258 : f32 to vector<16x64xf32>
    %1093 = arith.select %1088, %1091, %1092 : vector<16x64xi1>, vector<16x64xf32>
    %1094 = arith.maximumf %1083, %1093 : vector<16x64xf32>
    %c22_i32_259 = arith.constant 22 : i32
    %1095 = vector.broadcast %c22_i32_259 : i32 to vector<16x64xi32>
    %1096 = arith.cmpi sle, %844, %1095 : vector<16x64xi32>
    %c22_i32_260 = arith.constant 22 : i32
    %1097 = vector.broadcast %c22_i32_260 : i32 to vector<16x64xi32>
    %1098 = arith.cmpi sge, %851, %1097 : vector<16x64xi32>
    %1099 = arith.andi %1096, %1098 : vector<16x64xi1>
    %1100 = vector.extract_strided_slice %831 {offsets = [22, 0], sizes = [1, 64], strides = [1, 1]} : vector<32x64xf32> to vector<1x64xf32>
    %cst_261 = arith.constant -1.000000e+05 : f32
    %1101 = vector.shape_cast %1100 : vector<1x64xf32> to vector<1x64xf32>
    %1102 = vector.broadcast %1101 : vector<1x64xf32> to vector<16x64xf32>
    %1103 = vector.broadcast %cst_261 : f32 to vector<16x64xf32>
    %1104 = arith.select %1099, %1102, %1103 : vector<16x64xi1>, vector<16x64xf32>
    %1105 = arith.maximumf %1094, %1104 : vector<16x64xf32>
    %c23_i32_262 = arith.constant 23 : i32
    %1106 = vector.broadcast %c23_i32_262 : i32 to vector<16x64xi32>
    %1107 = arith.cmpi sle, %844, %1106 : vector<16x64xi32>
    %c23_i32_263 = arith.constant 23 : i32
    %1108 = vector.broadcast %c23_i32_263 : i32 to vector<16x64xi32>
    %1109 = arith.cmpi sge, %851, %1108 : vector<16x64xi32>
    %1110 = arith.andi %1107, %1109 : vector<16x64xi1>
    %1111 = vector.extract_strided_slice %831 {offsets = [23, 0], sizes = [1, 64], strides = [1, 1]} : vector<32x64xf32> to vector<1x64xf32>
    %cst_264 = arith.constant -1.000000e+05 : f32
    %1112 = vector.shape_cast %1111 : vector<1x64xf32> to vector<1x64xf32>
    %1113 = vector.broadcast %1112 : vector<1x64xf32> to vector<16x64xf32>
    %1114 = vector.broadcast %cst_264 : f32 to vector<16x64xf32>
    %1115 = arith.select %1110, %1113, %1114 : vector<16x64xi1>, vector<16x64xf32>
    %1116 = arith.maximumf %1105, %1115 : vector<16x64xf32>
    %c24_i32_265 = arith.constant 24 : i32
    %1117 = vector.broadcast %c24_i32_265 : i32 to vector<16x64xi32>
    %1118 = arith.cmpi sle, %844, %1117 : vector<16x64xi32>
    %c24_i32_266 = arith.constant 24 : i32
    %1119 = vector.broadcast %c24_i32_266 : i32 to vector<16x64xi32>
    %1120 = arith.cmpi sge, %851, %1119 : vector<16x64xi32>
    %1121 = arith.andi %1118, %1120 : vector<16x64xi1>
    %1122 = vector.extract_strided_slice %831 {offsets = [24, 0], sizes = [1, 64], strides = [1, 1]} : vector<32x64xf32> to vector<1x64xf32>
    %cst_267 = arith.constant -1.000000e+05 : f32
    %1123 = vector.shape_cast %1122 : vector<1x64xf32> to vector<1x64xf32>
    %1124 = vector.broadcast %1123 : vector<1x64xf32> to vector<16x64xf32>
    %1125 = vector.broadcast %cst_267 : f32 to vector<16x64xf32>
    %1126 = arith.select %1121, %1124, %1125 : vector<16x64xi1>, vector<16x64xf32>
    %1127 = arith.maximumf %1116, %1126 : vector<16x64xf32>
    %c25_i32_268 = arith.constant 25 : i32
    %1128 = vector.broadcast %c25_i32_268 : i32 to vector<16x64xi32>
    %1129 = arith.cmpi sle, %844, %1128 : vector<16x64xi32>
    %c25_i32_269 = arith.constant 25 : i32
    %1130 = vector.broadcast %c25_i32_269 : i32 to vector<16x64xi32>
    %1131 = arith.cmpi sge, %851, %1130 : vector<16x64xi32>
    %1132 = arith.andi %1129, %1131 : vector<16x64xi1>
    %1133 = vector.extract_strided_slice %831 {offsets = [25, 0], sizes = [1, 64], strides = [1, 1]} : vector<32x64xf32> to vector<1x64xf32>
    %cst_270 = arith.constant -1.000000e+05 : f32
    %1134 = vector.shape_cast %1133 : vector<1x64xf32> to vector<1x64xf32>
    %1135 = vector.broadcast %1134 : vector<1x64xf32> to vector<16x64xf32>
    %1136 = vector.broadcast %cst_270 : f32 to vector<16x64xf32>
    %1137 = arith.select %1132, %1135, %1136 : vector<16x64xi1>, vector<16x64xf32>
    %1138 = arith.maximumf %1127, %1137 : vector<16x64xf32>
    %c26_i32_271 = arith.constant 26 : i32
    %1139 = vector.broadcast %c26_i32_271 : i32 to vector<16x64xi32>
    %1140 = arith.cmpi sle, %844, %1139 : vector<16x64xi32>
    %c26_i32_272 = arith.constant 26 : i32
    %1141 = vector.broadcast %c26_i32_272 : i32 to vector<16x64xi32>
    %1142 = arith.cmpi sge, %851, %1141 : vector<16x64xi32>
    %1143 = arith.andi %1140, %1142 : vector<16x64xi1>
    %1144 = vector.extract_strided_slice %831 {offsets = [26, 0], sizes = [1, 64], strides = [1, 1]} : vector<32x64xf32> to vector<1x64xf32>
    %cst_273 = arith.constant -1.000000e+05 : f32
    %1145 = vector.shape_cast %1144 : vector<1x64xf32> to vector<1x64xf32>
    %1146 = vector.broadcast %1145 : vector<1x64xf32> to vector<16x64xf32>
    %1147 = vector.broadcast %cst_273 : f32 to vector<16x64xf32>
    %1148 = arith.select %1143, %1146, %1147 : vector<16x64xi1>, vector<16x64xf32>
    %1149 = arith.maximumf %1138, %1148 : vector<16x64xf32>
    %c27_i32_274 = arith.constant 27 : i32
    %1150 = vector.broadcast %c27_i32_274 : i32 to vector<16x64xi32>
    %1151 = arith.cmpi sle, %844, %1150 : vector<16x64xi32>
    %c27_i32_275 = arith.constant 27 : i32
    %1152 = vector.broadcast %c27_i32_275 : i32 to vector<16x64xi32>
    %1153 = arith.cmpi sge, %851, %1152 : vector<16x64xi32>
    %1154 = arith.andi %1151, %1153 : vector<16x64xi1>
    %1155 = vector.extract_strided_slice %831 {offsets = [27, 0], sizes = [1, 64], strides = [1, 1]} : vector<32x64xf32> to vector<1x64xf32>
    %cst_276 = arith.constant -1.000000e+05 : f32
    %1156 = vector.shape_cast %1155 : vector<1x64xf32> to vector<1x64xf32>
    %1157 = vector.broadcast %1156 : vector<1x64xf32> to vector<16x64xf32>
    %1158 = vector.broadcast %cst_276 : f32 to vector<16x64xf32>
    %1159 = arith.select %1154, %1157, %1158 : vector<16x64xi1>, vector<16x64xf32>
    %1160 = arith.maximumf %1149, %1159 : vector<16x64xf32>
    %c28_i32_277 = arith.constant 28 : i32
    %1161 = vector.broadcast %c28_i32_277 : i32 to vector<16x64xi32>
    %1162 = arith.cmpi sle, %844, %1161 : vector<16x64xi32>
    %c28_i32_278 = arith.constant 28 : i32
    %1163 = vector.broadcast %c28_i32_278 : i32 to vector<16x64xi32>
    %1164 = arith.cmpi sge, %851, %1163 : vector<16x64xi32>
    %1165 = arith.andi %1162, %1164 : vector<16x64xi1>
    %1166 = vector.extract_strided_slice %831 {offsets = [28, 0], sizes = [1, 64], strides = [1, 1]} : vector<32x64xf32> to vector<1x64xf32>
    %cst_279 = arith.constant -1.000000e+05 : f32
    %1167 = vector.shape_cast %1166 : vector<1x64xf32> to vector<1x64xf32>
    %1168 = vector.broadcast %1167 : vector<1x64xf32> to vector<16x64xf32>
    %1169 = vector.broadcast %cst_279 : f32 to vector<16x64xf32>
    %1170 = arith.select %1165, %1168, %1169 : vector<16x64xi1>, vector<16x64xf32>
    %1171 = arith.maximumf %1160, %1170 : vector<16x64xf32>
    %c29_i32_280 = arith.constant 29 : i32
    %1172 = vector.broadcast %c29_i32_280 : i32 to vector<16x64xi32>
    %1173 = arith.cmpi sle, %844, %1172 : vector<16x64xi32>
    %c29_i32_281 = arith.constant 29 : i32
    %1174 = vector.broadcast %c29_i32_281 : i32 to vector<16x64xi32>
    %1175 = arith.cmpi sge, %851, %1174 : vector<16x64xi32>
    %1176 = arith.andi %1173, %1175 : vector<16x64xi1>
    %1177 = vector.extract_strided_slice %831 {offsets = [29, 0], sizes = [1, 64], strides = [1, 1]} : vector<32x64xf32> to vector<1x64xf32>
    %cst_282 = arith.constant -1.000000e+05 : f32
    %1178 = vector.shape_cast %1177 : vector<1x64xf32> to vector<1x64xf32>
    %1179 = vector.broadcast %1178 : vector<1x64xf32> to vector<16x64xf32>
    %1180 = vector.broadcast %cst_282 : f32 to vector<16x64xf32>
    %1181 = arith.select %1176, %1179, %1180 : vector<16x64xi1>, vector<16x64xf32>
    %1182 = arith.maximumf %1171, %1181 : vector<16x64xf32>
    %c30_i32_283 = arith.constant 30 : i32
    %1183 = vector.broadcast %c30_i32_283 : i32 to vector<16x64xi32>
    %1184 = arith.cmpi sle, %844, %1183 : vector<16x64xi32>
    %c30_i32_284 = arith.constant 30 : i32
    %1185 = vector.broadcast %c30_i32_284 : i32 to vector<16x64xi32>
    %1186 = arith.cmpi sge, %851, %1185 : vector<16x64xi32>
    %1187 = arith.andi %1184, %1186 : vector<16x64xi1>
    %1188 = vector.extract_strided_slice %831 {offsets = [30, 0], sizes = [1, 64], strides = [1, 1]} : vector<32x64xf32> to vector<1x64xf32>
    %cst_285 = arith.constant -1.000000e+05 : f32
    %1189 = vector.shape_cast %1188 : vector<1x64xf32> to vector<1x64xf32>
    %1190 = vector.broadcast %1189 : vector<1x64xf32> to vector<16x64xf32>
    %1191 = vector.broadcast %cst_285 : f32 to vector<16x64xf32>
    %1192 = arith.select %1187, %1190, %1191 : vector<16x64xi1>, vector<16x64xf32>
    %1193 = arith.maximumf %1182, %1192 : vector<16x64xf32>
    %c31_i32_286 = arith.constant 31 : i32
    %1194 = vector.broadcast %c31_i32_286 : i32 to vector<16x64xi32>
    %1195 = arith.cmpi sle, %844, %1194 : vector<16x64xi32>
    %c31_i32_287 = arith.constant 31 : i32
    %1196 = vector.broadcast %c31_i32_287 : i32 to vector<16x64xi32>
    %1197 = arith.cmpi sge, %851, %1196 : vector<16x64xi32>
    %1198 = arith.andi %1195, %1197 : vector<16x64xi1>
    %1199 = vector.extract_strided_slice %831 {offsets = [31, 0], sizes = [1, 64], strides = [1, 1]} : vector<32x64xf32> to vector<1x64xf32>
    %cst_288 = arith.constant -1.000000e+05 : f32
    %1200 = vector.shape_cast %1199 : vector<1x64xf32> to vector<1x64xf32>
    %1201 = vector.broadcast %1200 : vector<1x64xf32> to vector<16x64xf32>
    %1202 = vector.broadcast %cst_288 : f32 to vector<16x64xf32>
    %1203 = arith.select %1198, %1201, %1202 : vector<16x64xi1>, vector<16x64xf32>
    %1204 = arith.maximumf %1193, %1203 : vector<16x64xf32>
    %1205 = tpu.concatenate %830, %1204 in 0 : vector<16x64xf32>, vector<16x64xf32> -> vector<32x64xf32>
    %1206 = arith.truncf %1205 : vector<32x64xf32> to vector<32x64xbf16>
    %c0_289 = arith.constant 0 : index
    %c0_290 = arith.constant 0 : index
    %1207 = vector.load %arg9[%c0_289, %c0_290] : memref<64x64xbf16, #tpu.memory_space<vmem>>, vector<64x64xbf16>
    %cst_291 = arith.constant dense<0.000000e+00> : vector<32x64xf32>
    %1208 = tpu.matmul %1206, %1207, %cst_291 {dimension_numbers = #tpu.dot_dimension_numbers<[1], [0], [0], [1], [0, 0, 1, 1], [], []>} : vector<32x64xbf16>, vector<64x64xbf16>, vector<32x64xf32> -> vector<32x64xf32>
    %c0_292 = arith.constant 0 : index
    %c0_293 = arith.constant 0 : index
    %1209 = vector.load %arg10[%c0_292, %c0_293] : memref<3x64xf32, #tpu.memory_space<vmem>>, vector<3x64xf32>
    %c0_294 = arith.constant 0 : index
    %c0_295 = arith.constant 0 : index
    %1210 = vector.load %arg11[%c0_294, %c0_295] : memref<64x64xf32, #tpu.memory_space<vmem>>, vector<64x64xf32>
    %1211 = vector.extract_strided_slice %1209 {offsets = [0, 0], sizes = [1, 64], strides = [1, 1]} : vector<3x64xf32> to vector<1x64xf32>
    %1212 = vector.extract_strided_slice %1209 {offsets = [1, 0], sizes = [1, 64], strides = [1, 1]} : vector<3x64xf32> to vector<1x64xf32>
    %1213 = vector.extract_strided_slice %1209 {offsets = [2, 0], sizes = [1, 64], strides = [1, 1]} : vector<3x64xf32> to vector<1x64xf32>
    %1214 = vector.broadcast %1211 : vector<1x64xf32> to vector<32x64xf32>
    %1215 = arith.addf %1208, %1214 : vector<32x64xf32>
    %1216 = vector.extract_strided_slice %1215 {offsets = [0, 0], sizes = [16, 64], strides = [1, 1]} : vector<32x64xf32> to vector<16x64xf32>
    %cst_296 = arith.constant dense<0.000000e+00> : vector<64xf32>
    %1217 = vector.multi_reduction <add>, %1216, %cst_296 [0] : vector<16x64xf32> to vector<64xf32>
    %1218 = vector.shape_cast %1217 : vector<64xf32> to vector<1x64xf32>
    %cst_297 = arith.constant dense<0.000000e+00> : vector<1x64xf32>
    %1219 = tpu.matmul %1218, %1210, %cst_297 {dimension_numbers = #tpu.dot_dimension_numbers<[1], [0], [0], [1], [0, 0, 1, 1], [], []>} : vector<1x64xf32>, vector<64x64xf32>, vector<1x64xf32> -> vector<1x64xf32>
    %1220 = vector.broadcast %1219 : vector<1x64xf32> to vector<16x64xf32>
    %1221 = arith.subf %1216, %1220 : vector<16x64xf32>
    %1222 = arith.mulf %1221, %1221 : vector<16x64xf32>
    %cst_298 = arith.constant dense<0.000000e+00> : vector<64xf32>
    %1223 = vector.multi_reduction <add>, %1222, %cst_298 [0] : vector<16x64xf32> to vector<64xf32>
    %1224 = vector.shape_cast %1223 : vector<64xf32> to vector<1x64xf32>
    %cst_299 = arith.constant dense<0.000000e+00> : vector<1x64xf32>
    %1225 = tpu.matmul %1224, %1210, %cst_299 {dimension_numbers = #tpu.dot_dimension_numbers<[1], [0], [0], [1], [0, 0, 1, 1], [], []>} : vector<1x64xf32>, vector<64x64xf32>, vector<1x64xf32> -> vector<1x64xf32>
    %cst_300 = arith.constant 9.99999974E-6 : f32
    %1226 = vector.broadcast %cst_300 : f32 to vector<1x64xf32>
    %1227 = arith.addf %1225, %1226 : vector<1x64xf32>
    %1228 = math.rsqrt %1227 : vector<1x64xf32>
    %1229 = vector.broadcast %1228 : vector<1x64xf32> to vector<16x64xf32>
    %1230 = arith.mulf %1221, %1229 : vector<16x64xf32>
    %1231 = vector.broadcast %1212 : vector<1x64xf32> to vector<16x64xf32>
    %1232 = arith.mulf %1230, %1231 : vector<16x64xf32>
    %1233 = vector.broadcast %1213 : vector<1x64xf32> to vector<16x64xf32>
    %1234 = arith.addf %1232, %1233 : vector<16x64xf32>
    %cst_301 = arith.constant 0.000000e+00 : f32
    %1235 = vector.broadcast %cst_301 : f32 to vector<16x64xf32>
    %1236 = arith.maximumf %1234, %1235 : vector<16x64xf32>
    %1237 = vector.extract_strided_slice %1215 {offsets = [16, 0], sizes = [16, 64], strides = [1, 1]} : vector<32x64xf32> to vector<16x64xf32>
    %cst_302 = arith.constant dense<0.000000e+00> : vector<64xf32>
    %1238 = vector.multi_reduction <add>, %1237, %cst_302 [0] : vector<16x64xf32> to vector<64xf32>
    %1239 = vector.shape_cast %1238 : vector<64xf32> to vector<1x64xf32>
    %cst_303 = arith.constant dense<0.000000e+00> : vector<1x64xf32>
    %1240 = tpu.matmul %1239, %1210, %cst_303 {dimension_numbers = #tpu.dot_dimension_numbers<[1], [0], [0], [1], [0, 0, 1, 1], [], []>} : vector<1x64xf32>, vector<64x64xf32>, vector<1x64xf32> -> vector<1x64xf32>
    %1241 = vector.broadcast %1240 : vector<1x64xf32> to vector<16x64xf32>
    %1242 = arith.subf %1237, %1241 : vector<16x64xf32>
    %1243 = arith.mulf %1242, %1242 : vector<16x64xf32>
    %cst_304 = arith.constant dense<0.000000e+00> : vector<64xf32>
    %1244 = vector.multi_reduction <add>, %1243, %cst_304 [0] : vector<16x64xf32> to vector<64xf32>
    %1245 = vector.shape_cast %1244 : vector<64xf32> to vector<1x64xf32>
    %cst_305 = arith.constant dense<0.000000e+00> : vector<1x64xf32>
    %1246 = tpu.matmul %1245, %1210, %cst_305 {dimension_numbers = #tpu.dot_dimension_numbers<[1], [0], [0], [1], [0, 0, 1, 1], [], []>} : vector<1x64xf32>, vector<64x64xf32>, vector<1x64xf32> -> vector<1x64xf32>
    %cst_306 = arith.constant 9.99999974E-6 : f32
    %1247 = vector.broadcast %cst_306 : f32 to vector<1x64xf32>
    %1248 = arith.addf %1246, %1247 : vector<1x64xf32>
    %1249 = math.rsqrt %1248 : vector<1x64xf32>
    %1250 = vector.broadcast %1249 : vector<1x64xf32> to vector<16x64xf32>
    %1251 = arith.mulf %1242, %1250 : vector<16x64xf32>
    %1252 = vector.broadcast %1212 : vector<1x64xf32> to vector<16x64xf32>
    %1253 = arith.mulf %1251, %1252 : vector<16x64xf32>
    %1254 = vector.broadcast %1213 : vector<1x64xf32> to vector<16x64xf32>
    %1255 = arith.addf %1253, %1254 : vector<16x64xf32>
    %cst_307 = arith.constant 0.000000e+00 : f32
    %1256 = vector.broadcast %cst_307 : f32 to vector<16x64xf32>
    %1257 = arith.maximumf %1255, %1256 : vector<16x64xf32>
    %1258 = tpu.concatenate %1236, %1257 in 0 : vector<16x64xf32>, vector<16x64xf32> -> vector<32x64xf32>
    %1259 = arith.truncf %1258 : vector<32x64xf32> to vector<32x64xbf16>
    %c0_308 = arith.constant 0 : index
    %c0_309 = arith.constant 0 : index
    %1260 = vector.load %arg12[%c0_308, %c0_309] : memref<64x128xbf16, #tpu.memory_space<vmem>>, vector<64x128xbf16>
    %cst_310 = arith.constant dense<0.000000e+00> : vector<32x128xf32>
    %1261 = tpu.matmul %1259, %1260, %cst_310 {dimension_numbers = #tpu.dot_dimension_numbers<[1], [0], [0], [1], [0, 0, 1, 1], [], []>} : vector<32x64xbf16>, vector<64x128xbf16>, vector<32x128xf32> -> vector<32x128xf32>
    %1262 = arith.truncf %456 : vector<32x128xf32> to vector<32x128xbf16>
    %c0_311 = arith.constant 0 : index
    %c0_312 = arith.constant 0 : index
    %1263 = vector.load %arg13[%c0_311, %c0_312] : memref<128x128xbf16, #tpu.memory_space<vmem>>, vector<128x128xbf16>
    %cst_313 = arith.constant dense<0.000000e+00> : vector<32x128xf32>
    %1264 = tpu.matmul %1262, %1263, %cst_313 {dimension_numbers = #tpu.dot_dimension_numbers<[1], [0], [0], [1], [0, 0, 1, 1], [], []>} : vector<32x128xbf16>, vector<128x128xbf16>, vector<32x128xf32> -> vector<32x128xf32>
    %1265 = arith.addf %1261, %1264 : vector<32x128xf32>
    %1266 = arith.truncf %56 : vector<32x64xf32> to vector<32x64xbf16>
    %c0_314 = arith.constant 0 : index
    %c0_315 = arith.constant 0 : index
    %1267 = vector.load %arg14[%c0_314, %c0_315] : memref<64x128xbf16, #tpu.memory_space<vmem>>, vector<64x128xbf16>
    %cst_316 = arith.constant dense<0.000000e+00> : vector<32x128xf32>
    %1268 = tpu.matmul %1266, %1267, %cst_316 {dimension_numbers = #tpu.dot_dimension_numbers<[1], [0], [0], [1], [0, 0, 1, 1], [], []>} : vector<32x64xbf16>, vector<64x128xbf16>, vector<32x128xf32> -> vector<32x128xf32>
    %1269 = arith.addf %1265, %1268 : vector<32x128xf32>
    %c0_317 = arith.constant 0 : index
    %c0_318 = arith.constant 0 : index
    %1270 = vector.load %arg3[%c0_317, %c0_318] : memref<32x512xbf16, #tpu.memory_space<vmem>>, vector<32x512xbf16>
    %c0_319 = arith.constant 0 : index
    %c0_320 = arith.constant 0 : index
    %1271 = vector.load %arg15[%c0_319, %c0_320] : memref<512x128xbf16, #tpu.memory_space<vmem>>, vector<512x128xbf16>
    %cst_321 = arith.constant dense<0.000000e+00> : vector<32x128xf32>
    %1272 = tpu.matmul %1270, %1271, %cst_321 {dimension_numbers = #tpu.dot_dimension_numbers<[1], [0], [0], [1], [0, 0, 1, 1], [], []>} : vector<32x512xbf16>, vector<512x128xbf16>, vector<32x128xf32> -> vector<32x128xf32>
    %1273 = arith.addf %1269, %1272 : vector<32x128xf32>
    %c0_322 = arith.constant 0 : index
    %c0_323 = arith.constant 0 : index
    %1274 = vector.load %arg16[%c0_322, %c0_323] : memref<3x128xf32, #tpu.memory_space<vmem>>, vector<3x128xf32>
    %c0_324 = arith.constant 0 : index
    %c0_325 = arith.constant 0 : index
    %1275 = vector.load %arg17[%c0_324, %c0_325] : memref<128x128xf32, #tpu.memory_space<vmem>>, vector<128x128xf32>
    %1276 = vector.extract_strided_slice %1274 {offsets = [0, 0], sizes = [1, 128], strides = [1, 1]} : vector<3x128xf32> to vector<1x128xf32>
    %1277 = vector.extract_strided_slice %1274 {offsets = [1, 0], sizes = [1, 128], strides = [1, 1]} : vector<3x128xf32> to vector<1x128xf32>
    %1278 = vector.extract_strided_slice %1274 {offsets = [2, 0], sizes = [1, 128], strides = [1, 1]} : vector<3x128xf32> to vector<1x128xf32>
    %1279 = vector.broadcast %1276 : vector<1x128xf32> to vector<32x128xf32>
    %1280 = arith.addf %1273, %1279 : vector<32x128xf32>
    %1281 = vector.extract_strided_slice %1280 {offsets = [0, 0], sizes = [16, 128], strides = [1, 1]} : vector<32x128xf32> to vector<16x128xf32>
    %cst_326 = arith.constant dense<0.000000e+00> : vector<128xf32>
    %1282 = vector.multi_reduction <add>, %1281, %cst_326 [0] : vector<16x128xf32> to vector<128xf32>
    %1283 = vector.shape_cast %1282 : vector<128xf32> to vector<1x128xf32>
    %cst_327 = arith.constant dense<0.000000e+00> : vector<1x128xf32>
    %1284 = tpu.matmul %1283, %1275, %cst_327 {dimension_numbers = #tpu.dot_dimension_numbers<[1], [0], [0], [1], [0, 0, 1, 1], [], []>} : vector<1x128xf32>, vector<128x128xf32>, vector<1x128xf32> -> vector<1x128xf32>
    %1285 = vector.broadcast %1284 : vector<1x128xf32> to vector<16x128xf32>
    %1286 = arith.subf %1281, %1285 : vector<16x128xf32>
    %1287 = arith.mulf %1286, %1286 : vector<16x128xf32>
    %cst_328 = arith.constant dense<0.000000e+00> : vector<128xf32>
    %1288 = vector.multi_reduction <add>, %1287, %cst_328 [0] : vector<16x128xf32> to vector<128xf32>
    %1289 = vector.shape_cast %1288 : vector<128xf32> to vector<1x128xf32>
    %cst_329 = arith.constant dense<0.000000e+00> : vector<1x128xf32>
    %1290 = tpu.matmul %1289, %1275, %cst_329 {dimension_numbers = #tpu.dot_dimension_numbers<[1], [0], [0], [1], [0, 0, 1, 1], [], []>} : vector<1x128xf32>, vector<128x128xf32>, vector<1x128xf32> -> vector<1x128xf32>
    %cst_330 = arith.constant 9.99999974E-6 : f32
    %1291 = vector.broadcast %cst_330 : f32 to vector<1x128xf32>
    %1292 = arith.addf %1290, %1291 : vector<1x128xf32>
    %1293 = math.rsqrt %1292 : vector<1x128xf32>
    %1294 = vector.broadcast %1293 : vector<1x128xf32> to vector<16x128xf32>
    %1295 = arith.mulf %1286, %1294 : vector<16x128xf32>
    %1296 = vector.broadcast %1277 : vector<1x128xf32> to vector<16x128xf32>
    %1297 = arith.mulf %1295, %1296 : vector<16x128xf32>
    %1298 = vector.broadcast %1278 : vector<1x128xf32> to vector<16x128xf32>
    %1299 = arith.addf %1297, %1298 : vector<16x128xf32>
    %cst_331 = arith.constant 0.000000e+00 : f32
    %1300 = vector.broadcast %cst_331 : f32 to vector<16x128xf32>
    %1301 = arith.maximumf %1299, %1300 : vector<16x128xf32>
    %1302 = vector.extract_strided_slice %1280 {offsets = [16, 0], sizes = [16, 128], strides = [1, 1]} : vector<32x128xf32> to vector<16x128xf32>
    %cst_332 = arith.constant dense<0.000000e+00> : vector<128xf32>
    %1303 = vector.multi_reduction <add>, %1302, %cst_332 [0] : vector<16x128xf32> to vector<128xf32>
    %1304 = vector.shape_cast %1303 : vector<128xf32> to vector<1x128xf32>
    %cst_333 = arith.constant dense<0.000000e+00> : vector<1x128xf32>
    %1305 = tpu.matmul %1304, %1275, %cst_333 {dimension_numbers = #tpu.dot_dimension_numbers<[1], [0], [0], [1], [0, 0, 1, 1], [], []>} : vector<1x128xf32>, vector<128x128xf32>, vector<1x128xf32> -> vector<1x128xf32>
    %1306 = vector.broadcast %1305 : vector<1x128xf32> to vector<16x128xf32>
    %1307 = arith.subf %1302, %1306 : vector<16x128xf32>
    %1308 = arith.mulf %1307, %1307 : vector<16x128xf32>
    %cst_334 = arith.constant dense<0.000000e+00> : vector<128xf32>
    %1309 = vector.multi_reduction <add>, %1308, %cst_334 [0] : vector<16x128xf32> to vector<128xf32>
    %1310 = vector.shape_cast %1309 : vector<128xf32> to vector<1x128xf32>
    %cst_335 = arith.constant dense<0.000000e+00> : vector<1x128xf32>
    %1311 = tpu.matmul %1310, %1275, %cst_335 {dimension_numbers = #tpu.dot_dimension_numbers<[1], [0], [0], [1], [0, 0, 1, 1], [], []>} : vector<1x128xf32>, vector<128x128xf32>, vector<1x128xf32> -> vector<1x128xf32>
    %cst_336 = arith.constant 9.99999974E-6 : f32
    %1312 = vector.broadcast %cst_336 : f32 to vector<1x128xf32>
    %1313 = arith.addf %1311, %1312 : vector<1x128xf32>
    %1314 = math.rsqrt %1313 : vector<1x128xf32>
    %1315 = vector.broadcast %1314 : vector<1x128xf32> to vector<16x128xf32>
    %1316 = arith.mulf %1307, %1315 : vector<16x128xf32>
    %1317 = vector.broadcast %1277 : vector<1x128xf32> to vector<16x128xf32>
    %1318 = arith.mulf %1316, %1317 : vector<16x128xf32>
    %1319 = vector.broadcast %1278 : vector<1x128xf32> to vector<16x128xf32>
    %1320 = arith.addf %1318, %1319 : vector<16x128xf32>
    %cst_337 = arith.constant 0.000000e+00 : f32
    %1321 = vector.broadcast %cst_337 : f32 to vector<16x128xf32>
    %1322 = arith.maximumf %1320, %1321 : vector<16x128xf32>
    %1323 = tpu.concatenate %1301, %1322 in 0 : vector<16x128xf32>, vector<16x128xf32> -> vector<32x128xf32>
    %c0_338 = arith.constant 0 : index
    %c0_339 = arith.constant 0 : index
    %1324 = vector.load %arg18[%c0_338, %c0_339] : memref<32x128xf32, #tpu.memory_space<vmem>>, vector<32x128xf32>
    tpu.vector_store %arg18[%c0_338, %c0_339], %1323 {strides = array<i32>} : memref<32x128xf32, #tpu.memory_space<vmem>>, vector<32x128xf32>,
    return
  }
  func.func @transform_0(%arg0: i32) -> (i32, i32) {
    %c0_i32 = arith.constant 0 : i32
    %c0_i32_0 = arith.constant 0 : i32
    return %arg0, %c0_i32 : i32, i32
  }
  func.func @transform_1(%arg0: i32) -> (i32, i32) {
    %c0_i32 = arith.constant 0 : i32
    %c0_i32_0 = arith.constant 0 : i32
    return %arg0, %c0_i32 : i32, i32
  }
  func.func @transform_2(%arg0: i32) -> (i32, i32) {
    %c0_i32 = arith.constant 0 : i32
    %c0_i32_0 = arith.constant 0 : i32
    return %arg0, %c0_i32 : i32, i32
  }
  func.func @transform_3(%arg0: i32) -> (i32, i32) {
    %c0_i32 = arith.constant 0 : i32
    %c0_i32_0 = arith.constant 0 : i32
    return %arg0, %c0_i32 : i32, i32
  }
  func.func @transform_4(%arg0: i32) -> (i32, i32) {
    %c0_i32 = arith.constant 0 : i32
    %c0_i32_0 = arith.constant 0 : i32
    return %arg0, %c0_i32 : i32, i32
  }
  func.func @transform_5(%arg0: i32) -> (i32, i32) {
    %c0_i32 = arith.constant 0 : i32
    %c0_i32_0 = arith.constant 0 : i32
    %c0_i32_1 = arith.constant 0 : i32
    return %c0_i32, %c0_i32_0 : i32, i32
  }
  func.func @transform_6(%arg0: i32) -> (i32, i32) {
    %c0_i32 = arith.constant 0 : i32
    %c0_i32_0 = arith.constant 0 : i32
    %c0_i32_1 = arith.constant 0 : i32
    return %c0_i32, %c0_i32_0 : i32, i32
  }
  func.func @transform_7(%arg0: i32) -> (i32, i32) {
    %c0_i32 = arith.constant 0 : i32
    %c0_i32_0 = arith.constant 0 : i32
    %c0_i32_1 = arith.constant 0 : i32
    return %c0_i32, %c0_i32_0 : i32, i32
  }
  func.func @transform_8(%arg0: i32) -> (i32, i32) {
    %c0_i32 = arith.constant 0 : i32
    %c0_i32_0 = arith.constant 0 : i32
    %c0_i32_1 = arith.constant 0 : i32
    return %c0_i32, %c0_i32_0 : i32, i32
  }
  func.func @transform_9(%arg0: i32) -> (i32, i32) {
    %c0_i32 = arith.constant 0 : i32
    %c0_i32_0 = arith.constant 0 : i32
    %c0_i32_1 = arith.constant 0 : i32
    return %c0_i32, %c0_i32_0 : i32, i32
  }
  func.func @transform_10(%arg0: i32) -> (i32, i32) {
    %c0_i32 = arith.constant 0 : i32
    %c0_i32_0 = arith.constant 0 : i32
    %c0_i32_1 = arith.constant 0 : i32
    return %c0_i32, %c0_i32_0 : i32, i32
  }
  func.func @transform_11(%arg0: i32) -> (i32, i32) {
    %c0_i32 = arith.constant 0 : i32
    %c0_i32_0 = arith.constant 0 : i32
    %c0_i32_1 = arith.constant 0 : i32
    return %c0_i32, %c0_i32_0 : i32, i32
  }
  func.func @transform_12(%arg0: i32) -> (i32, i32) {
    %c0_i32 = arith.constant 0 : i32
    %c0_i32_0 = arith.constant 0 : i32
    %c0_i32_1 = arith.constant 0 : i32
    return %c0_i32, %c0_i32_0 : i32, i32
  }
  func.func @transform_13(%arg0: i32) -> (i32, i32) {
    %c0_i32 = arith.constant 0 : i32
    %c0_i32_0 = arith.constant 0 : i32
    %c0_i32_1 = arith.constant 0 : i32
    return %c0_i32, %c0_i32_0 : i32, i32
  }
  func.func @transform_14(%arg0: i32) -> (i32, i32) {
    %c0_i32 = arith.constant 0 : i32
    %c0_i32_0 = arith.constant 0 : i32
    %c0_i32_1 = arith.constant 0 : i32
    return %c0_i32, %c0_i32_0 : i32, i32
  }
  func.func @transform_15(%arg0: i32) -> (i32, i32) {
    %c0_i32 = arith.constant 0 : i32
    %c0_i32_0 = arith.constant 0 : i32
    %c0_i32_1 = arith.constant 0 : i32
    return %c0_i32, %c0_i32_0 : i32, i32
  }
  func.func @transform_16(%arg0: i32) -> (i32, i32) {
    %c0_i32 = arith.constant 0 : i32
    %c0_i32_0 = arith.constant 0 : i32
    %c0_i32_1 = arith.constant 0 : i32
    return %c0_i32, %c0_i32_0 : i32, i32
  }
  func.func @transform_17(%arg0: i32) -> (i32, i32) {
    %c0_i32 = arith.constant 0 : i32
    %c0_i32_0 = arith.constant 0 : i32
    return %arg0, %c0_i32 : i32, i32
  }
  func.func @transform_18(%arg0: i32) -> (i32, i32) {
    %c0_i32 = arith.constant 0 : i32
    %c0_i32_0 = arith.constant 0 : i32
    return %arg0, %c0_i32 : i32, i32
  }
}

</mosaic_0001>

<llo_original>
// kernel: proposal_branch_loc_forward.1
$region0: #{proposal_branch_loc_forward.1}
  #allocation0 [shape = 'u32[]', space=smem, size = 0x4, offset = 0x4, fixed_abs, tag = 'smem constant byte address 0x4 - core index']
  #allocation1 [shape = 'u32[72,128]{1,0:T(1,128)}', space=vmem, size = 0x9000, scoped, tag = 'internal scratch']
  %s0 = inlined_call_operand.vmem [shape: f32[32,64], index: 0, kind: input, shape index: {}]
  %s1 = inlined_call_operand.vmem [shape: f32[64,64], index: 1, kind: input, shape index: {}]
  %s2 = inlined_call_operand.vmem [shape: bf16[32,512], index: 2, kind: input, shape index: {}]
  %s3 = inlined_call_operand.vmem [shape: f32[32,4], index: 3, kind: input, shape index: {}]
  %s4 = inlined_call_operand.vmem [shape: f32[32,4], index: 4, kind: input, shape index: {}]
  %s5 = inlined_call_operand.vmem [shape: bf16[64,192], index: 5, kind: input, shape index: {}]
  %s6 = inlined_call_operand.vmem [shape: f32[3,192], index: 6, kind: input, shape index: {}]
  %s7 = inlined_call_operand.vmem [shape: f32[192,192], index: 7, kind: input, shape index: {}]
  %s8 = inlined_call_operand.vmem [shape: bf16[64,64], index: 8, kind: input, shape index: {}]
  %s9 = inlined_call_operand.vmem [shape: f32[3,64], index: 9, kind: input, shape index: {}]
  %s10 = inlined_call_operand.vmem [shape: f32[64,64], index: 10, kind: input, shape index: {}]
  %s11 = inlined_call_operand.vmem [shape: bf16[64,128], index: 11, kind: input, shape index: {}]
  %s12 = inlined_call_operand.vmem [shape: bf16[128,128], index: 12, kind: input, shape index: {}]
  %s13 = inlined_call_operand.vmem [shape: bf16[64,128], index: 13, kind: input, shape index: {}]
  %s14 = inlined_call_operand.vmem [shape: bf16[512,128], index: 14, kind: input, shape index: {}]
  %s15 = inlined_call_operand.vmem [shape: f32[3,128], index: 15, kind: input, shape index: {}]
  %s16 = inlined_call_operand.vmem [shape: f32[128,128], index: 16, kind: input, shape index: {}]
  %s17 = inlined_call_operand.vmem [shape: f32[32,128], index: 17, kind: output, shape index: {0}]
  %s18 = inlined_call_operand.hbm [shape: f32[32,128], index: 18, kind: output, shape index: {1}]
  %19 = xla_tuple %s17, %s18
  %s20 = sld [smem:[#allocation0]]
  $region86: #{proposal_branch_loc_forward.1} parent=0
    _
  %s22 = ssub.s32 1, %s20
  %s23 = scalar_select 0, %s22, %s20
  $region1: #{proposal_branch_loc_forward.1} parent=0
    #allocation2 [shape = 'u8[16384]{0}', space=vmem, size = 0x4000, scoped, tag = 'output window, operand 1, single buffered']
    #allocation3 [shape = 's32[1]{0}', space=sflag, size = 0x4, scoped, tag = 'scoped memory for proposal_branch_loc_forward.1']
    %24 = vsyncpa [#allocation3], 0
    // Predicated region
    $region2: #{proposal_branch_loc_forward.1} parent=1 // pred_check
      _
    $region3: #{proposal_branch_loc_forward.1} parent=1 // pred_check_branch
      %26 = sbr.rel (0) target = $region5
    $region4: #{proposal_branch_loc_forward.1} parent=1 // pred_region
      _
    $region5: #{proposal_branch_loc_forward.1} parent=1 // pred_fallthru
      _
    // Predicated region
    $region6: #{proposal_branch_loc_forward.1} parent=1 // pred_check
      _
    $region7: #{proposal_branch_loc_forward.1} parent=1 // pred_check_branch
      %28 = sbr.rel (0) target = $region9
    $region8: #{proposal_branch_loc_forward.1} parent=1 // pred_region
      _
    $region9: #{proposal_branch_loc_forward.1} parent=1 // pred_fallthru
      _
    // Predicated region
    $region10: #{proposal_branch_loc_forward.1} parent=1 // pred_check
      _
    $region11: #{proposal_branch_loc_forward.1} parent=1 // pred_check_branch
      %30 = sbr.rel (0) target = $region13
    $region12: #{proposal_branch_loc_forward.1} parent=1 // pred_region
      _
    $region13: #{proposal_branch_loc_forward.1} parent=1 // pred_fallthru
      _
    // Predicated region
    $region14: #{proposal_branch_loc_forward.1} parent=1 // pred_check
      _
    $region15: #{proposal_branch_loc_forward.1} parent=1 // pred_check_branch
      %32 = sbr.rel (0) target = $region17
    $region16: #{proposal_branch_loc_forward.1} parent=1 // pred_region
      _
    $region17: #{proposal_branch_loc_forward.1} parent=1 // pred_fallthru
      _
    // Predicated region
    $region18: #{proposal_branch_loc_forward.1} parent=1 // pred_check
      _
    $region19: #{proposal_branch_loc_forward.1} parent=1 // pred_check_branch
      %34 = sbr.rel (0) target = $region21
    $region20: #{proposal_branch_loc_forward.1} parent=1 // pred_region
      _
    $region21: #{proposal_branch_loc_forward.1} parent=1 // pred_fallthru
      _
    // Predicated region
    $region22: #{proposal_branch_loc_forward.1} parent=1 // pred_check
      _
    $region23: #{proposal_branch_loc_forward.1} parent=1 // pred_check_branch
      %36 = sbr.rel (0) target = $region25
    $region24: #{proposal_branch_loc_forward.1} parent=1 // pred_region
      _
    $region25: #{proposal_branch_loc_forward.1} parent=1 // pred_fallthru
      _
    // Predicated region
    $region26: #{proposal_branch_loc_forward.1} parent=1 // pred_check
      _
    $region27: #{proposal_branch_loc_forward.1} parent=1 // pred_check_branch
      %38 = sbr.rel (0) target = $region29
    $region28: #{proposal_branch_loc_forward.1} parent=1 // pred_region
      _
    $region29: #{proposal_branch_loc_forward.1} parent=1 // pred_fallthru
      _
    // Predicated region
    $region30: #{proposal_branch_loc_forward.1} parent=1 // pred_check
      _
    $region31: #{proposal_branch_loc_forward.1} parent=1 // pred_check_branch
      %40 = sbr.rel (0) target = $region33
    $region32: #{proposal_branch_loc_forward.1} parent=1 // pred_region
      _
    $region33: #{proposal_branch_loc_forward.1} parent=1 // pred_fallthru
      _
    // Predicated region
    $region34: #{proposal_branch_loc_forward.1} parent=1 // pred_check
      _
    $region35: #{proposal_branch_loc_forward.1} parent=1 // pred_check_branch
      %42 = sbr.rel (0) target = $region37
    $region36: #{proposal_branch_loc_forward.1} parent=1 // pred_region
      _
    $region37: #{proposal_branch_loc_forward.1} parent=1 // pred_fallthru
      _
    // Predicated region
    $region38: #{proposal_branch_loc_forward.1} parent=1 // pred_check
      _
    $region39: #{proposal_branch_loc_forward.1} parent=1 // pred_check_branch
      %44 = sbr.rel (0) target = $region41
    $region40: #{proposal_branch_loc_forward.1} parent=1 // pred_region
      _
    $region41: #{proposal_branch_loc_forward.1} parent=1 // pred_fallthru
      _
    // Predicated region
    $region42: #{proposal_branch_loc_forward.1} parent=1 // pred_check
      _
    $region43: #{proposal_branch_loc_forward.1} parent=1 // pred_check_branch
      %46 = sbr.rel (0) target = $region45
    $region44: #{proposal_branch_loc_forward.1} parent=1 // pred_region
      _
    $region45: #{proposal_branch_loc_forward.1} parent=1 // pred_fallthru
      _
    // Predicated region
    $region46: #{proposal_branch_loc_forward.1} parent=1 // pred_check
      _
    $region47: #{proposal_branch_loc_forward.1} parent=1 // pred_check_branch
      %48 = sbr.rel (0) target = $region49
    $region48: #{proposal_branch_loc_forward.1} parent=1 // pred_region
      _
    $region49: #{proposal_branch_loc_forward.1} parent=1 // pred_fallthru
      _
    // Predicated region
    $region50: #{proposal_branch_loc_forward.1} parent=1 // pred_check
      _
    $region51: #{proposal_branch_loc_forward.1} parent=1 // pred_check_branch
      %50 = sbr.rel (0) target = $region53
    $region52: #{proposal_branch_loc_forward.1} parent=1 // pred_region
      _
    $region53: #{proposal_branch_loc_forward.1} parent=1 // pred_fallthru
      _
    // Predicated region
    $region54: #{proposal_branch_loc_forward.1} parent=1 // pred_check
      _
    $region55: #{proposal_branch_loc_forward.1} parent=1 // pred_check_branch
      %52 = sbr.rel (0) target = $region57
    $region56: #{proposal_branch_loc_forward.1} parent=1 // pred_region
      _
    $region57: #{proposal_branch_loc_forward.1} parent=1 // pred_fallthru
      _
    // Predicated region
    $region58: #{proposal_branch_loc_forward.1} parent=1 // pred_check
      _
    $region59: #{proposal_branch_loc_forward.1} parent=1 // pred_check_branch
      %54 = sbr.rel (0) target = $region61
    $region60: #{proposal_branch_loc_forward.1} parent=1 // pred_region
      _
    $region61: #{proposal_branch_loc_forward.1} parent=1 // pred_fallthru
      _
    // Predicated region
    $region62: #{proposal_branch_loc_forward.1} parent=1 // pred_check
      _
    $region63: #{proposal_branch_loc_forward.1} parent=1 // pred_check_branch
      %56 = sbr.rel (0) target = $region65
    $region64: #{proposal_branch_loc_forward.1} parent=1 // pred_region
      _
    $region65: #{proposal_branch_loc_forward.1} parent=1 // pred_fallthru
      _
    // Predicated region
    $region66: #{proposal_branch_loc_forward.1} parent=1 // pred_check
      _
    $region67: #{proposal_branch_loc_forward.1} parent=1 // pred_check_branch
      %58 = sbr.rel (0) target = $region69
    $region68: #{proposal_branch_loc_forward.1} parent=1 // pred_region
      _
    $region69: #{proposal_branch_loc_forward.1} parent=1 // pred_fallthru
      _
    %v60 = vld [vmem:[%s0] sm:$0xff]
    %v61 = vld [vmem:[%s0 + $0x8] sm:$0xff]
    %v62 = vld [vmem:[%s0 + $0x10] sm:$0xff]
    %v63 = vld [vmem:[%s0 + $0x18] sm:$0xff]
    %v64 = vpack.c.bf16 %v61, %v60
    %v65 = vpack.c.bf16 %v63, %v62
    %v66 = vld [vmem:[%s5] sm:$0xff]
    %v67 = vld [vmem:[%s5 + $0x8] sm:$0xff]
    %v68 = vld [vmem:[%s5 + $0x10] sm:$0xff]
    %v69 = vld [vmem:[%s5 + $0x18] sm:$0xff]
    %v70 = vld [vmem:[%s5 + $0x20] sm:$0xff]
    %v71 = vld [vmem:[%s5 + $0x28] sm:$0xff]
    %v72 = vld [vmem:[%s5 + $0x30] sm:$0xff]
    %v73 = vld [vmem:[%s5 + $0x38] sm:$0xff]
    %v74 = vld [vmem:[%s6] sm:$0x77]
    %v75 = vld [vmem:[%s7] sm:$0xff]
    %v76 = vld [vmem:[%s7 + $0x8] sm:$0xff]
    %v77 = vld [vmem:[%s7 + $0x10] sm:$0xff]
    %v78 = vld [vmem:[%s7 + $0x18] sm:$0xff]
    %v79 = vld [vmem:[%s7 + $0x20] sm:$0xff]
    %v80 = vld [vmem:[%s7 + $0x28] sm:$0xff]
    %v81 = vld [vmem:[%s7 + $0x30] sm:$0xff]
    %v82 = vld [vmem:[%s7 + $0x38] sm:$0xff]
    %v83 = vld [vmem:[%s7 + $0x40] sm:$0xff]
    %v84 = vld [vmem:[%s7 + $0x48] sm:$0xff]
    %v85 = vld [vmem:[%s7 + $0x50] sm:$0xff]
    %v86 = vld [vmem:[%s7 + $0x58] sm:$0xff]
    %v87 = vld [vmem:[%s7 + $0x60] sm:$0xff]
    %v88 = vld [vmem:[%s7 + $0x68] sm:$0xff]
    %v89 = vld [vmem:[%s7 + $0x70] sm:$0xff]
    %v90 = vld [vmem:[%s7 + $0x78] sm:$0xff]
    %v91 = vld [vmem:[%s7 + $0x80] sm:$0xff]
    %v92 = vld [vmem:[%s7 + $0x88] sm:$0xff]
    %v93 = vld [vmem:[%s7 + $0x90] sm:$0xff]
    %v94 = vld [vmem:[%s7 + $0x98] sm:$0xff]
    %v95 = vld [vmem:[%s7 + $0xa0] sm:$0xff]
    %v96 = vld [vmem:[%s7 + $0xa8] sm:$0xff]
    %v97 = vld [vmem:[%s7 + $0xb0] sm:$0xff]
    %v98 = vld [vmem:[%s7 + $0xb8] sm:$0xff]
    %v99 = vld [vmem:[%s7 + $0xc0] sm:$0xff]
    %v100 = vld [vmem:[%s7 + $0xc8] sm:$0xff]
    %v101 = vld [vmem:[%s7 + $0xd0] sm:$0xff]
    %v102 = vld [vmem:[%s7 + $0xd8] sm:$0xff]
    %v103 = vld [vmem:[%s7 + $0xe0] sm:$0xff]
    %v104 = vld [vmem:[%s7 + $0xe8] sm:$0xff]
    %v105 = vld [vmem:[%s7 + $0xf0] sm:$0xff]
    %v106 = vld [vmem:[%s7 + $0xf8] sm:$0xff]
    %v107 = vld [vmem:[%s7 + $0x100] sm:$0xff]
    %v108 = vld [vmem:[%s7 + $0x108] sm:$0xff]
    %v109 = vld [vmem:[%s7 + $0x110] sm:$0xff]
    %v110 = vld [vmem:[%s7 + $0x118] sm:$0xff]
    %v111 = vld [vmem:[%s7 + $0x120] sm:$0xff]
    %v112 = vld [vmem:[%s7 + $0x128] sm:$0xff]
    %v113 = vld [vmem:[%s7 + $0x130] sm:$0xff]
    %v114 = vld [vmem:[%s7 + $0x138] sm:$0xff]
    %v115 = vld [vmem:[%s7 + $0x140] sm:$0xff]
    %v116 = vld [vmem:[%s7 + $0x148] sm:$0xff]
    %v117 = vld [vmem:[%s7 + $0x150] sm:$0xff]
    %v118 = vld [vmem:[%s7 + $0x158] sm:$0xff]
    %v119 = vld [vmem:[%s7 + $0x160] sm:$0xff]
    %v120 = vld [vmem:[%s7 + $0x168] sm:$0xff]
    %v121 = vld [vmem:[%s7 + $0x170] sm:$0xff]
    %v122 = vld [vmem:[%s7 + $0x178] sm:$0xff]
    %v124 = vperm.slane %v74, 0
    %v125 = vperm.slane %v74, 4
    %v128 = vperm.slane %v124, 0
    %v129 = vperm.slane %v125, 0
    %v138 = vunpack.c.l.b16 %v66
    %v139 = vunpack.c.h.b16 %v66
    %v140 = vunpack.c.l.b16 %v67
    %v141 = vunpack.c.h.b16 %v67
    %v142 = vunpack.c.l.b16 %v68
    %v143 = vunpack.c.h.b16 %v68
    %v144 = vunpack.c.l.b16 %v69
    %v145 = vunpack.c.h.b16 %v69
    %v146 = vunpack.c.l.b16 %v70
    %v147 = vunpack.c.h.b16 %v70
    %v148 = vunpack.c.l.b16 %v71
    %v149 = vunpack.c.h.b16 %v71
    %v150 = vunpack.c.l.b16 %v72
    %v151 = vunpack.c.h.b16 %v72
    %v152 = vunpack.c.l.b16 %v73
    %v153 = vunpack.c.h.b16 %v73
    %v154 = vpack.c.b16 %v140, %v138
    %v155 = vpack.c.b16 %v141, %v139
    %v156 = vpack.c.b16 %v144, %v142
    %v157 = vpack.c.b16 %v145, %v143
    %v158 = vpack.c.b16 %v148, %v146
    %v159 = vpack.c.b16 %v149, %v147
    %v160 = vpack.c.b16 %v152, %v150
    %v161 = vpack.c.b16 %v153, %v151
    %vm170 = vcmask 523264
    %v172 = vsel %vm170, %v64, 0
    %v175 = vsel %vm170, %v65, 0
    %177 = vmatpush.bf16.msra.mxu0 0
    %178 = vmatpush.bf16.msra.mxu0 0
    %179 = vmatpush.bf16.msra.mxu0 0
    %180 = vmatpush.bf16.msra.mxu0 0
    %181 = vmatpush.bf16.msra.mxu0 %v160
    %182 = vmatpush.bf16.msra.mxu0 %v158
    %183 = vmatpush.bf16.msra.mxu0 %v156
    %184 = vmatpush.bf16.msra.mxu0 %v154
    %185 = vmatmul.bf16.gmra.mxu0 %v172
    %v186 = vpop.f32.mrf.mxu0
    %v187 = vadd.f32 %v128, %v186
    %v188 = vpop.f32.mrf.mxu0
    %v189 = vadd.f32 %v128, %v188
    %190 = vmatmul.bf16.gmra.mxu0 %v175
    %v191 = vpop.f32.mrf.mxu0
    %v192 = vadd.f32 %v128, %v191
    %v193 = vpop.f32.mrf.mxu0
    %v194 = vadd.f32 %v128, %v193
    %195 = vdwg.mxu0
    %196 = vmatpush.bf16.msra.mxu0 0
    %197 = vmatpush.bf16.msra.mxu0 0
    %198 = vmatpush.bf16.msra.mxu0 0
    %199 = vmatpush.bf16.msra.mxu0 0
    %200 = vmatpush.bf16.msra.mxu0 %v161
    %201 = vmatpush.bf16.msra.mxu0 %v159
    %202 = vmatpush.bf16.msra.mxu0 %v157
    %203 = vmatpush.bf16.msra.mxu0 %v155
    %204 = vmatmul.bf16.gmra.mxu0 %v172
    %v205 = vpop.f32.mrf.mxu0
    %v206 = vadd.f32 %v129, %v205
    %v207 = vpop.f32.mrf.mxu0
    %v208 = vadd.f32 %v129, %v207
    %209 = vmatmul.bf16.gmra.mxu0 %v175
    %v210 = vpop.f32.mrf.mxu0
    %v211 = vadd.f32 %v129, %v210
    %v212 = vpop.f32.mrf.mxu0
    %v213 = vadd.f32 %v129, %v212
    %214 = vdwg.mxu0
    %v215 = vadd.f32 %v187, %v189
    %v216 = vrot.slane %v215, 4
    %v217 = vadd.f32 %v215, %v216
    %v218 = vrot.slane %v217, 2
    %v219 = vadd.f32 %v217, %v218
    %v220 = vrot.slane %v219, 1
    %v221 = vadd.f32 %v219, %v220
    %v222 = vsel %vm170, %v206, 0.0
    %v223 = vsel %vm170, %v208, 0.0
    %v224 = vadd.f32 %v222, %v223
    %v225 = vrot.slane %v224, 4
    %v226 = vadd.f32 %v224, %v225
    %v227 = vrot.slane %v226, 2
    %v228 = vadd.f32 %v226, %v227
    %v229 = vrot.slane %v228, 1
    %v230 = vadd.f32 %v228, %v229
    %v232 = vsel %vm170, %v230, 0
    %234 = vmatpush.msra.mxu0 %v105
    %235 = vmatpush.msra.mxu0 %v103
    %236 = vmatpush.msra.mxu0 %v101
    %237 = vmatpush.msra.mxu0 %v99
    %238 = vmatpush.msra.mxu0 %v97
    %239 = vmatpush.msra.mxu0 %v95
    %240 = vmatpush.msra.mxu0 %v93
    %241 = vmatpush.msra.mxu0 %v91
    %242 = vmatpush.msra.mxu0 %v89
    %243 = vmatpush.msra.mxu0 %v87
    %244 = vmatpush.msra.mxu0 %v85
    %245 = vmatpush.msra.mxu0 %v83
    %246 = vmatpush.msra.mxu0 %v81
    %247 = vmatpush.msra.mxu0 %v79
    %248 = vmatpush.msra.mxu0 %v77
    %249 = vmatpush.msra.mxu0 %v75
    %250 = vmatmul.f32.gmra.mxu0 %v221
    %v251 = vpop.f32.mrf.mxu0
    %v252 = vadd.f32 0.0, %v251
    %253 = vdwg.mxu0
    %254 = vmatpush.msra.mxu0 0.0
    %255 = vmatpush.msra.mxu0 0.0
    %256 = vmatpush.msra.mxu0 0.0
    %257 = vmatpush.msra.mxu0 0.0
    %258 = vmatpush.msra.mxu0 0.0
    %259 = vmatpush.msra.mxu0 0.0
    %260 = vmatpush.msra.mxu0 0.0
    %261 = vmatpush.msra.mxu0 0.0
    %262 = vmatpush.msra.mxu0 %v121
    %263 = vmatpush.msra.mxu0 %v119
    %264 = vmatpush.msra.mxu0 %v117
    %265 = vmatpush.msra.mxu0 %v115
    %266 = vmatpush.msra.mxu0 %v113
    %267 = vmatpush.msra.mxu0 %v111
    %268 = vmatpush.msra.mxu0 %v109
    %269 = vmatpush.msra.mxu0 %v107
    %270 = vmatmul.f32.gmra.mxu0 %v232
    %v271 = vpop.f32.mrf.mxu0
    %v272 = vadd.f32 %v252, %v271
    %273 = vdwg.mxu0
    %274 = vmatpush.msra.mxu0 %v106
    %275 = vmatpush.msra.mxu0 %v104
    %276 = vmatpush.msra.mxu0 %v102
    %277 = vmatpush.msra.mxu0 %v100
    %278 = vmatpush.msra.mxu0 %v98
    %279 = vmatpush.msra.mxu0 %v96
    %280 = vmatpush.msra.mxu0 %v94
    %281 = vmatpush.msra.mxu0 %v92
    %282 = vmatpush.msra.mxu0 %v90
    %283 = vmatpush.msra.mxu0 %v88
    %284 = vmatpush.msra.mxu0 %v86
    %285 = vmatpush.msra.mxu0 %v84
    %286 = vmatpush.msra.mxu0 %v82
    %287 = vmatpush.msra.mxu0 %v80
    %288 = vmatpush.msra.mxu0 %v78
    %289 = vmatpush.msra.mxu0 %v76
    %290 = vmatmul.f32.gmra.mxu0 %v221
    %v291 = vpop.f32.mrf.mxu0
    %v292 = vadd.f32 0.0, %v291
    %293 = vdwg.mxu0
    %294 = vmatpush.msra.mxu0 0.0
    %295 = vmatpush.msra.mxu0 0.0
    %296 = vmatpush.msra.mxu0 0.0
    %297 = vmatpush.msra.mxu0 0.0
    %298 = vmatpush.msra.mxu0 0.0
    %299 = vmatpush.msra.mxu0 0.0
    %300 = vmatpush.msra.mxu0 0.0
    %301 = vmatpush.msra.mxu0 0.0
    %302 = vmatpush.msra.mxu0 %v122
    %303 = vmatpush.msra.mxu0 %v120
    %304 = vmatpush.msra.mxu0 %v118
    %305 = vmatpush.msra.mxu0 %v116
    %306 = vmatpush.msra.mxu0 %v114
    %307 = vmatpush.msra.mxu0 %v112
    %308 = vmatpush.msra.mxu0 %v110
    %309 = vmatpush.msra.mxu0 %v108
    %310 = vmatmul.f32.gmra.mxu0 %v232
    %v311 = vpop.f32.mrf.mxu0
    %v312 = vadd.f32 %v292, %v311
    %313 = vdwg.mxu0
    %v314 = vperm.slane %v272, 0
    %v315 = vperm.slane %v312, 0
    %v316 = vsub.f32 %v187, %v314
    %v317 = vsub.f32 %v206, %v315
    %v318 = vsub.f32 %v189, %v314
    %v319 = vsub.f32 %v208, %v315
    %v320 = vmul.f32 %v316, %v316
    %v321 = vmul.f32 %v317, %v317
    %v322 = vmul.f32 %v318, %v318
    %v323 = vmul.f32 %v319, %v319
    %v324 = vadd.f32 %v320, %v322
    %v325 = vrot.slane %v324, 4
    %v326 = vadd.f32 %v324, %v325
    %v327 = vrot.slane %v326, 2
    %v328 = vadd.f32 %v326, %v327
    %v329 = vrot.slane %v328, 1
    %v330 = vadd.f32 %v328, %v329
    %v331 = vsel %vm170, %v321, 0.0
    %v332 = vsel %vm170, %v323, 0.0
    %v333 = vadd.f32 %v331, %v332
    %v334 = vrot.slane %v333, 4
    %v335 = vadd.f32 %v333, %v334
    %v336 = vrot.slane %v335, 2
    %v337 = vadd.f32 %v335, %v336
    %v338 = vrot.slane %v337, 1
    %v339 = vadd.f32 %v337, %v338
    %v341 = vsel %vm170, %v339, 0
    %343 = vmatpush.msra.mxu0 %v105
    %344 = vmatpush.msra.mxu0 %v103
    %345 = vmatpush.msra.mxu0 %v101
    %346 = vmatpush.msra.mxu0 %v99
    %347 = vmatpush.msra.mxu0 %v97
    %348 = vmatpush.msra.mxu0 %v95
    %349 = vmatpush.msra.mxu0 %v93
    %350 = vmatpush.msra.mxu0 %v91
    %351 = vmatpush.msra.mxu0 %v89
    %352 = vmatpush.msra.mxu0 %v87
    %353 = vmatpush.msra.mxu0 %v85
    %354 = vmatpush.msra.mxu0 %v83
    %355 = vmatpush.msra.mxu0 %v81
    %356 = vmatpush.msra.mxu0 %v79
    %357 = vmatpush.msra.mxu0 %v77
    %358 = vmatpush.msra.mxu0 %v75
    %359 = vmatmul.f32.gmra.mxu0 %v330
    %v360 = vpop.f32.mrf.mxu0
    %v361 = vadd.f32 1e-05, %v360
    %362 = vdwg.mxu0
    %363 = vmatpush.msra.mxu0 0.0
    %364 = vmatpush.msra.mxu0 0.0
    %365 = vmatpush.msra.mxu0 0.0
    %366 = vmatpush.msra.mxu0 0.0
    %367 = vmatpush.msra.mxu0 0.0
    %368 = vmatpush.msra.mxu0 0.0
    %369 = vmatpush.msra.mxu0 0.0
    %370 = vmatpush.msra.mxu0 0.0
    %371 = vmatpush.msra.mxu0 %v121
    %372 = vmatpush.msra.mxu0 %v119
    %373 = vmatpush.msra.mxu0 %v117
    %374 = vmatpush.msra.mxu0 %v115
    %375 = vmatpush.msra.mxu0 %v113
    %376 = vmatpush.msra.mxu0 %v111
    %377 = vmatpush.msra.mxu0 %v109
    %378 = vmatpush.msra.mxu0 %v107
    %379 = vmatmul.f32.gmra.mxu0 %v341
    %v380 = vpop.f32.mrf.mxu0
    %v381 = vadd.f32 %v361, %v380
    %382 = vdwg.mxu0
    %383 = vmatpush.msra.mxu0 %v106
    %384 = vmatpush.msra.mxu0 %v104
    %385 = vmatpush.msra.mxu0 %v102
    %386 = vmatpush.msra.mxu0 %v100
    %387 = vmatpush.msra.mxu0 %v98
    %388 = vmatpush.msra.mxu0 %v96
    %389 = vmatpush.msra.mxu0 %v94
    %390 = vmatpush.msra.mxu0 %v92
    %391 = vmatpush.msra.mxu0 %v90
    %392 = vmatpush.msra.mxu0 %v88
    %393 = vmatpush.msra.mxu0 %v86
    %394 = vmatpush.msra.mxu0 %v84
    %395 = vmatpush.msra.mxu0 %v82
    %396 = vmatpush.msra.mxu0 %v80
    %397 = vmatpush.msra.mxu0 %v78
    %398 = vmatpush.msra.mxu0 %v76
    %399 = vmatmul.f32.gmra.mxu0 %v330
    %v400 = vpop.f32.mrf.mxu0
    %v401 = vadd.f32 1e-05, %v400
    %402 = vdwg.mxu0
    %403 = vmatpush.msra.mxu0 0.0
    %404 = vmatpush.msra.mxu0 0.0
    %405 = vmatpush.msra.mxu0 0.0
    %406 = vmatpush.msra.mxu0 0.0
    %407 = vmatpush.msra.mxu0 0.0
    %408 = vmatpush.msra.mxu0 0.0
    %409 = vmatpush.msra.mxu0 0.0
    %410 = vmatpush.msra.mxu0 0.0
    %411 = vmatpush.msra.mxu0 %v122
    %412 = vmatpush.msra.mxu0 %v120
    %413 = vmatpush.msra.mxu0 %v118
    %414 = vmatpush.msra.mxu0 %v116
    %415 = vmatpush.msra.mxu0 %v114
    %416 = vmatpush.msra.mxu0 %v112
    %417 = vmatpush.msra.mxu0 %v110
    %418 = vmatpush.msra.mxu0 %v108
    %419 = vmatmul.f32.gmra.mxu0 %v341
    %v420 = vpop.f32.mrf.mxu0
    %v421 = vadd.f32 %v401, %v420
    %422 = vdwg.mxu0
    %v423 = vrsqrt.pop %v381
    %v424 = vmul.f32 %v423, %v381
    %v425 = vmul.f32 %v424, %v423
    %v426 = vmul.f32 0.5, %v425
    %v427 = vsub.f32 1.5, %v426
    %v428 = vmul.f32 %v423, %v427
    %vm429 = vweird.f32 %v381
    %vm430 = vweird.f32 %v423
    %vm431 = vmor %vm429, %vm430
    %v432 = vsel %vm431, %v423, %v428
    %v433 = vrsqrt.pop %v421
    %v434 = vmul.f32 %v433, %v421
    %v435 = vmul.f32 %v434, %v433
    %v436 = vmul.f32 0.5, %v435
    %v437 = vsub.f32 1.5, %v436
    %v438 = vmul.f32 %v433, %v437
    %vm439 = vweird.f32 %v421
    %vm440 = vweird.f32 %v433
    %vm441 = vmor %vm439, %vm440
    %v442 = vsel %vm441, %v433, %v438
    %v443 = vperm.slane %v432, 0
    %v444 = vperm.slane %v442, 0
    %v445 = vmul.f32 %v316, %v443
    %v446 = vmul.f32 %v317, %v444
    %v447 = vmul.f32 %v318, %v443
    %v448 = vmul.f32 %v319, %v444
    %v449 = vperm.slane %v74, 1
    %v450 = vperm.slane %v74, 5
    %v453 = vperm.slane %v449, 1
    %v454 = vperm.slane %v450, 1
    %v455 = vmul.f32 %v445, %v453
    %v456 = vmul.f32 %v446, %v454
    %v457 = vmul.f32 %v447, %v453
    %v458 = vmul.f32 %v448, %v454
    %v459 = vperm.slane %v74, 2
    %v460 = vperm.slane %v74, 6
    %v463 = vperm.slane %v459, 2
    %v464 = vperm.slane %v460, 2
    %v465 = vadd.f32 %v455, %v463
    %v466 = vadd.f32 %v456, %v464
    %v467 = vadd.f32 %v457, %v463
    %v468 = vadd.f32 %v458, %v464
    %v469 = vmax.f32 %v465, 0.0
    %v470 = vmax.f32 %v466, 0.0
    %v471 = vmax.f32 %v467, 0.0
    %v472 = vmax.f32 %v468, 0.0
    %v473 = vadd.f32 %v192, %v194
    %v474 = vrot.slane %v473, 4
    %v475 = vadd.f32 %v473, %v474
    %v476 = vrot.slane %v475, 2
    %v477 = vadd.f32 %v475, %v476
    %v478 = vrot.slane %v477, 1
    %v479 = vadd.f32 %v477, %v478
    %v480 = vsel %vm170, %v211, 0.0
    %v481 = vsel %vm170, %v213, 0.0
    %v482 = vadd.f32 %v480, %v481
    %v483 = vrot.slane %v482, 4
    %v484 = vadd.f32 %v482, %v483
    %v485 = vrot.slane %v484, 2
    %v486 = vadd.f32 %v484, %v485
    %v487 = vrot.slane %v486, 1
    %v488 = vadd.f32 %v486, %v487
    %v490 = vsel %vm170, %v488, 0
    %492 = vmatpush.msra.mxu0 %v105
    %493 = vmatpush.msra.mxu0 %v103
    %494 = vmatpush.msra.mxu0 %v101
    %495 = vmatpush.msra.mxu0 %v99
    %496 = vmatpush.msra.mxu0 %v97
    %497 = vmatpush.msra.mxu0 %v95
    %498 = vmatpush.msra.mxu0 %v93
    %499 = vmatpush.msra.mxu0 %v91
    %500 = vmatpush.msra.mxu0 %v89
    %501 = vmatpush.msra.mxu0 %v87
    %502 = vmatpush.msra.mxu0 %v85
    %503 = vmatpush.msra.mxu0 %v83
    %504 = vmatpush.msra.mxu0 %v81
    %505 = vmatpush.msra.mxu0 %v79
    %506 = vmatpush.msra.mxu0 %v77
    %507 = vmatpush.msra.mxu0 %v75
    %508 = vmatmul.f32.gmra.mxu0 %v479
    %v509 = vpop.f32.mrf.mxu0
    %v510 = vadd.f32 0.0, %v509
    %511 = vdwg.mxu0
    %512 = vmatpush.msra.mxu0 0.0
    %513 = vmatpush.msra.mxu0 0.0
    %514 = vmatpush.msra.mxu0 0.0
    %515 = vmatpush.msra.mxu0 0.0
    %516 = vmatpush.msra.mxu0 0.0
    %517 = vmatpush.msra.mxu0 0.0
    %518 = vmatpush.msra.mxu0 0.0
    %519 = vmatpush.msra.mxu0 0.0
    %520 = vmatpush.msra.mxu0 %v121
    %521 = vmatpush.msra.mxu0 %v119
    %522 = vmatpush.msra.mxu0 %v117
    %523 = vmatpush.msra.mxu0 %v115
    %524 = vmatpush.msra.mxu0 %v113
    %525 = vmatpush.msra.mxu0 %v111
    %526 = vmatpush.msra.mxu0 %v109
    %527 = vmatpush.msra.mxu0 %v107
    %528 = vmatmul.f32.gmra.mxu0 %v490
    %v529 = vpop.f32.mrf.mxu0
    %v530 = vadd.f32 %v510, %v529
    %531 = vdwg.mxu0
    %532 = vmatpush.msra.mxu0 %v106
    %533 = vmatpush.msra.mxu0 %v104
    %534 = vmatpush.msra.mxu0 %v102
    %535 = vmatpush.msra.mxu0 %v100
    %536 = vmatpush.msra.mxu0 %v98
    %537 = vmatpush.msra.mxu0 %v96
    %538 = vmatpush.msra.mxu0 %v94
    %539 = vmatpush.msra.mxu0 %v92
    %540 = vmatpush.msra.mxu0 %v90
    %541 = vmatpush.msra.mxu0 %v88
    %542 = vmatpush.msra.mxu0 %v86
    %543 = vmatpush.msra.mxu0 %v84
    %544 = vmatpush.msra.mxu0 %v82
    %545 = vmatpush.msra.mxu0 %v80
    %546 = vmatpush.msra.mxu0 %v78
    %547 = vmatpush.msra.mxu0 %v76
    %548 = vmatmul.f32.gmra.mxu0 %v479
    %v549 = vpop.f32.mrf.mxu0
    %v550 = vadd.f32 0.0, %v549
    %551 = vdwg.mxu0
    %552 = vmatpush.msra.mxu0 0.0
    %553 = vmatpush.msra.mxu0 0.0
    %554 = vmatpush.msra.mxu0 0.0
    %555 = vmatpush.msra.mxu0 0.0
    %556 = vmatpush.msra.mxu0 0.0
    %557 = vmatpush.msra.mxu0 0.0
    %558 = vmatpush.msra.mxu0 0.0
    %559 = vmatpush.msra.mxu0 0.0
    %560 = vmatpush.msra.mxu0 %v122
    %561 = vmatpush.msra.mxu0 %v120
    %562 = vmatpush.msra.mxu0 %v118
    %563 = vmatpush.msra.mxu0 %v116
    %564 = vmatpush.msra.mxu0 %v114
    %565 = vmatpush.msra.mxu0 %v112
    %566 = vmatpush.msra.mxu0 %v110
    %567 = vmatpush.msra.mxu0 %v108
    %568 = vmatmul.f32.gmra.mxu0 %v490
    %v569 = vpop.f32.mrf.mxu0
    %v570 = vadd.f32 %v550, %v569
    %571 = vdwg.mxu0
    %v572 = vperm.slane %v530, 0
    %v573 = vperm.slane %v570, 0
    %v574 = vsub.f32 %v192, %v572
    %v575 = vsub.f32 %v211, %v573
    %v576 = vsub.f32 %v194, %v572
    %v577 = vsub.f32 %v213, %v573
    %v578 = vmul.f32 %v574, %v574
    %v579 = vmul.f32 %v575, %v575
    %v580 = vmul.f32 %v576, %v576
    %v581 = vmul.f32 %v577, %v577
    %v582 = vadd.f32 %v578, %v580
    %v583 = vrot.slane %v582, 4
    %v584 = vadd.f32 %v582, %v583
    %v585 = vrot.slane %v584, 2
    %v586 = vadd.f32 %v584, %v585
    %v587 = vrot.slane %v586, 1
    %v588 = vadd.f32 %v586, %v587
    %v589 = vsel %vm170, %v579, 0.0
    %v590 = vsel %vm170, %v581, 0.0
    %v591 = vadd.f32 %v589, %v590
    %v592 = vrot.slane %v591, 4
    %v593 = vadd.f32 %v591, %v592
    %v594 = vrot.slane %v593, 2
    %v595 = vadd.f32 %v593, %v594
    %v596 = vrot.slane %v595, 1
    %v597 = vadd.f32 %v595, %v596
    %v599 = vsel %vm170, %v597, 0
    %601 = vmatpush.msra.mxu0 %v105
    %602 = vmatpush.msra.mxu0 %v103
    %603 = vmatpush.msra.mxu0 %v101
    %604 = vmatpush.msra.mxu0 %v99
    %605 = vmatpush.msra.mxu0 %v97
    %606 = vmatpush.msra.mxu0 %v95
    %607 = vmatpush.msra.mxu0 %v93
    %608 = vmatpush.msra.mxu0 %v91
    %609 = vmatpush.msra.mxu0 %v89
    %610 = vmatpush.msra.mxu0 %v87
    %611 = vmatpush.msra.mxu0 %v85
    %612 = vmatpush.msra.mxu0 %v83
    %613 = vmatpush.msra.mxu0 %v81
    %614 = vmatpush.msra.mxu0 %v79
    %615 = vmatpush.msra.mxu0 %v77
    %616 = vmatpush.msra.mxu0 %v75
    %617 = vmatmul.f32.gmra.mxu0 %v588
    %v618 = vpop.f32.mrf.mxu0
    %v619 = vadd.f32 1e-05, %v618
    %620 = vdwg.mxu0
    %621 = vmatpush.msra.mxu0 0.0
    %622 = vmatpush.msra.mxu0 0.0
    %623 = vmatpush.msra.mxu0 0.0
    %624 = vmatpush.msra.mxu0 0.0
    %625 = vmatpush.msra.mxu0 0.0
    %626 = vmatpush.msra.mxu0 0.0
    %627 = vmatpush.msra.mxu0 0.0
    %628 = vmatpush.msra.mxu0 0.0
    %629 = vmatpush.msra.mxu0 %v121
    %630 = vmatpush.msra.mxu0 %v119
    %631 = vmatpush.msra.mxu0 %v117
    %632 = vmatpush.msra.mxu0 %v115
    %633 = vmatpush.msra.mxu0 %v113
    %634 = vmatpush.msra.mxu0 %v111
    %635 = vmatpush.msra.mxu0 %v109
    %636 = vmatpush.msra.mxu0 %v107
    %637 = vmatmul.f32.gmra.mxu0 %v599
    %v638 = vpop.f32.mrf.mxu0
    %v639 = vadd.f32 %v619, %v638
    %640 = vdwg.mxu0
    %641 = vmatpush.msra.mxu0 %v106
    %642 = vmatpush.msra.mxu0 %v104
    %643 = vmatpush.msra.mxu0 %v102
    %644 = vmatpush.msra.mxu0 %v100
    %645 = vmatpush.msra.mxu0 %v98
    %646 = vmatpush.msra.mxu0 %v96
    %647 = vmatpush.msra.mxu0 %v94
    %648 = vmatpush.msra.mxu0 %v92
    %649 = vmatpush.msra.mxu0 %v90
    %650 = vmatpush.msra.mxu0 %v88
    %651 = vmatpush.msra.mxu0 %v86
    %652 = vmatpush.msra.mxu0 %v84
    %653 = vmatpush.msra.mxu0 %v82
    %654 = vmatpush.msra.mxu0 %v80
    %655 = vmatpush.msra.mxu0 %v78
    %656 = vmatpush.msra.mxu0 %v76
    %657 = vmatmul.f32.gmra.mxu0 %v588
    %v658 = vpop.f32.mrf.mxu0
    %v659 = vadd.f32 1e-05, %v658
    %660 = vdwg.mxu0
    %661 = vmatpush.msra.mxu0 0.0
    %662 = vmatpush.msra.mxu0 0.0
    %663 = vmatpush.msra.mxu0 0.0
    %664 = vmatpush.msra.mxu0 0.0
    %665 = vmatpush.msra.mxu0 0.0
    %666 = vmatpush.msra.mxu0 0.0
    %667 = vmatpush.msra.mxu0 0.0
    %668 = vmatpush.msra.mxu0 0.0
    %669 = vmatpush.msra.mxu0 %v122
    %670 = vmatpush.msra.mxu0 %v120
    %671 = vmatpush.msra.mxu0 %v118
    %672 = vmatpush.msra.mxu0 %v116
    %673 = vmatpush.msra.mxu0 %v114
    %674 = vmatpush.msra.mxu0 %v112
    %675 = vmatpush.msra.mxu0 %v110
    %676 = vmatpush.msra.mxu0 %v108
    %677 = vmatmul.f32.gmra.mxu0 %v599
    %v678 = vpop.f32.mrf.mxu0
    %v679 = vadd.f32 %v659, %v678
    %680 = vdwg.mxu0
    %v681 = vrsqrt.pop %v639
    %v682 = vmul.f32 %v681, %v639
    %v683 = vmul.f32 %v682, %v681
    %v684 = vmul.f32 0.5, %v683
    %v685 = vsub.f32 1.5, %v684
    %v686 = vmul.f32 %v681, %v685
    %vm687 = vweird.f32 %v639
    %vm688 = vweird.f32 %v681
    %vm689 = vmor %vm687, %vm688
    %v690 = vsel %vm689, %v681, %v686
    %v691 = vrsqrt.pop %v679
    %v692 = vmul.f32 %v691, %v679
    %v693 = vmul.f32 %v692, %v691
    %v694 = vmul.f32 0.5, %v693
    %v695 = vsub.f32 1.5, %v694
    %v696 = vmul.f32 %v691, %v695
    %vm697 = vweird.f32 %v679
    %vm698 = vweird.f32 %v691
    %vm699 = vmor %vm697, %vm698
    %v700 = vsel %vm699, %v691, %v696
    %v701 = vperm.slane %v690, 0
    %v702 = vperm.slane %v700, 0
    %v703 = vmul.f32 %v574, %v701
    %v704 = vmul.f32 %v575, %v702
    %v705 = vmul.f32 %v576, %v701
    %v706 = vmul.f32 %v577, %v702
    %v707 = vmul.f32 %v703, %v453
    %v708 = vmul.f32 %v704, %v454
    %v709 = vmul.f32 %v705, %v453
    %v710 = vmul.f32 %v706, %v454
    %v711 = vadd.f32 %v707, %v463
    %v712 = vadd.f32 %v708, %v464
    %v713 = vadd.f32 %v709, %v463
    %v714 = vadd.f32 %v710, %v464
    %v715 = vmax.f32 %v711, 0.0
    %v716 = vmax.f32 %v712, 0.0
    %v717 = vmax.f32 %v713, 0.0
    %v718 = vmax.f32 %v714, 0.0
    %719 = vst [vmem:[#allocation2] sm:$0xff] %v469
    %720 = vst [vmem:[#allocation2 + $0x8] sm:$0xff] %v471
    %721 = vst [vmem:[#allocation2 + $0x10] sm:$0xff] %v715
    %722 = vst [vmem:[#allocation2 + $0x18] sm:$0xff] %v717
    %v723 = vld [vmem:[%s3] sm:$0xff]
    %v724 = vld [vmem:[%s3 + $0x8] sm:$0xff]
    %v725 = vld [vmem:[%s3 + $0x10] sm:$0xff]
    %v726 = vld [vmem:[%s3 + $0x18] sm:$0xff]
    %v727 = vld [vmem:[%s4] sm:$0xff]
    %v728 = vld [vmem:[%s4 + $0x8] sm:$0xff]
    %v729 = vld [vmem:[%s4 + $0x10] sm:$0xff]
    %v730 = vld [vmem:[%s4 + $0x18] sm:$0xff]
    %v731 = vld [vmem:[%s1] sm:$0xff]
    %v732 = vld [vmem:[%s1 + $0x8] sm:$0xff]
    %v733 = vld [vmem:[%s1 + $0x10] sm:$0xff]
    %v734 = vld [vmem:[%s1 + $0x18] sm:$0xff]
    %v735 = vld [vmem:[%s1 + $0x20] sm:$0xff]
    %v736 = vld [vmem:[%s1 + $0x28] sm:$0xff]
    %v737 = vld [vmem:[%s1 + $0x30] sm:$0xff]
    %v738 = vld [vmem:[%s1 + $0x38] sm:$0xff]
    %v739 = vfloor.f32 %v723
    %v740 = vfloor.f32 %v724
    %v741 = vcvt.f32.s32.to.zero.pseudo %v739
    %v742 = vcvt.f32.s32.to.zero.pseudo %v740
    %v743 = vlaneseq
    %v744 = vand.u32 %v743, 127
    %vm745 = vcmp.lt.s32.totalorder %v744, 64
    %746 = vset.pattern.permute.xlu0 0
    %747 = vperm.xlu0 %746, %v741
    %v748 = vpop.permute.xlu0 %747
    %749 = vset.pattern.permute.xlu0 0
    %750 = vperm.xlu0 %749, %v742
    %v751 = vpop.permute.xlu0 %750
    %752 = vset.pattern.permute.xlu0 2
    %753 = vperm.xlu0 %752, %v741
    %v754 = vpop.permute.xlu0 %753
    %755 = vset.pattern.permute.xlu0 2
    %756 = vperm.xlu0 %755, %v742
    %v757 = vpop.permute.xlu0 %756
    %v758 = vsel %vm745, %v748, %v754
    %v759 = vsel %vm745, %v751, %v757
    %760 = vset.pattern.permute.xlu0 1
    %761 = vperm.xlu0 %760, %v741
    %v762 = vpop.permute.xlu0 %761
    %763 = vset.pattern.permute.xlu0 1
    %764 = vperm.xlu0 %763, %v742
    %v765 = vpop.permute.xlu0 %764
    %766 = vset.pattern.permute.xlu0 3
    %767 = vperm.xlu0 %766, %v741
    %v768 = vpop.permute.xlu0 %767
    %769 = vset.pattern.permute.xlu0 3
    %770 = vperm.xlu0 %769, %v742
    %v771 = vpop.permute.xlu0 %770
    %v772 = vsel %vm745, %v762, %v768
    %v773 = vsel %vm745, %v765, %v771
    %vm774 = vcmp.le.s32.totalorder %v758, 0
    %vm775 = vcmp.le.s32.totalorder %v759, 0
    %vm776 = vcmp.ge.s32.totalorder %v772, 0
    %vm777 = vcmp.ge.s32.totalorder %v773, 0
    %vm778 = vmand %vm774, %vm776
    %vm779 = vmand %vm775, %vm777
    %v780 = vperm.slane %v469, 0
    %v781 = vsel %vm778, %v780, -100000.0
    %v782 = vsel %vm779, %v780, -100000.0
    %v783 = vmax.f32 %v781, -100000.0
    %v784 = vmax.f32 %v782, -100000.0
    %vm785 = vcmp.le.s32.totalorder %v758, 1
    %vm786 = vcmp.le.s32.totalorder %v759, 1
    %vm787 = vcmp.ge.s32.totalorder %v772, 1
    %vm788 = vcmp.ge.s32.totalorder %v773, 1
    %vm789 = vmand %vm785, %vm787
    %vm790 = vmand %vm786, %vm788
    %v791 = vperm.slane %v469, 1
    %v792 = vsel %vm789, %v791, -100000.0
    %v793 = vsel %vm790, %v791, -100000.0
    %v794 = vmax.f32 %v783, %v792
    %v795 = vmax.f32 %v784, %v793
    %vm796 = vcmp.le.s32.totalorder %v758, 2
    %vm797 = vcmp.le.s32.totalorder %v759, 2
    %vm798 = vcmp.ge.s32.totalorder %v772, 2
    %vm799 = vcmp.ge.s32.totalorder %v773, 2
    %vm800 = vmand %vm796, %vm798
    %vm801 = vmand %vm797, %vm799
    %v802 = vperm.slane %v469, 2
    %v803 = vsel %vm800, %v802, -100000.0
    %v804 = vsel %vm801, %v802, -100000.0
    %v805 = vmax.f32 %v794, %v803
    %v806 = vmax.f32 %v795, %v804
    %vm807 = vcmp.le.s32.totalorder %v758, 3
    %vm808 = vcmp.le.s32.totalorder %v759, 3
    %vm809 = vcmp.ge.s32.totalorder %v772, 3
    %vm810 = vcmp.ge.s32.totalorder %v773, 3
    %vm811 = vmand %vm807, %vm809
    %vm812 = vmand %vm808, %vm810
    %v813 = vperm.slane %v469, 3
    %v814 = vsel %vm811, %v813, -100000.0
    %v815 = vsel %vm812, %v813, -100000.0
    %v816 = vmax.f32 %v805, %v814
    %v817 = vmax.f32 %v806, %v815
    %vm818 = vcmp.le.s32.totalorder %v758, 4
    %vm819 = vcmp.le.s32.totalorder %v759, 4
    %vm820 = vcmp.ge.s32.totalorder %v772, 4
    %vm821 = vcmp.ge.s32.totalorder %v773, 4
    %vm822 = vmand %vm818, %vm820
    %vm823 = vmand %vm819, %vm821
    %v824 = vperm.slane %v469, 4
    %v825 = vsel %vm822, %v824, -100000.0
    %v826 = vsel %vm823, %v824, -100000.0
    %v827 = vmax.f32 %v816, %v825
    %v828 = vmax.f32 %v817, %v826
    %vm829 = vcmp.le.s32.totalorder %v758, 5
    %vm830 = vcmp.le.s32.totalorder %v759, 5
    %vm831 = vcmp.ge.s32.totalorder %v772, 5
    %vm832 = vcmp.ge.s32.totalorder %v773, 5
    %vm833 = vmand %vm829, %vm831
    %vm834 = vmand %vm830, %vm832
    %v835 = vperm.slane %v469, 5
    %v836 = vsel %vm833, %v835, -100000.0
    %v837 = vsel %vm834, %v835, -100000.0
    %v838 = vmax.f32 %v827, %v836
    %v839 = vmax.f32 %v828, %v837
    %vm840 = vcmp.le.s32.totalorder %v758, 6
    %vm841 = vcmp.le.s32.totalorder %v759, 6
    %vm842 = vcmp.ge.s32.totalorder %v772, 6
    %vm843 = vcmp.ge.s32.totalorder %v773, 6
    %vm844 = vmand %vm840, %vm842
    %vm845 = vmand %vm841, %vm843
    %v846 = vperm.slane %v469, 6
    %v847 = vsel %vm844, %v846, -100000.0
    %v848 = vsel %vm845, %v846, -100000.0
    %v849 = vmax.f32 %v838, %v847
    %v850 = vmax.f32 %v839, %v848
    %vm851 = vcmp.le.s32.totalorder %v758, 7
    %vm852 = vcmp.le.s32.totalorder %v759, 7
    %vm853 = vcmp.ge.s32.totalorder %v772, 7
    %vm854 = vcmp.ge.s32.totalorder %v773, 7
    %vm855 = vmand %vm851, %vm853
    %vm856 = vmand %vm852, %vm854
    %v857 = vperm.slane %v469, 7
    %v858 = vsel %vm855, %v857, -100000.0
    %v859 = vsel %vm856, %v857, -100000.0
    %v860 = vmax.f32 %v849, %v858
    %v861 = vmax.f32 %v850, %v859
    %vm862 = vcmp.le.s32.totalorder %v758, 8
    %vm863 = vcmp.le.s32.totalorder %v759, 8
    %vm864 = vcmp.ge.s32.totalorder %v772, 8
    %vm865 = vcmp.ge.s32.totalorder %v773, 8
    %vm866 = vmand %vm862, %vm864
    %vm867 = vmand %vm863, %vm865
    %v868 = vperm.slane %v471, 0
    %v869 = vsel %vm866, %v868, -100000.0
    %v870 = vsel %vm867, %v868, -100000.0
    %v871 = vmax.f32 %v860, %v869
    %v872 = vmax.f32 %v861, %v870
    %vm873 = vcmp.le.s32.totalorder %v758, 9
    %vm874 = vcmp.le.s32.totalorder %v759, 9
    %vm875 = vcmp.ge.s32.totalorder %v772, 9
    %vm876 = vcmp.ge.s32.totalorder %v773, 9
    %vm877 = vmand %vm873, %vm875
    %vm878 = vmand %vm874, %vm876
    %v879 = vperm.slane %v471, 1
    %v880 = vsel %vm877, %v879, -100000.0
    %v881 = vsel %vm878, %v879, -100000.0
    %v882 = vmax.f32 %v871, %v880
    %v883 = vmax.f32 %v872, %v881
    %vm884 = vcmp.le.s32.totalorder %v758, 10
    %vm885 = vcmp.le.s32.totalorder %v759, 10
    %vm886 = vcmp.ge.s32.totalorder %v772, 10
    %vm887 = vcmp.ge.s32.totalorder %v773, 10
    %vm888 = vmand %vm884, %vm886
    %vm889 = vmand %vm885, %vm887
    %v890 = vperm.slane %v471, 2
    %v891 = vsel %vm888, %v890, -100000.0
    %v892 = vsel %vm889, %v890, -100000.0
    %v893 = vmax.f32 %v882, %v891
    %v894 = vmax.f32 %v883, %v892
    %vm895 = vcmp.le.s32.totalorder %v758, 11
    %vm896 = vcmp.le.s32.totalorder %v759, 11
    %vm897 = vcmp.ge.s32.totalorder %v772, 11
    %vm898 = vcmp.ge.s32.totalorder %v773, 11
    %vm899 = vmand %vm895, %vm897
    %vm900 = vmand %vm896, %vm898
    %v901 = vperm.slane %v471, 3
    %v902 = vsel %vm899, %v901, -100000.0
    %v903 = vsel %vm900, %v901, -100000.0
    %v904 = vmax.f32 %v893, %v902
    %v905 = vmax.f32 %v894, %v903
    %vm906 = vcmp.le.s32.totalorder %v758, 12
    %vm907 = vcmp.le.s32.totalorder %v759, 12
    %vm908 = vcmp.ge.s32.totalorder %v772, 12
    %vm909 = vcmp.ge.s32.totalorder %v773, 12
    %vm910 = vmand %vm906, %vm908
    %vm911 = vmand %vm907, %vm909
    %v912 = vperm.slane %v471, 4
    %v913 = vsel %vm910, %v912, -100000.0
    %v914 = vsel %vm911, %v912, -100000.0
    %v915 = vmax.f32 %v904, %v913
    %v916 = vmax.f32 %v905, %v914
    %vm917 = vcmp.le.s32.totalorder %v758, 13
    %vm918 = vcmp.le.s32.totalorder %v759, 13
    %vm919 = vcmp.ge.s32.totalorder %v772, 13
    %vm920 = vcmp.ge.s32.totalorder %v773, 13
    %vm921 = vmand %vm917, %vm919
    %vm922 = vmand %vm918, %vm920
    %v923 = vperm.slane %v471, 5
    %v924 = vsel %vm921, %v923, -100000.0
    %v925 = vsel %vm922, %v923, -100000.0
    %v926 = vmax.f32 %v915, %v924
    %v927 = vmax.f32 %v916, %v925
    %vm928 = vcmp.le.s32.totalorder %v758, 14
    %vm929 = vcmp.le.s32.totalorder %v759, 14
    %vm930 = vcmp.ge.s32.totalorder %v772, 14
    %vm931 = vcmp.ge.s32.totalorder %v773, 14
    %vm932 = vmand %vm928, %vm930
    %vm933 = vmand %vm929, %vm931
    %v934 = vperm.slane %v471, 6
    %v935 = vsel %vm932, %v934, -100000.0
    %v936 = vsel %vm933, %v934, -100000.0
    %v937 = vmax.f32 %v926, %v935
    %v938 = vmax.f32 %v927, %v936
    %vm939 = vcmp.le.s32.totalorder %v758, 15
    %vm940 = vcmp.le.s32.totalorder %v759, 15
    %vm941 = vcmp.ge.s32.totalorder %v772, 15
    %vm942 = vcmp.ge.s32.totalorder %v773, 15
    %vm943 = vmand %vm939, %vm941
    %vm944 = vmand %vm940, %vm942
    %v945 = vperm.slane %v471, 7
    %v946 = vsel %vm943, %v945, -100000.0
    %v947 = vsel %vm944, %v945, -100000.0
    %v948 = vmax.f32 %v937, %v946
    %v949 = vmax.f32 %v938, %v947
    %v950 = vfloor.f32 %v725
    %v951 = vfloor.f32 %v726
    %v952 = vcvt.f32.s32.to.zero.pseudo %v950
    %v953 = vcvt.f32.s32.to.zero.pseudo %v951
    %954 = vset.pattern.permute.xlu0 0
    %955 = vperm.xlu0 %954, %v952
    %v956 = vpop.permute.xlu0 %955
    %957 = vset.pattern.permute.xlu0 0
    %958 = vperm.xlu0 %957, %v953
    %v959 = vpop.permute.xlu0 %958
    %960 = vset.pattern.permute.xlu0 2
    %961 = vperm.xlu0 %960, %v952
    %v962 = vpop.permute.xlu0 %961
    %963 = vset.pattern.permute.xlu0 2
    %964 = vperm.xlu0 %963, %v953
    %v965 = vpop.permute.xlu0 %964
    %v966 = vsel %vm745, %v956, %v962
    %v967 = vsel %vm745, %v959, %v965
    %968 = vset.pattern.permute.xlu0 1
    %969 = vperm.xlu0 %968, %v952
    %v970 = vpop.permute.xlu0 %969
    %971 = vset.pattern.permute.xlu0 1
    %972 = vperm.xlu0 %971, %v953
    %v973 = vpop.permute.xlu0 %972
    %974 = vset.pattern.permute.xlu0 3
    %975 = vperm.xlu0 %974, %v952
    %v976 = vpop.permute.xlu0 %975
    %977 = vset.pattern.permute.xlu0 3
    %978 = vperm.xlu0 %977, %v953
    %v979 = vpop.permute.xlu0 %978
    %v980 = vsel %vm745, %v970, %v976
    %v981 = vsel %vm745, %v973, %v979
    %vm982 = vcmp.le.s32.totalorder %v966, 0
    %vm983 = vcmp.le.s32.totalorder %v967, 0
    %vm984 = vcmp.ge.s32.totalorder %v980, 0
    %vm985 = vcmp.ge.s32.totalorder %v981, 0
    %vm986 = vmand %vm982, %vm984
    %vm987 = vmand %vm983, %vm985
    %v988 = vperm.slane %v715, 0
    %v989 = vsel %vm986, %v988, -100000.0
    %v990 = vsel %vm987, %v988, -100000.0
    %v991 = vmax.f32 %v989, -100000.0
    %v992 = vmax.f32 %v990, -100000.0
    %vm993 = vcmp.le.s32.totalorder %v966, 1
    %vm994 = vcmp.le.s32.totalorder %v967, 1
    %vm995 = vcmp.ge.s32.totalorder %v980, 1
    %vm996 = vcmp.ge.s32.totalorder %v981, 1
    %vm997 = vmand %vm993, %vm995
    %vm998 = vmand %vm994, %vm996
    %v999 = vperm.slane %v715, 1
    %v1000 = vsel %vm997, %v999, -100000.0
    %v1001 = vsel %vm998, %v999, -100000.0
    %v1002 = vmax.f32 %v991, %v1000
    %v1003 = vmax.f32 %v992, %v1001
    %vm1004 = vcmp.le.s32.totalorder %v966, 2
    %vm1005 = vcmp.le.s32.totalorder %v967, 2
    %vm1006 = vcmp.ge.s32.totalorder %v980, 2
    %vm1007 = vcmp.ge.s32.totalorder %v981, 2
    %vm1008 = vmand %vm1004, %vm1006
    %vm1009 = vmand %vm1005, %vm1007
    %v1010 = vperm.slane %v715, 2
    %v1011 = vsel %vm1008, %v1010, -100000.0
    %v1012 = vsel %vm1009, %v1010, -100000.0
    %v1013 = vmax.f32 %v1002, %v1011
    %v1014 = vmax.f32 %v1003, %v1012
    %vm1015 = vcmp.le.s32.totalorder %v966, 3
    %vm1016 = vcmp.le.s32.totalorder %v967, 3
    %vm1017 = vcmp.ge.s32.totalorder %v980, 3
    %vm1018 = vcmp.ge.s32.totalorder %v981, 3
    %vm1019 = vmand %vm1015, %vm1017
    %vm1020 = vmand %vm1016, %vm1018
    %v1021 = vperm.slane %v715, 3
    %v1022 = vsel %vm1019, %v1021, -100000.0
    %v1023 = vsel %vm1020, %v1021, -100000.0
    %v1024 = vmax.f32 %v1013, %v1022
    %v1025 = vmax.f32 %v1014, %v1023
    %vm1026 = vcmp.le.s32.totalorder %v966, 4
    %vm1027 = vcmp.le.s32.totalorder %v967, 4
    %vm1028 = vcmp.ge.s32.totalorder %v980, 4
    %vm1029 = vcmp.ge.s32.totalorder %v981, 4
    %vm1030 = vmand %vm1026, %vm1028
    %vm1031 = vmand %vm1027, %vm1029
    %v1032 = vperm.slane %v715, 4
    %v1033 = vsel %vm1030, %v1032, -100000.0
    %v1034 = vsel %vm1031, %v1032, -100000.0
    %v1035 = vmax.f32 %v1024, %v1033
    %v1036 = vmax.f32 %v1025, %v1034
    %vm1037 = vcmp.le.s32.totalorder %v966, 5
    %vm1038 = vcmp.le.s32.totalorder %v967, 5
    %vm1039 = vcmp.ge.s32.totalorder %v980, 5
    %vm1040 = vcmp.ge.s32.totalorder %v981, 5
    %vm1041 = vmand %vm1037, %vm1039
    %vm1042 = vmand %vm1038, %vm1040
    %v1043 = vperm.slane %v715, 5
    %v1044 = vsel %vm1041, %v1043, -100000.0
    %v1045 = vsel %vm1042, %v1043, -100000.0
    %v1046 = vmax.f32 %v1035, %v1044
    %v1047 = vmax.f32 %v1036, %v1045
    %vm1048 = vcmp.le.s32.totalorder %v966, 6
    %vm1049 = vcmp.le.s32.totalorder %v967, 6
    %vm1050 = vcmp.ge.s32.totalorder %v980, 6
    %vm1051 = vcmp.ge.s32.totalorder %v981, 6
    %vm1052 = vmand %vm1048, %vm1050
    %vm1053 = vmand %vm1049, %vm1051
    %v1054 = vperm.slane %v715, 6
    %v1055 = vsel %vm1052, %v1054, -100000.0
    %v1056 = vsel %vm1053, %v1054, -100000.0
    %v1057 = vmax.f32 %v1046, %v1055
    %v1058 = vmax.f32 %v1047, %v1056
    %vm1059 = vcmp.le.s32.totalorder %v966, 7
    %vm1060 = vcmp.le.s32.totalorder %v967, 7
    %vm1061 = vcmp.ge.s32.totalorder %v980, 7
    %vm1062 = vcmp.ge.s32.totalorder %v981, 7
    %vm1063 = vmand %vm1059, %vm1061
    %vm1064 = vmand %vm1060, %vm1062
    %v1065 = vperm.slane %v715, 7
    %v1066 = vsel %vm1063, %v1065, -100000.0
    %v1067 = vsel %vm1064, %v1065, -100000.0
    %v1068 = vmax.f32 %v1057, %v1066
    %v1069 = vmax.f32 %v1058, %v1067
    %vm1070 = vcmp.le.s32.totalorder %v966, 8
    %vm1071 = vcmp.le.s32.totalorder %v967, 8
    %vm1072 = vcmp.ge.s32.totalorder %v980, 8
    %vm1073 = vcmp.ge.s32.totalorder %v981, 8
    %vm1074 = vmand %vm1070, %vm1072
    %vm1075 = vmand %vm1071, %vm1073
    %v1076 = vperm.slane %v717, 0
    %v1077 = vsel %vm1074, %v1076, -100000.0
    %v1078 = vsel %vm1075, %v1076, -100000.0
    %v1079 = vmax.f32 %v1068, %v1077
    %v1080 = vmax.f32 %v1069, %v1078
    %vm1081 = vcmp.le.s32.totalorder %v966, 9
    %vm1082 = vcmp.le.s32.totalorder %v967, 9
    %vm1083 = vcmp.ge.s32.totalorder %v980, 9
    %vm1084 = vcmp.ge.s32.totalorder %v981, 9
    %vm1085 = vmand %vm1081, %vm1083
    %vm1086 = vmand %vm1082, %vm1084
    %v1087 = vperm.slane %v717, 1
    %v1088 = vsel %vm1085, %v1087, -100000.0
    %v1089 = vsel %vm1086, %v1087, -100000.0
    %v1090 = vmax.f32 %v1079, %v1088
    %v1091 = vmax.f32 %v1080, %v1089
    %vm1092 = vcmp.le.s32.totalorder %v966, 10
    %vm1093 = vcmp.le.s32.totalorder %v967, 10
    %vm1094 = vcmp.ge.s32.totalorder %v980, 10
    %vm1095 = vcmp.ge.s32.totalorder %v981, 10
    %vm1096 = vmand %vm1092, %vm1094
    %vm1097 = vmand %vm1093, %vm1095
    %v1098 = vperm.slane %v717, 2
    %v1099 = vsel %vm1096, %v1098, -100000.0
    %v1100 = vsel %vm1097, %v1098, -100000.0
    %v1101 = vmax.f32 %v1090, %v1099
    %v1102 = vmax.f32 %v1091, %v1100
    %vm1103 = vcmp.le.s32.totalorder %v966, 11
    %vm1104 = vcmp.le.s32.totalorder %v967, 11
    %vm1105 = vcmp.ge.s32.totalorder %v980, 11
    %vm1106 = vcmp.ge.s32.totalorder %v981, 11
    %vm1107 = vmand %vm1103, %vm1105
    %vm1108 = vmand %vm1104, %vm1106
    %v1109 = vperm.slane %v717, 3
    %v1110 = vsel %vm1107, %v1109, -100000.0
    %v1111 = vsel %vm1108, %v1109, -100000.0
    %v1112 = vmax.f32 %v1101, %v1110
    %v1113 = vmax.f32 %v1102, %v1111
    %vm1114 = vcmp.le.s32.totalorder %v966, 12
    %vm1115 = vcmp.le.s32.totalorder %v967, 12
    %vm1116 = vcmp.ge.s32.totalorder %v980, 12
    %vm1117 = vcmp.ge.s32.totalorder %v981, 12
    %vm1118 = vmand %vm1114, %vm1116
    %vm1119 = vmand %vm1115, %vm1117
    %v1120 = vperm.slane %v717, 4
    %v1121 = vsel %vm1118, %v1120, -100000.0
    %v1122 = vsel %vm1119, %v1120, -100000.0
    %v1123 = vmax.f32 %v1112, %v1121
    %v1124 = vmax.f32 %v1113, %v1122
    %vm1125 = vcmp.le.s32.totalorder %v966, 13
    %vm1126 = vcmp.le.s32.totalorder %v967, 13
    %vm1127 = vcmp.ge.s32.totalorder %v980, 13
    %vm1128 = vcmp.ge.s32.totalorder %v981, 13
    %vm1129 = vmand %vm1125, %vm1127
    %vm1130 = vmand %vm1126, %vm1128
    %v1131 = vperm.slane %v717, 5
    %v1132 = vsel %vm1129, %v1131, -100000.0
    %v1133 = vsel %vm1130, %v1131, -100000.0
    %v1134 = vmax.f32 %v1123, %v1132
    %v1135 = vmax.f32 %v1124, %v1133
    %vm1136 = vcmp.le.s32.totalorder %v966, 14
    %vm1137 = vcmp.le.s32.totalorder %v967, 14
    %vm1138 = vcmp.ge.s32.totalorder %v980, 14
    %vm1139 = vcmp.ge.s32.totalorder %v981, 14
    %vm1140 = vmand %vm1136, %vm1138
    %vm1141 = vmand %vm1137, %vm1139
    %v1142 = vperm.slane %v717, 6
    %v1143 = vsel %vm1140, %v1142, -100000.0
    %v1144 = vsel %vm1141, %v1142, -100000.0
    %v1145 = vmax.f32 %v1134, %v1143
    %v1146 = vmax.f32 %v1135, %v1144
    %vm1147 = vcmp.le.s32.totalorder %v966, 15
    %vm1148 = vcmp.le.s32.totalorder %v967, 15
    %vm1149 = vcmp.ge.s32.totalorder %v980, 15
    %vm1150 = vcmp.ge.s32.totalorder %v981, 15
    %vm1151 = vmand %vm1147, %vm1149
    %vm1152 = vmand %vm1148, %vm1150
    %v1153 = vperm.slane %v717, 7
    %v1154 = vsel %vm1151, %v1153, -100000.0
    %v1155 = vsel %vm1152, %v1153, -100000.0
    %v1156 = vmax.f32 %v1145, %v1154
    %v1157 = vmax.f32 %v1146, %v1155
    %v1158 = vfloor.f32 %v727
    %v1159 = vfloor.f32 %v728
    %v1160 = vcvt.f32.s32.to.zero.pseudo %v1158
    %v1161 = vcvt.f32.s32.to.zero.pseudo %v1159
    %vm1162 = vcmp.lt.s32.totalorder %v744, 32
    %1163 = vset.pattern.permute.xlu0 0
    %1164 = vperm.xlu0 %1163, %v1160
    %v1165 = vpop.permute.xlu0 %1164
    %1166 = vset.pattern.permute.xlu0 0
    %1167 = vperm.xlu0 %1166, %v1161
    %v1168 = vpop.permute.xlu0 %1167
    %1169 = vset.pattern.permute.xlu0 2
    %1170 = vperm.xlu0 %1169, %v1160
    %v1171 = vpop.permute.xlu0 %1170
    %1172 = vset.pattern.permute.xlu0 2
    %1173 = vperm.xlu0 %1172, %v1161
    %v1174 = vpop.permute.xlu0 %1173
    %v1175 = vsel %vm1162, %v1165, %v1171
    %v1176 = vsel %vm1162, %v1168, %v1174
    %1177 = vset.pattern.permute.xlu0 1
    %1178 = vperm.xlu0 %1177, %v1160
    %v1179 = vpop.permute.xlu0 %1178
    %1180 = vset.pattern.permute.xlu0 1
    %1181 = vperm.xlu0 %1180, %v1161
    %v1182 = vpop.permute.xlu0 %1181
    %1183 = vset.pattern.permute.xlu0 3
    %1184 = vperm.xlu0 %1183, %v1160
    %v1185 = vpop.permute.xlu0 %1184
    %1186 = vset.pattern.permute.xlu0 3
    %1187 = vperm.xlu0 %1186, %v1161
    %v1188 = vpop.permute.xlu0 %1187
    %v1189 = vsel %vm1162, %v1179, %v1185
    %v1190 = vsel %vm1162, %v1182, %v1188
    %vm1191 = vcmp.le.s32.totalorder %v1175, 0
    %vm1192 = vcmp.le.s32.totalorder %v1176, 0
    %vm1193 = vcmp.ge.s32.totalorder %v1189, 0
    %vm1194 = vcmp.ge.s32.totalorder %v1190, 0
    %vm1195 = vmand %vm1191, %vm1193
    %vm1196 = vmand %vm1192, %vm1194
    %v1197 = vperm.slane %v731, 0
    %v1198 = vsel %vm1195, %v1197, -100000.0
    %v1199 = vsel %vm1196, %v1197, -100000.0
    %v1200 = vmax.f32 %v1198, -100000.0
    %v1201 = vmax.f32 %v1199, -100000.0
    %vm1202 = vcmp.le.s32.totalorder %v1175, 1
    %vm1203 = vcmp.le.s32.totalorder %v1176, 1
    %vm1204 = vcmp.ge.s32.totalorder %v1189, 1
    %vm1205 = vcmp.ge.s32.totalorder %v1190, 1
    %vm1206 = vmand %vm1202, %vm1204
    %vm1207 = vmand %vm1203, %vm1205
    %v1208 = vperm.slane %v731, 1
    %v1209 = vsel %vm1206, %v1208, -100000.0
    %v1210 = vsel %vm1207, %v1208, -100000.0
    %v1211 = vmax.f32 %v1200, %v1209
    %v1212 = vmax.f32 %v1201, %v1210
    %vm1213 = vcmp.le.s32.totalorder %v1175, 2
    %vm1214 = vcmp.le.s32.totalorder %v1176, 2
    %vm1215 = vcmp.ge.s32.totalorder %v1189, 2
    %vm1216 = vcmp.ge.s32.totalorder %v1190, 2
    %vm1217 = vmand %vm1213, %vm1215
    %vm1218 = vmand %vm1214, %vm1216
    %v1219 = vperm.slane %v731, 2
    %v1220 = vsel %vm1217, %v1219, -100000.0
    %v1221 = vsel %vm1218, %v1219, -100000.0
    %v1222 = vmax.f32 %v1211, %v1220
    %v1223 = vmax.f32 %v1212, %v1221
    %vm1224 = vcmp.le.s32.totalorder %v1175, 3
    %vm1225 = vcmp.le.s32.totalorder %v1176, 3
    %vm1226 = vcmp.ge.s32.totalorder %v1189, 3
    %vm1227 = vcmp.ge.s32.totalorder %v1190, 3
    %vm1228 = vmand %vm1224, %vm1226
    %vm1229 = vmand %vm1225, %vm1227
    %v1230 = vperm.slane %v731, 3
    %v1231 = vsel %vm1228, %v1230, -100000.0
    %v1232 = vsel %vm1229, %v1230, -100000.0
    %v1233 = vmax.f32 %v1222, %v1231
    %v1234 = vmax.f32 %v1223, %v1232
    %vm1235 = vcmp.le.s32.totalorder %v1175, 4
    %vm1236 = vcmp.le.s32.totalorder %v1176, 4
    %vm1237 = vcmp.ge.s32.totalorder %v1189, 4
    %vm1238 = vcmp.ge.s32.totalorder %v1190, 4
    %vm1239 = vmand %vm1235, %vm1237
    %vm1240 = vmand %vm1236, %vm1238
    %v1241 = vperm.slane %v731, 4
    %v1242 = vsel %vm1239, %v1241, -100000.0
    %v1243 = vsel %vm1240, %v1241, -100000.0
    %v1244 = vmax.f32 %v1233, %v1242
    %v1245 = vmax.f32 %v1234, %v1243
    %vm1246 = vcmp.le.s32.totalorder %v1175, 5
    %vm1247 = vcmp.le.s32.totalorder %v1176, 5
    %vm1248 = vcmp.ge.s32.totalorder %v1189, 5
    %vm1249 = vcmp.ge.s32.totalorder %v1190, 5
    %vm1250 = vmand %vm1246, %vm1248
    %vm1251 = vmand %vm1247, %vm1249
    %v1252 = vperm.slane %v731, 5
    %v1253 = vsel %vm1250, %v1252, -100000.0
    %v1254 = vsel %vm1251, %v1252, -100000.0
    %v1255 = vmax.f32 %v1244, %v1253
    %v1256 = vmax.f32 %v1245, %v1254
    %vm1257 = vcmp.le.s32.totalorder %v1175, 6
    %vm1258 = vcmp.le.s32.totalorder %v1176, 6
    %vm1259 = vcmp.ge.s32.totalorder %v1189, 6
    %vm1260 = vcmp.ge.s32.totalorder %v1190, 6
    %vm1261 = vmand %vm1257, %vm1259
    %vm1262 = vmand %vm1258, %vm1260
    %v1263 = vperm.slane %v731, 6
    %v1264 = vsel %vm1261, %v1263, -100000.0
    %v1265 = vsel %vm1262, %v1263, -100000.0
    %v1266 = vmax.f32 %v1255, %v1264
    %v1267 = vmax.f32 %v1256, %v1265
    %vm1268 = vcmp.le.s32.totalorder %v1175, 7
    %vm1269 = vcmp.le.s32.totalorder %v1176, 7
    %vm1270 = vcmp.ge.s32.totalorder %v1189, 7
    %vm1271 = vcmp.ge.s32.totalorder %v1190, 7
    %vm1272 = vmand %vm1268, %vm1270
    %vm1273 = vmand %vm1269, %vm1271
    %v1274 = vperm.slane %v731, 7
    %v1275 = vsel %vm1272, %v1274, -100000.0
    %v1276 = vsel %vm1273, %v1274, -100000.0
    %v1277 = vmax.f32 %v1266, %v1275
    %v1278 = vmax.f32 %v1267, %v1276
    %vm1279 = vcmp.le.s32.totalorder %v1175, 8
    %vm1280 = vcmp.le.s32.totalorder %v1176, 8
    %vm1281 = vcmp.ge.s32.totalorder %v1189, 8
    %vm1282 = vcmp.ge.s32.totalorder %v1190, 8
    %vm1283 = vmand %vm1279, %vm1281
    %vm1284 = vmand %vm1280, %vm1282
    %v1285 = vperm.slane %v732, 0
    %v1286 = vsel %vm1283, %v1285, -100000.0
    %v1287 = vsel %vm1284, %v1285, -100000.0
    %v1288 = vmax.f32 %v1277, %v1286
    %v1289 = vmax.f32 %v1278, %v1287
    %vm1290 = vcmp.le.s32.totalorder %v1175, 9
    %vm1291 = vcmp.le.s32.totalorder %v1176, 9
    %vm1292 = vcmp.ge.s32.totalorder %v1189, 9
    %vm1293 = vcmp.ge.s32.totalorder %v1190, 9
    %vm1294 = vmand %vm1290, %vm1292
    %vm1295 = vmand %vm1291, %vm1293
    %v1296 = vperm.slane %v732, 1
    %v1297 = vsel %vm1294, %v1296, -100000.0
    %v1298 = vsel %vm1295, %v1296, -100000.0
    %v1299 = vmax.f32 %v1288, %v1297
    %v1300 = vmax.f32 %v1289, %v1298
    %vm1301 = vcmp.le.s32.totalorder %v1175, 10
    %vm1302 = vcmp.le.s32.totalorder %v1176, 10
    %vm1303 = vcmp.ge.s32.totalorder %v1189, 10
    %vm1304 = vcmp.ge.s32.totalorder %v1190, 10
    %vm1305 = vmand %vm1301, %vm1303
    %vm1306 = vmand %vm1302, %vm1304
    %v1307 = vperm.slane %v732, 2
    %v1308 = vsel %vm1305, %v1307, -100000.0
    %v1309 = vsel %vm1306, %v1307, -100000.0
    %v1310 = vmax.f32 %v1299, %v1308
    %v1311 = vmax.f32 %v1300, %v1309
    %vm1312 = vcmp.le.s32.totalorder %v1175, 11
    %vm1313 = vcmp.le.s32.totalorder %v1176, 11
    %vm1314 = vcmp.ge.s32.totalorder %v1189, 11
    %vm1315 = vcmp.ge.s32.totalorder %v1190, 11
    %vm1316 = vmand %vm1312, %vm1314
    %vm1317 = vmand %vm1313, %vm1315
    %v1318 = vperm.slane %v732, 3
    %v1319 = vsel %vm1316, %v1318, -100000.0
    %v1320 = vsel %vm1317, %v1318, -100000.0
    %v1321 = vmax.f32 %v1310, %v1319
    %v1322 = vmax.f32 %v1311, %v1320
    %vm1323 = vcmp.le.s32.totalorder %v1175, 12
    %vm1324 = vcmp.le.s32.totalorder %v1176, 12
    %vm1325 = vcmp.ge.s32.totalorder %v1189, 12
    %vm1326 = vcmp.ge.s32.totalorder %v1190, 12
    %vm1327 = vmand %vm1323, %vm1325
    %vm1328 = vmand %vm1324, %vm1326
    %v1329 = vperm.slane %v732, 4
    %v1330 = vsel %vm1327, %v1329, -100000.0
    %v1331 = vsel %vm1328, %v1329, -100000.0
    %v1332 = vmax.f32 %v1321, %v1330
    %v1333 = vmax.f32 %v1322, %v1331
    %vm1334 = vcmp.le.s32.totalorder %v1175, 13
    %vm1335 = vcmp.le.s32.totalorder %v1176, 13
    %vm1336 = vcmp.ge.s32.totalorder %v1189, 13
    %vm1337 = vcmp.ge.s32.totalorder %v1190, 13
    %vm1338 = vmand %vm1334, %vm1336
    %vm1339 = vmand %vm1335, %vm1337
    %v1340 = vperm.slane %v732, 5
    %v1341 = vsel %vm1338, %v1340, -100000.0
    %v1342 = vsel %vm1339, %v1340, -100000.0
    %v1343 = vmax.f32 %v1332, %v1341
    %v1344 = vmax.f32 %v1333, %v1342
    %vm1345 = vcmp.le.s32.totalorder %v1175, 14
    %vm1346 = vcmp.le.s32.totalorder %v1176, 14
    %vm1347 = vcmp.ge.s32.totalorder %v1189, 14
    %vm1348 = vcmp.ge.s32.totalorder %v1190, 14
    %vm1349 = vmand %vm1345, %vm1347
    %vm1350 = vmand %vm1346, %vm1348
    %v1351 = vperm.slane %v732, 6
    %v1352 = vsel %vm1349, %v1351, -100000.0
    %v1353 = vsel %vm1350, %v1351, -100000.0
    %v1354 = vmax.f32 %v1343, %v1352
    %v1355 = vmax.f32 %v1344, %v1353
    %vm1356 = vcmp.le.s32.totalorder %v1175, 15
    %vm1357 = vcmp.le.s32.totalorder %v1176, 15
    %vm1358 = vcmp.ge.s32.totalorder %v1189, 15
    %vm1359 = vcmp.ge.s32.totalorder %v1190, 15
    %vm1360 = vmand %vm1356, %vm1358
    %vm1361 = vmand %vm1357, %vm1359
    %v1362 = vperm.slane %v732, 7
    %v1363 = vsel %vm1360, %v1362, -100000.0
    %v1364 = vsel %vm1361, %v1362, -100000.0
    %v1365 = vmax.f32 %v1354, %v1363
    %v1366 = vmax.f32 %v1355, %v1364
    %vm1367 = vcmp.le.s32.totalorder %v1175, 16
    %vm1368 = vcmp.le.s32.totalorder %v1176, 16
    %vm1369 = vcmp.ge.s32.totalorder %v1189, 16
    %vm1370 = vcmp.ge.s32.totalorder %v1190, 16
    %vm1371 = vmand %vm1367, %vm1369
    %vm1372 = vmand %vm1368, %vm1370
    %v1373 = vperm.slane %v733, 0
    %v1374 = vsel %vm1371, %v1373, -100000.0
    %v1375 = vsel %vm1372, %v1373, -100000.0
    %v1376 = vmax.f32 %v1365, %v1374
    %v1377 = vmax.f32 %v1366, %v1375
    %vm1378 = vcmp.le.s32.totalorder %v1175, 17
    %vm1379 = vcmp.le.s32.totalorder %v1176, 17
    %vm1380 = vcmp.ge.s32.totalorder %v1189, 17
    %vm1381 = vcmp.ge.s32.totalorder %v1190, 17
    %vm1382 = vmand %vm1378, %vm1380
    %vm1383 = vmand %vm1379, %vm1381
    %v1384 = vperm.slane %v733, 1
    %v1385 = vsel %vm1382, %v1384, -100000.0
    %v1386 = vsel %vm1383, %v1384, -100000.0
    %v1387 = vmax.f32 %v1376, %v1385
    %v1388 = vmax.f32 %v1377, %v1386
    %vm1389 = vcmp.le.s32.totalorder %v1175, 18
    %vm1390 = vcmp.le.s32.totalorder %v1176, 18
    %vm1391 = vcmp.ge.s32.totalorder %v1189, 18
    %vm1392 = vcmp.ge.s32.totalorder %v1190, 18
    %vm1393 = vmand %vm1389, %vm1391
    %vm1394 = vmand %vm1390, %vm1392
    %v1395 = vperm.slane %v733, 2
    %v1396 = vsel %vm1393, %v1395, -100000.0
    %v1397 = vsel %vm1394, %v1395, -100000.0
    %v1398 = vmax.f32 %v1387, %v1396
    %v1399 = vmax.f32 %v1388, %v1397
    %vm1400 = vcmp.le.s32.totalorder %v1175, 19
    %vm1401 = vcmp.le.s32.totalorder %v1176, 19
    %vm1402 = vcmp.ge.s32.totalorder %v1189, 19
    %vm1403 = vcmp.ge.s32.totalorder %v1190, 19
    %vm1404 = vmand %vm1400, %vm1402
    %vm1405 = vmand %vm1401, %vm1403
    %v1406 = vperm.slane %v733, 3
    %v1407 = vsel %vm1404, %v1406, -100000.0
    %v1408 = vsel %vm1405, %v1406, -100000.0
    %v1409 = vmax.f32 %v1398, %v1407
    %v1410 = vmax.f32 %v1399, %v1408
    %vm1411 = vcmp.le.s32.totalorder %v1175, 20
    %vm1412 = vcmp.le.s32.totalorder %v1176, 20
    %vm1413 = vcmp.ge.s32.totalorder %v1189, 20
    %vm1414 = vcmp.ge.s32.totalorder %v1190, 20
    %vm1415 = vmand %vm1411, %vm1413
    %vm1416 = vmand %vm1412, %vm1414
    %v1417 = vperm.slane %v733, 4
    %v1418 = vsel %vm1415, %v1417, -100000.0
    %v1419 = vsel %vm1416, %v1417, -100000.0
    %v1420 = vmax.f32 %v1409, %v1418
    %v1421 = vmax.f32 %v1410, %v1419
    %vm1422 = vcmp.le.s32.totalorder %v1175, 21
    %vm1423 = vcmp.le.s32.totalorder %v1176, 21
    %vm1424 = vcmp.ge.s32.totalorder %v1189, 21
    %vm1425 = vcmp.ge.s32.totalorder %v1190, 21
    %vm1426 = vmand %vm1422, %vm1424
    %vm1427 = vmand %vm1423, %vm1425
    %v1428 = vperm.slane %v733, 5
    %v1429 = vsel %vm1426, %v1428, -100000.0
    %v1430 = vsel %vm1427, %v1428, -100000.0
    %v1431 = vmax.f32 %v1420, %v1429
    %v1432 = vmax.f32 %v1421, %v1430
    %vm1433 = vcmp.le.s32.totalorder %v1175, 22
    %vm1434 = vcmp.le.s32.totalorder %v1176, 22
    %vm1435 = vcmp.ge.s32.totalorder %v1189, 22
    %vm1436 = vcmp.ge.s32.totalorder %v1190, 22
    %vm1437 = vmand %vm1433, %vm1435
    %vm1438 = vmand %vm1434, %vm1436
    %v1439 = vperm.slane %v733, 6
    %v1440 = vsel %vm1437, %v1439, -100000.0
    %v1441 = vsel %vm1438, %v1439, -100000.0
    %v1442 = vmax.f32 %v1431, %v1440
    %v1443 = vmax.f32 %v1432, %v1441
    %vm1444 = vcmp.le.s32.totalorder %v1175, 23
    %vm1445 = vcmp.le.s32.totalorder %v1176, 23
    %vm1446 = vcmp.ge.s32.totalorder %v1189, 23
    %vm1447 = vcmp.ge.s32.totalorder %v1190, 23
    %vm1448 = vmand %vm1444, %vm1446
    %vm1449 = vmand %vm1445, %vm1447
    %v1450 = vperm.slane %v733, 7
    %v1451 = vsel %vm1448, %v1450, -100000.0
    %v1452 = vsel %vm1449, %v1450, -100000.0
    %v1453 = vmax.f32 %v1442, %v1451
    %v1454 = vmax.f32 %v1443, %v1452
    %vm1455 = vcmp.le.s32.totalorder %v1175, 24
    %vm1456 = vcmp.le.s32.totalorder %v1176, 24
    %vm1457 = vcmp.ge.s32.totalorder %v1189, 24
    %vm1458 = vcmp.ge.s32.totalorder %v1190, 24
    %vm1459 = vmand %vm1455, %vm1457
    %vm1460 = vmand %vm1456, %vm1458
    %v1461 = vperm.slane %v734, 0
    %v1462 = vsel %vm1459, %v1461, -100000.0
    %v1463 = vsel %vm1460, %v1461, -100000.0
    %v1464 = vmax.f32 %v1453, %v1462
    %v1465 = vmax.f32 %v1454, %v1463
    %vm1466 = vcmp.le.s32.totalorder %v1175, 25
    %vm1467 = vcmp.le.s32.totalorder %v1176, 25
    %vm1468 = vcmp.ge.s32.totalorder %v1189, 25
    %vm1469 = vcmp.ge.s32.totalorder %v1190, 25
    %vm1470 = vmand %vm1466, %vm1468
    %vm1471 = vmand %vm1467, %vm1469
    %v1472 = vperm.slane %v734, 1
    %v1473 = vsel %vm1470, %v1472, -100000.0
    %v1474 = vsel %vm1471, %v1472, -100000.0
    %v1475 = vmax.f32 %v1464, %v1473
    %v1476 = vmax.f32 %v1465, %v1474
    %vm1477 = vcmp.le.s32.totalorder %v1175, 26
    %vm1478 = vcmp.le.s32.totalorder %v1176, 26
    %vm1479 = vcmp.ge.s32.totalorder %v1189, 26
    %vm1480 = vcmp.ge.s32.totalorder %v1190, 26
    %vm1481 = vmand %vm1477, %vm1479
    %vm1482 = vmand %vm1478, %vm1480
    %v1483 = vperm.slane %v734, 2
    %v1484 = vsel %vm1481, %v1483, -100000.0
    %v1485 = vsel %vm1482, %v1483, -100000.0
    %v1486 = vmax.f32 %v1475, %v1484
    %v1487 = vmax.f32 %v1476, %v1485
    %vm1488 = vcmp.le.s32.totalorder %v1175, 27
    %vm1489 = vcmp.le.s32.totalorder %v1176, 27
    %vm1490 = vcmp.ge.s32.totalorder %v1189, 27
    %vm1491 = vcmp.ge.s32.totalorder %v1190, 27
    %vm1492 = vmand %vm1488, %vm1490
    %vm1493 = vmand %vm1489, %vm1491
    %v1494 = vperm.slane %v734, 3
    %v1495 = vsel %vm1492, %v1494, -100000.0
    %v1496 = vsel %vm1493, %v1494, -100000.0
    %v1497 = vmax.f32 %v1486, %v1495
    %v1498 = vmax.f32 %v1487, %v1496
    %vm1499 = vcmp.le.s32.totalorder %v1175, 28
    %vm1500 = vcmp.le.s32.totalorder %v1176, 28
    %vm1501 = vcmp.ge.s32.totalorder %v1189, 28
    %vm1502 = vcmp.ge.s32.totalorder %v1190, 28
    %vm1503 = vmand %vm1499, %vm1501
    %vm1504 = vmand %vm1500, %vm1502
    %v1505 = vperm.slane %v734, 4
    %v1506 = vsel %vm1503, %v1505, -100000.0
    %v1507 = vsel %vm1504, %v1505, -100000.0
    %v1508 = vmax.f32 %v1497, %v1506
    %v1509 = vmax.f32 %v1498, %v1507
    %vm1510 = vcmp.le.s32.totalorder %v1175, 29
    %vm1511 = vcmp.le.s32.totalorder %v1176, 29
    %vm1512 = vcmp.ge.s32.totalorder %v1189, 29
    %vm1513 = vcmp.ge.s32.totalorder %v1190, 29
    %vm1514 = vmand %vm1510, %vm1512
    %vm1515 = vmand %vm1511, %vm1513
    %v1516 = vperm.slane %v734, 5
    %v1517 = vsel %vm1514, %v1516, -100000.0
    %v1518 = vsel %vm1515, %v1516, -100000.0
    %v1519 = vmax.f32 %v1508, %v1517
    %v1520 = vmax.f32 %v1509, %v1518
    %vm1521 = vcmp.le.s32.totalorder %v1175, 30
    %vm1522 = vcmp.le.s32.totalorder %v1176, 30
    %vm1523 = vcmp.ge.s32.totalorder %v1189, 30
    %vm1524 = vcmp.ge.s32.totalorder %v1190, 30
    %vm1525 = vmand %vm1521, %vm1523
    %vm1526 = vmand %vm1522, %vm1524
    %v1527 = vperm.slane %v734, 6
    %v1528 = vsel %vm1525, %v1527, -100000.0
    %v1529 = vsel %vm1526, %v1527, -100000.0
    %v1530 = vmax.f32 %v1519, %v1528
    %v1531 = vmax.f32 %v1520, %v1529
    %vm1532 = vcmp.le.s32.totalorder %v1175, 31
    %vm1533 = vcmp.le.s32.totalorder %v1176, 31
    %vm1534 = vcmp.ge.s32.totalorder %v1189, 31
    %vm1535 = vcmp.ge.s32.totalorder %v1190, 31
    %vm1536 = vmand %vm1532, %vm1534
    %vm1537 = vmand %vm1533, %vm1535
    %v1538 = vperm.slane %v734, 7
    %v1539 = vsel %vm1536, %v1538, -100000.0
    %v1540 = vsel %vm1537, %v1538, -100000.0
    %v1541 = vmax.f32 %v1530, %v1539
    %v1542 = vmax.f32 %v1531, %v1540
    %v1543 = vfloor.f32 %v729
    %v1544 = vfloor.f32 %v730
    %v1545 = vcvt.f32.s32.to.zero.pseudo %v1543
    %v1546 = vcvt.f32.s32.to.zero.pseudo %v1544
    %1547 = vset.pattern.permute.xlu0 0
    %1548 = vperm.xlu0 %1547, %v1545
    %v1549 = vpop.permute.xlu0 %1548
    %1550 = vset.pattern.permute.xlu0 0
    %1551 = vperm.xlu0 %1550, %v1546
    %v1552 = vpop.permute.xlu0 %1551
    %1553 = vset.pattern.permute.xlu0 2
    %1554 = vperm.xlu0 %1553, %v1545
    %v1555 = vpop.permute.xlu0 %1554
    %1556 = vset.pattern.permute.xlu0 2
    %1557 = vperm.xlu0 %1556, %v1546
    %v1558 = vpop.permute.xlu0 %1557
    %v1559 = vsel %vm1162, %v1549, %v1555
    %v1560 = vsel %vm1162, %v1552, %v1558
    %1561 = vset.pattern.permute.xlu0 1
    %1562 = vperm.xlu0 %1561, %v1545
    %v1563 = vpop.permute.xlu0 %1562
    %1564 = vset.pattern.permute.xlu0 1
    %1565 = vperm.xlu0 %1564, %v1546
    %v1566 = vpop.permute.xlu0 %1565
    %1567 = vset.pattern.permute.xlu0 3
    %1568 = vperm.xlu0 %1567, %v1545
    %v1569 = vpop.permute.xlu0 %1568
    %1570 = vset.pattern.permute.xlu0 3
    %1571 = vperm.xlu0 %1570, %v1546
    %v1572 = vpop.permute.xlu0 %1571
    %v1573 = vsel %vm1162, %v1563, %v1569
    %v1574 = vsel %vm1162, %v1566, %v1572
    %vm1575 = vcmp.le.s32.totalorder %v1559, 0
    %vm1576 = vcmp.le.s32.totalorder %v1560, 0
    %vm1577 = vcmp.ge.s32.totalorder %v1573, 0
    %vm1578 = vcmp.ge.s32.totalorder %v1574, 0
    %vm1579 = vmand %vm1575, %vm1577
    %vm1580 = vmand %vm1576, %vm1578
    %v1581 = vperm.slane %v735, 0
    %v1582 = vsel %vm1579, %v1581, -100000.0
    %v1583 = vsel %vm1580, %v1581, -100000.0
    %v1584 = vmax.f32 %v1582, -100000.0
    %v1585 = vmax.f32 %v1583, -100000.0
    %vm1586 = vcmp.le.s32.totalorder %v1559, 1
    %vm1587 = vcmp.le.s32.totalorder %v1560, 1
    %vm1588 = vcmp.ge.s32.totalorder %v1573, 1
    %vm1589 = vcmp.ge.s32.totalorder %v1574, 1
    %vm1590 = vmand %vm1586, %vm1588
    %vm1591 = vmand %vm1587, %vm1589
    %v1592 = vperm.slane %v735, 1
    %v1593 = vsel %vm1590, %v1592, -100000.0
    %v1594 = vsel %vm1591, %v1592, -100000.0
    %v1595 = vmax.f32 %v1584, %v1593
    %v1596 = vmax.f32 %v1585, %v1594
    %vm1597 = vcmp.le.s32.totalorder %v1559, 2
    %vm1598 = vcmp.le.s32.totalorder %v1560, 2
    %vm1599 = vcmp.ge.s32.totalorder %v1573, 2
    %vm1600 = vcmp.ge.s32.totalorder %v1574, 2
    %vm1601 = vmand %vm1597, %vm1599
    %vm1602 = vmand %vm1598, %vm1600
    %v1603 = vperm.slane %v735, 2
    %v1604 = vsel %vm1601, %v1603, -100000.0
    %v1605 = vsel %vm1602, %v1603, -100000.0
    %v1606 = vmax.f32 %v1595, %v1604
    %v1607 = vmax.f32 %v1596, %v1605
    %vm1608 = vcmp.le.s32.totalorder %v1559, 3
    %vm1609 = vcmp.le.s32.totalorder %v1560, 3
    %vm1610 = vcmp.ge.s32.totalorder %v1573, 3
    %vm1611 = vcmp.ge.s32.totalorder %v1574, 3
    %vm1612 = vmand %vm1608, %vm1610
    %vm1613 = vmand %vm1609, %vm1611
    %v1614 = vperm.slane %v735, 3
    %v1615 = vsel %vm1612, %v1614, -100000.0
    %v1616 = vsel %vm1613, %v1614, -100000.0
    %v1617 = vmax.f32 %v1606, %v1615
    %v1618 = vmax.f32 %v1607, %v1616
    %vm1619 = vcmp.le.s32.totalorder %v1559, 4
    %vm1620 = vcmp.le.s32.totalorder %v1560, 4
    %vm1621 = vcmp.ge.s32.totalorder %v1573, 4
    %vm1622 = vcmp.ge.s32.totalorder %v1574, 4
    %vm1623 = vmand %vm1619, %vm1621
    %vm1624 = vmand %vm1620, %vm1622
    %v1625 = vperm.slane %v735, 4
    %v1626 = vsel %vm1623, %v1625, -100000.0
    %v1627 = vsel %vm1624, %v1625, -100000.0
    %v1628 = vmax.f32 %v1617, %v1626
    %v1629 = vmax.f32 %v1618, %v1627
    %vm1630 = vcmp.le.s32.totalorder %v1559, 5
    %vm1631 = vcmp.le.s32.totalorder %v1560, 5
    %vm1632 = vcmp.ge.s32.totalorder %v1573, 5
    %vm1633 = vcmp.ge.s32.totalorder %v1574, 5
    %vm1634 = vmand %vm1630, %vm1632
    %vm1635 = vmand %vm1631, %vm1633
    %v1636 = vperm.slane %v735, 5
    %v1637 = vsel %vm1634, %v1636, -100000.0
    %v1638 = vsel %vm1635, %v1636, -100000.0
    %v1639 = vmax.f32 %v1628, %v1637
    %v1640 = vmax.f32 %v1629, %v1638
    %vm1641 = vcmp.le.s32.totalorder %v1559, 6
    %vm1642 = vcmp.le.s32.totalorder %v1560, 6
    %vm1643 = vcmp.ge.s32.totalorder %v1573, 6
    %vm1644 = vcmp.ge.s32.totalorder %v1574, 6
    %vm1645 = vmand %vm1641, %vm1643
    %vm1646 = vmand %vm1642, %vm1644
    %v1647 = vperm.slane %v735, 6
    %v1648 = vsel %vm1645, %v1647, -100000.0
    %v1649 = vsel %vm1646, %v1647, -100000.0
    %v1650 = vmax.f32 %v1639, %v1648
    %v1651 = vmax.f32 %v1640, %v1649
    %vm1652 = vcmp.le.s32.totalorder %v1559, 7
    %vm1653 = vcmp.le.s32.totalorder %v1560, 7
    %vm1654 = vcmp.ge.s32.totalorder %v1573, 7
    %vm1655 = vcmp.ge.s32.totalorder %v1574, 7
    %vm1656 = vmand %vm1652, %vm1654
    %vm1657 = vmand %vm1653, %vm1655
    %v1658 = vperm.slane %v735, 7
    %v1659 = vsel %vm1656, %v1658, -100000.0
    %v1660 = vsel %vm1657, %v1658, -100000.0
    %v1661 = vmax.f32 %v1650, %v1659
    %v1662 = vmax.f32 %v1651, %v1660
    %vm1663 = vcmp.le.s32.totalorder %v1559, 8
    %vm1664 = vcmp.le.s32.totalorder %v1560, 8
    %vm1665 = vcmp.ge.s32.totalorder %v1573, 8
    %vm1666 = vcmp.ge.s32.totalorder %v1574, 8
    %vm1667 = vmand %vm1663, %vm1665
    %vm1668 = vmand %vm1664, %vm1666
    %v1669 = vperm.slane %v736, 0
    %v1670 = vsel %vm1667, %v1669, -100000.0
    %v1671 = vsel %vm1668, %v1669, -100000.0
    %v1672 = vmax.f32 %v1661, %v1670
    %v1673 = vmax.f32 %v1662, %v1671
    %vm1674 = vcmp.le.s32.totalorder %v1559, 9
    %vm1675 = vcmp.le.s32.totalorder %v1560, 9
    %vm1676 = vcmp.ge.s32.totalorder %v1573, 9
    %vm1677 = vcmp.ge.s32.totalorder %v1574, 9
    %vm1678 = vmand %vm1674, %vm1676
    %vm1679 = vmand %vm1675, %vm1677
    %v1680 = vperm.slane %v736, 1
    %v1681 = vsel %vm1678, %v1680, -100000.0
    %v1682 = vsel %vm1679, %v1680, -100000.0
    %v1683 = vmax.f32 %v1672, %v1681
    %v1684 = vmax.f32 %v1673, %v1682
    %vm1685 = vcmp.le.s32.totalorder %v1559, 10
    %vm1686 = vcmp.le.s32.totalorder %v1560, 10
    %vm1687 = vcmp.ge.s32.totalorder %v1573, 10
    %vm1688 = vcmp.ge.s32.totalorder %v1574, 10
    %vm1689 = vmand %vm1685, %vm1687
    %vm1690 = vmand %vm1686, %vm1688
    %v1691 = vperm.slane %v736, 2
    %v1692 = vsel %vm1689, %v1691, -100000.0
    %v1693 = vsel %vm1690, %v1691, -100000.0
    %v1694 = vmax.f32 %v1683, %v1692
    %v1695 = vmax.f32 %v1684, %v1693
    %vm1696 = vcmp.le.s32.totalorder %v1559, 11
    %vm1697 = vcmp.le.s32.totalorder %v1560, 11
    %vm1698 = vcmp.ge.s32.totalorder %v1573, 11
    %vm1699 = vcmp.ge.s32.totalorder %v1574, 11
    %vm1700 = vmand %vm1696, %vm1698
    %vm1701 = vmand %vm1697, %vm1699
    %v1702 = vperm.slane %v736, 3
    %v1703 = vsel %vm1700, %v1702, -100000.0
    %v1704 = vsel %vm1701, %v1702, -100000.0
    %v1705 = vmax.f32 %v1694, %v1703
    %v1706 = vmax.f32 %v1695, %v1704
    %vm1707 = vcmp.le.s32.totalorder %v1559, 12
    %vm1708 = vcmp.le.s32.totalorder %v1560, 12
    %vm1709 = vcmp.ge.s32.totalorder %v1573, 12
    %vm1710 = vcmp.ge.s32.totalorder %v1574, 12
    %vm1711 = vmand %vm1707, %vm1709
    %vm1712 = vmand %vm1708, %vm1710
    %v1713 = vperm.slane %v736, 4
    %v1714 = vsel %vm1711, %v1713, -100000.0
    %v1715 = vsel %vm1712, %v1713, -100000.0
    %v1716 = vmax.f32 %v1705, %v1714
    %v1717 = vmax.f32 %v1706, %v1715
    %vm1718 = vcmp.le.s32.totalorder %v1559, 13
    %vm1719 = vcmp.le.s32.totalorder %v1560, 13
    %vm1720 = vcmp.ge.s32.totalorder %v1573, 13
    %vm1721 = vcmp.ge.s32.totalorder %v1574, 13
    %vm1722 = vmand %vm1718, %vm1720
    %vm1723 = vmand %vm1719, %vm1721
    %v1724 = vperm.slane %v736, 5
    %v1725 = vsel %vm1722, %v1724, -100000.0
    %v1726 = vsel %vm1723, %v1724, -100000.0
    %v1727 = vmax.f32 %v1716, %v1725
    %v1728 = vmax.f32 %v1717, %v1726
    %vm1729 = vcmp.le.s32.totalorder %v1559, 14
    %vm1730 = vcmp.le.s32.totalorder %v1560, 14
    %vm1731 = vcmp.ge.s32.totalorder %v1573, 14
    %vm1732 = vcmp.ge.s32.totalorder %v1574, 14
    %vm1733 = vmand %vm1729, %vm1731
    %vm1734 = vmand %vm1730, %vm1732
    %v1735 = vperm.slane %v736, 6
    %v1736 = vsel %vm1733, %v1735, -100000.0
    %v1737 = vsel %vm1734, %v1735, -100000.0
    %v1738 = vmax.f32 %v1727, %v1736
    %v1739 = vmax.f32 %v1728, %v1737
    %vm1740 = vcmp.le.s32.totalorder %v1559, 15
    %vm1741 = vcmp.le.s32.totalorder %v1560, 15
    %vm1742 = vcmp.ge.s32.totalorder %v1573, 15
    %vm1743 = vcmp.ge.s32.totalorder %v1574, 15
    %vm1744 = vmand %vm1740, %vm1742
    %vm1745 = vmand %vm1741, %vm1743
    %v1746 = vperm.slane %v736, 7
    %v1747 = vsel %vm1744, %v1746, -100000.0
    %v1748 = vsel %vm1745, %v1746, -100000.0
    %v1749 = vmax.f32 %v1738, %v1747
    %v1750 = vmax.f32 %v1739, %v1748
    %vm1751 = vcmp.le.s32.totalorder %v1559, 16
    %vm1752 = vcmp.le.s32.totalorder %v1560, 16
    %vm1753 = vcmp.ge.s32.totalorder %v1573, 16
    %vm1754 = vcmp.ge.s32.totalorder %v1574, 16
    %vm1755 = vmand %vm1751, %vm1753
    %vm1756 = vmand %vm1752, %vm1754
    %v1757 = vperm.slane %v737, 0
    %v1758 = vsel %vm1755, %v1757, -100000.0
    %v1759 = vsel %vm1756, %v1757, -100000.0
    %v1760 = vmax.f32 %v1749, %v1758
    %v1761 = vmax.f32 %v1750, %v1759
    %vm1762 = vcmp.le.s32.totalorder %v1559, 17
    %vm1763 = vcmp.le.s32.totalorder %v1560, 17
    %vm1764 = vcmp.ge.s32.totalorder %v1573, 17
    %vm1765 = vcmp.ge.s32.totalorder %v1574, 17
    %vm1766 = vmand %vm1762, %vm1764
    %vm1767 = vmand %vm1763, %vm1765
    %v1768 = vperm.slane %v737, 1
    %v1769 = vsel %vm1766, %v1768, -100000.0
    %v1770 = vsel %vm1767, %v1768, -100000.0
    %v1771 = vmax.f32 %v1760, %v1769
    %v1772 = vmax.f32 %v1761, %v1770
    %vm1773 = vcmp.le.s32.totalorder %v1559, 18
    %vm1774 = vcmp.le.s32.totalorder %v1560, 18
    %vm1775 = vcmp.ge.s32.totalorder %v1573, 18
    %vm1776 = vcmp.ge.s32.totalorder %v1574, 18
    %vm1777 = vmand %vm1773, %vm1775
    %vm1778 = vmand %vm1774, %vm1776
    %v1779 = vperm.slane %v737, 2
    %v1780 = vsel %vm1777, %v1779, -100000.0
    %v1781 = vsel %vm1778, %v1779, -100000.0
    %v1782 = vmax.f32 %v1771, %v1780
    %v1783 = vmax.f32 %v1772, %v1781
    %vm1784 = vcmp.le.s32.totalorder %v1559, 19
    %vm1785 = vcmp.le.s32.totalorder %v1560, 19
    %vm1786 = vcmp.ge.s32.totalorder %v1573, 19
    %vm1787 = vcmp.ge.s32.totalorder %v1574, 19
    %vm1788 = vmand %vm1784, %vm1786
    %vm1789 = vmand %vm1785, %vm1787
    %v1790 = vperm.slane %v737, 3
    %v1791 = vsel %vm1788, %v1790, -100000.0
    %v1792 = vsel %vm1789, %v1790, -100000.0
    %v1793 = vmax.f32 %v1782, %v1791
    %v1794 = vmax.f32 %v1783, %v1792
    %vm1795 = vcmp.le.s32.totalorder %v1559, 20
    %vm1796 = vcmp.le.s32.totalorder %v1560, 20
    %vm1797 = vcmp.ge.s32.totalorder %v1573, 20
    %vm1798 = vcmp.ge.s32.totalorder %v1574, 20
    %vm1799 = vmand %vm1795, %vm1797
    %vm1800 = vmand %vm1796, %vm1798
    %v1801 = vperm.slane %v737, 4
    %v1802 = vsel %vm1799, %v1801, -100000.0
    %v1803 = vsel %vm1800, %v1801, -100000.0
    %v1804 = vmax.f32 %v1793, %v1802
    %v1805 = vmax.f32 %v1794, %v1803
    %vm1806 = vcmp.le.s32.totalorder %v1559, 21
    %vm1807 = vcmp.le.s32.totalorder %v1560, 21
    %vm1808 = vcmp.ge.s32.totalorder %v1573, 21
    %vm1809 = vcmp.ge.s32.totalorder %v1574, 21
    %vm1810 = vmand %vm1806, %vm1808
    %vm1811 = vmand %vm1807, %vm1809
    %v1812 = vperm.slane %v737, 5
    %v1813 = vsel %vm1810, %v1812, -100000.0
    %v1814 = vsel %vm1811, %v1812, -100000.0
    %v1815 = vmax.f32 %v1804, %v1813
    %v1816 = vmax.f32 %v1805, %v1814
    %vm1817 = vcmp.le.s32.totalorder %v1559, 22
    %vm1818 = vcmp.le.s32.totalorder %v1560, 22
    %vm1819 = vcmp.ge.s32.totalorder %v1573, 22
    %vm1820 = vcmp.ge.s32.totalorder %v1574, 22
    %vm1821 = vmand %vm1817, %vm1819
    %vm1822 = vmand %vm1818, %vm1820
    %v1823 = vperm.slane %v737, 6
    %v1824 = vsel %vm1821, %v1823, -100000.0
    %v1825 = vsel %vm1822, %v1823, -100000.0
    %v1826 = vmax.f32 %v1815, %v1824
    %v1827 = vmax.f32 %v1816, %v1825
    %vm1828 = vcmp.le.s32.totalorder %v1559, 23
    %vm1829 = vcmp.le.s32.totalorder %v1560, 23
    %vm1830 = vcmp.ge.s32.totalorder %v1573, 23
    %vm1831 = vcmp.ge.s32.totalorder %v1574, 23
    %vm1832 = vmand %vm1828, %vm1830
    %vm1833 = vmand %vm1829, %vm1831
    %v1834 = vperm.slane %v737, 7
    %v1835 = vsel %vm1832, %v1834, -100000.0
    %v1836 = vsel %vm1833, %v1834, -100000.0
    %v1837 = vmax.f32 %v1826, %v1835
    %v1838 = vmax.f32 %v1827, %v1836
    %vm1839 = vcmp.le.s32.totalorder %v1559, 24
    %vm1840 = vcmp.le.s32.totalorder %v1560, 24
    %vm1841 = vcmp.ge.s32.totalorder %v1573, 24
    %vm1842 = vcmp.ge.s32.totalorder %v1574, 24
    %vm1843 = vmand %vm1839, %vm1841
    %vm1844 = vmand %vm1840, %vm1842
    %v1845 = vperm.slane %v738, 0
    %v1846 = vsel %vm1843, %v1845, -100000.0
    %v1847 = vsel %vm1844, %v1845, -100000.0
    %v1848 = vmax.f32 %v1837, %v1846
    %v1849 = vmax.f32 %v1838, %v1847
    %vm1850 = vcmp.le.s32.totalorder %v1559, 25
    %vm1851 = vcmp.le.s32.totalorder %v1560, 25
    %vm1852 = vcmp.ge.s32.totalorder %v1573, 25
    %vm1853 = vcmp.ge.s32.totalorder %v1574, 25
    %vm1854 = vmand %vm1850, %vm1852
    %vm1855 = vmand %vm1851, %vm1853
    %v1856 = vperm.slane %v738, 1
    %v1857 = vsel %vm1854, %v1856, -100000.0
    %v1858 = vsel %vm1855, %v1856, -100000.0
    %v1859 = vmax.f32 %v1848, %v1857
    %v1860 = vmax.f32 %v1849, %v1858
    %vm1861 = vcmp.le.s32.totalorder %v1559, 26
    %vm1862 = vcmp.le.s32.totalorder %v1560, 26
    %vm1863 = vcmp.ge.s32.totalorder %v1573, 26
    %vm1864 = vcmp.ge.s32.totalorder %v1574, 26
    %vm1865 = vmand %vm1861, %vm1863
    %vm1866 = vmand %vm1862, %vm1864
    %v1867 = vperm.slane %v738, 2
    %v1868 = vsel %vm1865, %v1867, -100000.0
    %v1869 = vsel %vm1866, %v1867, -100000.0
    %v1870 = vmax.f32 %v1859, %v1868
    %v1871 = vmax.f32 %v1860, %v1869
    %vm1872 = vcmp.le.s32.totalorder %v1559, 27
    %vm1873 = vcmp.le.s32.totalorder %v1560, 27
    %vm1874 = vcmp.ge.s32.totalorder %v1573, 27
    %vm1875 = vcmp.ge.s32.totalorder %v1574, 27
    %vm1876 = vmand %vm1872, %vm1874
    %vm1877 = vmand %vm1873, %vm1875
    %v1878 = vperm.slane %v738, 3
    %v1879 = vsel %vm1876, %v1878, -100000.0
    %v1880 = vsel %vm1877, %v1878, -100000.0
    %v1881 = vmax.f32 %v1870, %v1879
    %v1882 = vmax.f32 %v1871, %v1880
    %vm1883 = vcmp.le.s32.totalorder %v1559, 28
    %vm1884 = vcmp.le.s32.totalorder %v1560, 28
    %vm1885 = vcmp.ge.s32.totalorder %v1573, 28
    %vm1886 = vcmp.ge.s32.totalorder %v1574, 28
    %vm1887 = vmand %vm1883, %vm1885
    %vm1888 = vmand %vm1884, %vm1886
    %v1889 = vperm.slane %v738, 4
    %v1890 = vsel %vm1887, %v1889, -100000.0
    %v1891 = vsel %vm1888, %v1889, -100000.0
    %v1892 = vmax.f32 %v1881, %v1890
    %v1893 = vmax.f32 %v1882, %v1891
    %vm1894 = vcmp.le.s32.totalorder %v1559, 29
    %vm1895 = vcmp.le.s32.totalorder %v1560, 29
    %vm1896 = vcmp.ge.s32.totalorder %v1573, 29
    %vm1897 = vcmp.ge.s32.totalorder %v1574, 29
    %vm1898 = vmand %vm1894, %vm1896
    %vm1899 = vmand %vm1895, %vm1897
    %v1900 = vperm.slane %v738, 5
    %v1901 = vsel %vm1898, %v1900, -100000.0
    %v1902 = vsel %vm1899, %v1900, -100000.0
    %v1903 = vmax.f32 %v1892, %v1901
    %v1904 = vmax.f32 %v1893, %v1902
    %vm1905 = vcmp.le.s32.totalorder %v1559, 30
    %vm1906 = vcmp.le.s32.totalorder %v1560, 30
    %vm1907 = vcmp.ge.s32.totalorder %v1573, 30
    %vm1908 = vcmp.ge.s32.totalorder %v1574, 30
    %vm1909 = vmand %vm1905, %vm1907
    %vm1910 = vmand %vm1906, %vm1908
    %v1911 = vperm.slane %v738, 6
    %v1912 = vsel %vm1909, %v1911, -100000.0
    %v1913 = vsel %vm1910, %v1911, -100000.0
    %v1914 = vmax.f32 %v1903, %v1912
    %v1915 = vmax.f32 %v1904, %v1913
    %vm1916 = vcmp.le.s32.totalorder %v1559, 31
    %vm1917 = vcmp.le.s32.totalorder %v1560, 31
    %vm1918 = vcmp.ge.s32.totalorder %v1573, 31
    %vm1919 = vcmp.ge.s32.totalorder %v1574, 31
    %vm1920 = vmand %vm1916, %vm1918
    %vm1921 = vmand %vm1917, %vm1919
    %v1922 = vperm.slane %v738, 7
    %v1923 = vsel %vm1920, %v1922, -100000.0
    %v1924 = vsel %vm1921, %v1922, -100000.0
    %v1925 = vmax.f32 %v1914, %v1923
    %v1926 = vmax.f32 %v1915, %v1924
    %v1927 = vpack.c.bf16 %v1542, %v1541
    %v1928 = vpack.c.bf16 %v1926, %v1925
    %v1929 = vld [vmem:[%s8] sm:$0xf]
    %v1930 = vld [vmem:[%s8 + $0x4] sm:$0xf]
    %v1931 = vld [vmem:[%s8 + $0x8] sm:$0xf]
    %v1932 = vld [vmem:[%s8 + $0xc] sm:$0xf]
    %v1933 = vld [vmem:[%s8 + $0x10] sm:$0xf]
    %v1934 = vld [vmem:[%s8 + $0x14] sm:$0xf]
    %v1935 = vld [vmem:[%s8 + $0x18] sm:$0xf]
    %v1936 = vld [vmem:[%s8 + $0x1c] sm:$0xf]
    %v1937 = vld [vmem:[%s9] sm:$0x7]
    %v1938 = vld [vmem:[%s10] sm:$0xff]
    %v1939 = vld [vmem:[%s10 + $0x8] sm:$0xff]
    %v1940 = vld [vmem:[%s10 + $0x10] sm:$0xff]
    %v1941 = vld [vmem:[%s10 + $0x18] sm:$0xff]
    %v1942 = vld [vmem:[%s10 + $0x20] sm:$0xff]
    %v1943 = vld [vmem:[%s10 + $0x28] sm:$0xff]
    %v1944 = vld [vmem:[%s10 + $0x30] sm:$0xff]
    %v1945 = vld [vmem:[%s10 + $0x38] sm:$0xff]
    %v1946 = vperm.slane %v1937, 0
    %v1955 = vunpack.c.l.b16 %v1929
    %v1956 = vunpack.c.l.b16 %v1930
    %v1957 = vunpack.c.l.b16 %v1931
    %v1958 = vunpack.c.l.b16 %v1932
    %v1959 = vunpack.c.l.b16 %v1933
    %v1960 = vunpack.c.l.b16 %v1934
    %v1961 = vunpack.c.l.b16 %v1935
    %v1962 = vunpack.c.l.b16 %v1936
    %v1963 = vpack.c.b16 %v1956, %v1955
    %v1964 = vpack.c.b16 %v1958, %v1957
    %v1965 = vpack.c.b16 %v1960, %v1959
    %v1966 = vpack.c.b16 %v1962, %v1961
    %v1972 = vsel %vm170, %v1927, 0
    %v1975 = vsel %vm170, %v1928, 0
    %1977 = vmatpush.bf16.msra.mxu0 0
    %1978 = vmatpush.bf16.msra.mxu0 0
    %1979 = vmatpush.bf16.msra.mxu0 0
    %1980 = vmatpush.bf16.msra.mxu0 0
    %1981 = vmatpush.bf16.msra.mxu0 %v1966
    %1982 = vmatpush.bf16.msra.mxu0 %v1965
    %1983 = vmatpush.bf16.msra.mxu0 %v1964
    %1984 = vmatpush.bf16.msra.mxu0 %v1963
    %1985 = vmatmul.bf16.gmra.mxu0 %v1972
    %v1986 = vpop.f32.mrf.mxu0
    %v1987 = vadd.f32 %v1946, %v1986
    %v1988 = vpop.f32.mrf.mxu0
    %v1989 = vadd.f32 %v1946, %v1988
    %1990 = vmatmul.bf16.gmra.mxu0 %v1975
    %v1991 = vpop.f32.mrf.mxu0
    %v1992 = vadd.f32 %v1946, %v1991
    %v1993 = vpop.f32.mrf.mxu0
    %v1994 = vadd.f32 %v1946, %v1993
    %1995 = vdwg.mxu0
    %v1996 = vsel %vm170, %v1987, 0.0
    %v1997 = vsel %vm170, %v1989, 0.0
    %v1998 = vadd.f32 %v1996, %v1997
    %v1999 = vrot.slane %v1998, 4
    %v2000 = vadd.f32 %v1998, %v1999
    %v2001 = vrot.slane %v2000, 2
    %v2002 = vadd.f32 %v2000, %v2001
    %v2003 = vrot.slane %v2002, 1
    %v2004 = vadd.f32 %v2002, %v2003
    %v2006 = vsel %vm170, %v2004, 0
    %2008 = vmatpush.msra.mxu0 0.0
    %2009 = vmatpush.msra.mxu0 0.0
    %2010 = vmatpush.msra.mxu0 0.0
    %2011 = vmatpush.msra.mxu0 0.0
    %2012 = vmatpush.msra.mxu0 0.0
    %2013 = vmatpush.msra.mxu0 0.0
    %2014 = vmatpush.msra.mxu0 0.0
    %2015 = vmatpush.msra.mxu0 0.0
    %2016 = vmatpush.msra.mxu0 %v1945
    %2017 = vmatpush.msra.mxu0 %v1944
    %2018 = vmatpush.msra.mxu0 %v1943
    %2019 = vmatpush.msra.mxu0 %v1942
    %2020 = vmatpush.msra.mxu0 %v1941
    %2021 = vmatpush.msra.mxu0 %v1940
    %2022 = vmatpush.msra.mxu0 %v1939
    %2023 = vmatpush.msra.mxu0 %v1938
    %2024 = vmatmul.f32.gmra.mxu0 %v2006
    %v2025 = vpop.f32.mrf.mxu0
    %v2026 = vadd.f32 0.0, %v2025
    %2027 = vdwg.mxu0
    %v2028 = vperm.slane %v2026, 0
    %v2029 = vsub.f32 %v1987, %v2028
    %v2030 = vsub.f32 %v1989, %v2028
    %v2031 = vmul.f32 %v2029, %v2029
    %v2032 = vmul.f32 %v2030, %v2030
    %v2033 = vsel %vm170, %v2031, 0.0
    %v2034 = vsel %vm170, %v2032, 0.0
    %v2035 = vadd.f32 %v2033, %v2034
    %v2036 = vrot.slane %v2035, 4
    %v2037 = vadd.f32 %v2035, %v2036
    %v2038 = vrot.slane %v2037, 2
    %v2039 = vadd.f32 %v2037, %v2038
    %v2040 = vrot.slane %v2039, 1
    %v2041 = vadd.f32 %v2039, %v2040
    %v2043 = vsel %vm170, %v2041, 0
    %2045 = vmatpush.msra.mxu0 0.0
    %2046 = vmatpush.msra.mxu0 0.0
    %2047 = vmatpush.msra.mxu0 0.0
    %2048 = vmatpush.msra.mxu0 0.0
    %2049 = vmatpush.msra.mxu0 0.0
    %2050 = vmatpush.msra.mxu0 0.0
    %2051 = vmatpush.msra.mxu0 0.0
    %2052 = vmatpush.msra.mxu0 0.0
    %2053 = vmatpush.msra.mxu0 %v1945
    %2054 = vmatpush.msra.mxu0 %v1944
    %2055 = vmatpush.msra.mxu0 %v1943
    %2056 = vmatpush.msra.mxu0 %v1942
    %2057 = vmatpush.msra.mxu0 %v1941
    %2058 = vmatpush.msra.mxu0 %v1940
    %2059 = vmatpush.msra.mxu0 %v1939
    %2060 = vmatpush.msra.mxu0 %v1938
    %2061 = vmatmul.f32.gmra.mxu0 %v2043
    %v2062 = vpop.f32.mrf.mxu0
    %v2063 = vadd.f32 1e-05, %v2062
    %2064 = vdwg.mxu0
    %v2065 = vrsqrt.pop %v2063
    %v2066 = vmul.f32 %v2065, %v2063
    %v2067 = vmul.f32 %v2066, %v2065
    %v2068 = vmul.f32 0.5, %v2067
    %v2069 = vsub.f32 1.5, %v2068
    %v2070 = vmul.f32 %v2065, %v2069
    %vm2071 = vweird.f32 %v2063
    %vm2072 = vweird.f32 %v2065
    %vm2073 = vmor %vm2071, %vm2072
    %v2074 = vsel %vm2073, %v2065, %v2070
    %v2075 = vperm.slane %v2074, 0
    %v2076 = vmul.f32 %v2029, %v2075
    %v2077 = vmul.f32 %v2030, %v2075
    %v2078 = vperm.slane %v1937, 1
    %v2079 = vmul.f32 %v2076, %v2078
    %v2080 = vmul.f32 %v2077, %v2078
    %v2081 = vperm.slane %v1937, 2
    %v2082 = vadd.f32 %v2079, %v2081
    %v2083 = vadd.f32 %v2080, %v2081
    %v2084 = vmax.f32 %v2082, 0.0
    %v2085 = vmax.f32 %v2083, 0.0
    %v2086 = vsel %vm170, %v1992, 0.0
    %v2087 = vsel %vm170, %v1994, 0.0
    %v2088 = vadd.f32 %v2086, %v2087
    %v2089 = vrot.slane %v2088, 4
    %v2090 = vadd.f32 %v2088, %v2089
    %v2091 = vrot.slane %v2090, 2
    %v2092 = vadd.f32 %v2090, %v2091
    %v2093 = vrot.slane %v2092, 1
    %v2094 = vadd.f32 %v2092, %v2093
    %v2096 = vsel %vm170, %v2094, 0
    %2098 = vmatpush.msra.mxu0 0.0
    %2099 = vmatpush.msra.mxu0 0.0
    %2100 = vmatpush.msra.mxu0 0.0
    %2101 = vmatpush.msra.mxu0 0.0
    %2102 = vmatpush.msra.mxu0 0.0
    %2103 = vmatpush.msra.mxu0 0.0
    %2104 = vmatpush.msra.mxu0 0.0
    %2105 = vmatpush.msra.mxu0 0.0
    %2106 = vmatpush.msra.mxu0 %v1945
    %2107 = vmatpush.msra.mxu0 %v1944
    %2108 = vmatpush.msra.mxu0 %v1943
    %2109 = vmatpush.msra.mxu0 %v1942
    %2110 = vmatpush.msra.mxu0 %v1941
    %2111 = vmatpush.msra.mxu0 %v1940
    %2112 = vmatpush.msra.mxu0 %v1939
    %2113 = vmatpush.msra.mxu0 %v1938
    %2114 = vmatmul.f32.gmra.mxu0 %v2096
    %v2115 = vpop.f32.mrf.mxu0
    %v2116 = vadd.f32 0.0, %v2115
    %2117 = vdwg.mxu0
    %v2118 = vperm.slane %v2116, 0
    %v2119 = vsub.f32 %v1992, %v2118
    %v2120 = vsub.f32 %v1994, %v2118
    %v2121 = vmul.f32 %v2119, %v2119
    %v2122 = vmul.f32 %v2120, %v2120
    %v2123 = vsel %vm170, %v2121, 0.0
    %v2124 = vsel %vm170, %v2122, 0.0
    %v2125 = vadd.f32 %v2123, %v2124
    %v2126 = vrot.slane %v2125, 4
    %v2127 = vadd.f32 %v2125, %v2126
    %v2128 = vrot.slane %v2127, 2
    %v2129 = vadd.f32 %v2127, %v2128
    %v2130 = vrot.slane %v2129, 1
    %v2131 = vadd.f32 %v2129, %v2130
    %v2133 = vsel %vm170, %v2131, 0
    %2135 = vmatpush.msra.mxu0 0.0
    %2136 = vmatpush.msra.mxu0 0.0
    %2137 = vmatpush.msra.mxu0 0.0
    %2138 = vmatpush.msra.mxu0 0.0
    %2139 = vmatpush.msra.mxu0 0.0
    %2140 = vmatpush.msra.mxu0 0.0
    %2141 = vmatpush.msra.mxu0 0.0
    %2142 = vmatpush.msra.mxu0 0.0
    %2143 = vmatpush.msra.mxu0 %v1945
    %2144 = vmatpush.msra.mxu0 %v1944
    %2145 = vmatpush.msra.mxu0 %v1943
    %2146 = vmatpush.msra.mxu0 %v1942
    %2147 = vmatpush.msra.mxu0 %v1941
    %2148 = vmatpush.msra.mxu0 %v1940
    %2149 = vmatpush.msra.mxu0 %v1939
    %2150 = vmatpush.msra.mxu0 %v1938
    %2151 = vmatmul.f32.gmra.mxu0 %v2133
    %v2152 = vpop.f32.mrf.mxu0
    %v2153 = vadd.f32 1e-05, %v2152
    %2154 = vdwg.mxu0
    %v2155 = vrsqrt.pop %v2153
    %v2156 = vmul.f32 %v2155, %v2153
    %v2157 = vmul.f32 %v2156, %v2155
    %v2158 = vmul.f32 0.5, %v2157
    %v2159 = vsub.f32 1.5, %v2158
    %v2160 = vmul.f32 %v2155, %v2159
    %vm2161 = vweird.f32 %v2153
    %vm2162 = vweird.f32 %v2155
    %vm2163 = vmor %vm2161, %vm2162
    %v2164 = vsel %vm2163, %v2155, %v2160
    %v2165 = vperm.slane %v2164, 0
    %v2166 = vmul.f32 %v2119, %v2165
    %v2167 = vmul.f32 %v2120, %v2165
    %v2168 = vmul.f32 %v2166, %v2078
    %v2169 = vmul.f32 %v2167, %v2078
    %v2170 = vadd.f32 %v2168, %v2081
    %v2171 = vadd.f32 %v2169, %v2081
    %v2172 = vmax.f32 %v2170, 0.0
    %v2173 = vmax.f32 %v2171, 0.0
    %v2174 = vpack.c.bf16 %v2085, %v2084
    %v2175 = vpack.c.bf16 %v2173, %v2172
    %v2176 = vld [vmem:[%s11] sm:$0xf]
    %v2177 = vld [vmem:[%s11 + $0x4] sm:$0xf]
    %v2178 = vld [vmem:[%s11 + $0x8] sm:$0xf]
    %v2179 = vld [vmem:[%s11 + $0xc] sm:$0xf]
    %v2180 = vld [vmem:[%s11 + $0x10] sm:$0xf]
    %v2181 = vld [vmem:[%s11 + $0x14] sm:$0xf]
    %v2182 = vld [vmem:[%s11 + $0x18] sm:$0xf]
    %v2183 = vld [vmem:[%s11 + $0x1c] sm:$0xf]
    %v2184 = vpack.c.bf16 %v949, %v948
    %v2185 = vpack.c.bf16 %v1157, %v1156
    %v2186 = vld [vmem:[%s12] sm:$0xf]
    %v2187 = vld [vmem:[%s12 + $0x4] sm:$0xf]
    %v2188 = vld [vmem:[%s12 + $0x8] sm:$0xf]
    %v2189 = vld [vmem:[%s12 + $0xc] sm:$0xf]
    %v2190 = vld [vmem:[%s12 + $0x10] sm:$0xf]
    %v2191 = vld [vmem:[%s12 + $0x14] sm:$0xf]
    %v2192 = vld [vmem:[%s12 + $0x18] sm:$0xf]
    %v2193 = vld [vmem:[%s12 + $0x1c] sm:$0xf]
    %v2194 = vld [vmem:[%s12 + $0x20] sm:$0xf]
    %v2195 = vld [vmem:[%s12 + $0x24] sm:$0xf]
    %v2196 = vld [vmem:[%s12 + $0x28] sm:$0xf]
    %v2197 = vld [vmem:[%s12 + $0x2c] sm:$0xf]
    %v2198 = vld [vmem:[%s12 + $0x30] sm:$0xf]
    %v2199 = vld [vmem:[%s12 + $0x34] sm:$0xf]
    %v2200 = vld [vmem:[%s12 + $0x38] sm:$0xf]
    %v2201 = vld [vmem:[%s12 + $0x3c] sm:$0xf]
    %v2218 = vunpack.c.l.b16 %v2186
    %v2219 = vunpack.c.l.b16 %v2187
    %v2220 = vunpack.c.l.b16 %v2188
    %v2221 = vunpack.c.l.b16 %v2189
    %v2222 = vunpack.c.l.b16 %v2190
    %v2223 = vunpack.c.l.b16 %v2191
    %v2224 = vunpack.c.l.b16 %v2192
    %v2225 = vunpack.c.l.b16 %v2193
    %v2226 = vunpack.c.l.b16 %v2194
    %v2227 = vunpack.c.l.b16 %v2195
    %v2228 = vunpack.c.l.b16 %v2196
    %v2229 = vunpack.c.l.b16 %v2197
    %v2230 = vunpack.c.l.b16 %v2198
    %v2231 = vunpack.c.l.b16 %v2199
    %v2232 = vunpack.c.l.b16 %v2200
    %v2233 = vunpack.c.l.b16 %v2201
    %v2234 = vpack.c.b16 %v2219, %v2218
    %v2235 = vpack.c.b16 %v2221, %v2220
    %v2236 = vpack.c.b16 %v2223, %v2222
    %v2237 = vpack.c.b16 %v2225, %v2224
    %v2238 = vpack.c.b16 %v2227, %v2226
    %v2239 = vpack.c.b16 %v2229, %v2228
    %v2240 = vpack.c.b16 %v2231, %v2230
    %v2241 = vpack.c.b16 %v2233, %v2232
    %2250 = vmatpush.bf16.msra.mxu0 %v2241
    %2251 = vmatpush.bf16.msra.mxu0 %v2240
    %2252 = vmatpush.bf16.msra.mxu0 %v2239
    %2253 = vmatpush.bf16.msra.mxu0 %v2238
    %2254 = vmatpush.bf16.msra.mxu0 %v2237
    %2255 = vmatpush.bf16.msra.mxu0 %v2236
    %2256 = vmatpush.bf16.msra.mxu0 %v2235
    %2257 = vmatpush.bf16.msra.mxu0 %v2234
    %2258 = vmatmul.bf16.gmra.mxu0 %v2184
    %v2259 = vpop.f32.mrf.mxu0
    %v2260 = vadd.f32 0.0, %v2259
    %v2261 = vpop.f32.mrf.mxu0
    %v2262 = vadd.f32 0.0, %v2261
    %2263 = vmatmul.bf16.gmra.mxu0 %v2185
    %v2264 = vpop.f32.mrf.mxu0
    %v2265 = vadd.f32 0.0, %v2264
    %v2266 = vpop.f32.mrf.mxu0
    %v2267 = vadd.f32 0.0, %v2266
    %2268 = vdwg.mxu0
    %v2277 = vunpack.c.l.b16 %v2176
    %v2278 = vunpack.c.l.b16 %v2177
    %v2279 = vunpack.c.l.b16 %v2178
    %v2280 = vunpack.c.l.b16 %v2179
    %v2281 = vunpack.c.l.b16 %v2180
    %v2282 = vunpack.c.l.b16 %v2181
    %v2283 = vunpack.c.l.b16 %v2182
    %v2284 = vunpack.c.l.b16 %v2183
    %v2285 = vpack.c.b16 %v2278, %v2277
    %v2286 = vpack.c.b16 %v2280, %v2279
    %v2287 = vpack.c.b16 %v2282, %v2281
    %v2288 = vpack.c.b16 %v2284, %v2283
    %v2294 = vsel %vm170, %v2174, 0
    %v2297 = vsel %vm170, %v2175, 0
    %2299 = vmatpush.bf16.msra.mxu0 0
    %2300 = vmatpush.bf16.msra.mxu0 0
    %2301 = vmatpush.bf16.msra.mxu0 0
    %2302 = vmatpush.bf16.msra.mxu0 0
    %2303 = vmatpush.bf16.msra.mxu0 %v2288
    %2304 = vmatpush.bf16.msra.mxu0 %v2287
    %2305 = vmatpush.bf16.msra.mxu0 %v2286
    %2306 = vmatpush.bf16.msra.mxu0 %v2285
    %2307 = vmatmul.bf16.gmra.mxu0 %v2294
    %v2308 = vpop.f32.mrf.mxu0
    %v2309 = vadd.f32 %v2260, %v2308
    %v2310 = vpop.f32.mrf.mxu0
    %v2311 = vadd.f32 %v2262, %v2310
    %2312 = vmatmul.bf16.gmra.mxu0 %v2297
    %v2313 = vpop.f32.mrf.mxu0
    %v2314 = vadd.f32 %v2265, %v2313
    %v2315 = vpop.f32.mrf.mxu0
    %v2316 = vadd.f32 %v2267, %v2315
    %2317 = vdwg.mxu0
    %v2318 = vpack.c.bf16 %v472, %v470
    %v2319 = vpack.c.bf16 %v718, %v716
    %v2320 = vld [vmem:[%s13] sm:$0xf]
    %v2321 = vld [vmem:[%s13 + $0x4] sm:$0xf]
    %v2322 = vld [vmem:[%s13 + $0x8] sm:$0xf]
    %v2323 = vld [vmem:[%s13 + $0xc] sm:$0xf]
    %v2324 = vld [vmem:[%s13 + $0x10] sm:$0xf]
    %v2325 = vld [vmem:[%s13 + $0x14] sm:$0xf]
    %v2326 = vld [vmem:[%s13 + $0x18] sm:$0xf]
    %v2327 = vld [vmem:[%s13 + $0x1c] sm:$0xf]
    %v2336 = vunpack.c.l.b16 %v2320
    %v2337 = vunpack.c.l.b16 %v2321
    %v2338 = vunpack.c.l.b16 %v2322
    %v2339 = vunpack.c.l.b16 %v2323
    %v2340 = vunpack.c.l.b16 %v2324
    %v2341 = vunpack.c.l.b16 %v2325
    %v2342 = vunpack.c.l.b16 %v2326
    %v2343 = vunpack.c.l.b16 %v2327
    %v2344 = vpack.c.b16 %v2337, %v2336
    %v2345 = vpack.c.b16 %v2339, %v2338
    %v2346 = vpack.c.b16 %v2341, %v2340
    %v2347 = vpack.c.b16 %v2343, %v2342
    %v2353 = vsel %vm170, %v2318, 0
    %v2356 = vsel %vm170, %v2319, 0
    %2358 = vmatpush.bf16.msra.mxu0 0
    %2359 = vmatpush.bf16.msra.mxu0 0
    %2360 = vmatpush.bf16.msra.mxu0 0
    %2361 = vmatpush.bf16.msra.mxu0 0
    %2362 = vmatpush.bf16.msra.mxu0 %v2347
    %2363 = vmatpush.bf16.msra.mxu0 %v2346
    %2364 = vmatpush.bf16.msra.mxu0 %v2345
    %2365 = vmatpush.bf16.msra.mxu0 %v2344
    %2366 = vmatmul.bf16.gmra.mxu0 %v2353
    %v2367 = vpop.f32.mrf.mxu0
    %v2368 = vadd.f32 0.0, %v2367
    %v2369 = vpop.f32.mrf.mxu0
    %v2370 = vadd.f32 0.0, %v2369
    %2371 = vmatmul.bf16.gmra.mxu0 %v2356
    %v2372 = vpop.f32.mrf.mxu0
    %v2373 = vadd.f32 0.0, %v2372
    %v2374 = vpop.f32.mrf.mxu0
    %v2375 = vadd.f32 0.0, %v2374
    %2376 = vdwg.mxu0
    %v2377 = vadd.f32 %v2309, %v2368
    %v2378 = vadd.f32 %v2311, %v2370
    %v2379 = vadd.f32 %v2314, %v2373
    %v2380 = vadd.f32 %v2316, %v2375
    %v2381 = vld [vmem:[%s2] sm:$0xff]
    %v2382 = vld [vmem:[%s2 + $0x8] sm:$0xff]
    %v2383 = vld [vmem:[%s2 + $0x10] sm:$0xff]
    %v2384 = vld [vmem:[%s2 + $0x18] sm:$0xff]
    %v2385 = vld [vmem:[%s2 + $0x20] sm:$0xff]
    %v2386 = vld [vmem:[%s2 + $0x28] sm:$0xff]
    %v2387 = vld [vmem:[%s2 + $0x30] sm:$0xff]
    %v2388 = vld [vmem:[%s2 + $0x38] sm:$0xff]
    %v2389 = vld [vmem:[%s14] sm:$0xf]
    %v2390 = vld [vmem:[%s14 + $0x4] sm:$0xf]
    %v2391 = vld [vmem:[%s14 + $0x8] sm:$0xf]
    %v2392 = vld [vmem:[%s14 + $0xc] sm:$0xf]
    %v2393 = vld [vmem:[%s14 + $0x10] sm:$0xf]
    %v2394 = vld [vmem:[%s14 + $0x14] sm:$0xf]
    %v2395 = vld [vmem:[%s14 + $0x18] sm:$0xf]
    %v2396 = vld [vmem:[%s14 + $0x1c] sm:$0xf]
    %v2397 = vld [vmem:[%s14 + $0x20] sm:$0xf]
    %v2398 = vld [vmem:[%s14 + $0x24] sm:$0xf]
    %v2399 = vld [vmem:[%s14 + $0x28] sm:$0xf]
    %v2400 = vld [vmem:[%s14 + $0x2c] sm:$0xf]
    %v2401 = vld [vmem:[%s14 + $0x30] sm:$0xf]
    %v2402 = vld [vmem:[%s14 + $0x34] sm:$0xf]
    %v2403 = vld [vmem:[%s14 + $0x38] sm:$0xf]
    %v2404 = vld [vmem:[%s14 + $0x3c] sm:$0xf]
    %v2405 = vld [vmem:[%s14 + $0x40] sm:$0xf]
    %v2406 = vld [vmem:[%s14 + $0x44] sm:$0xf]
    %v2407 = vld [vmem:[%s14 + $0x48] sm:$0xf]
    %v2408 = vld [vmem:[%s14 + $0x4c] sm:$0xf]
    %v2409 = vld [vmem:[%s14 + $0x50] sm:$0xf]
    %v2410 = vld [vmem:[%s14 + $0x54] sm:$0xf]
    %v2411 = vld [vmem:[%s14 + $0x58] sm:$0xf]
    %v2412 = vld [vmem:[%s14 + $0x5c] sm:$0xf]
    %v2413 = vld [vmem:[%s14 + $0x60] sm:$0xf]
    %v2414 = vld [vmem:[%s14 + $0x64] sm:$0xf]
    %v2415 = vld [vmem:[%s14 + $0x68] sm:$0xf]
    %v2416 = vld [vmem:[%s14 + $0x6c] sm:$0xf]
    %v2417 = vld [vmem:[%s14 + $0x70] sm:$0xf]
    %v2418 = vld [vmem:[%s14 + $0x74] sm:$0xf]
    %v2419 = vld [vmem:[%s14 + $0x78] sm:$0xf]
    %v2420 = vld [vmem:[%s14 + $0x7c] sm:$0xf]
    %v2421 = vld [vmem:[%s14 + $0x80] sm:$0xf]
    %v2422 = vld [vmem:[%s14 + $0x84] sm:$0xf]
    %v2423 = vld [vmem:[%s14 + $0x88] sm:$0xf]
    %v2424 = vld [vmem:[%s14 + $0x8c] sm:$0xf]
    %v2425 = vld [vmem:[%s14 + $0x90] sm:$0xf]
    %v2426 = vld [vmem:[%s14 + $0x94] sm:$0xf]
    %v2427 = vld [vmem:[%s14 + $0x98] sm:$0xf]
    %v2428 = vld [vmem:[%s14 + $0x9c] sm:$0xf]
    %v2429 = vld [vmem:[%s14 + $0xa0] sm:$0xf]
    %v2430 = vld [vmem:[%s14 + $0xa4] sm:$0xf]
    %v2431 = vld [vmem:[%s14 + $0xa8] sm:$0xf]
    %v2432 = vld [vmem:[%s14 + $0xac] sm:$0xf]
    %v2433 = vld [vmem:[%s14 + $0xb0] sm:$0xf]
    %v2434 = vld [vmem:[%s14 + $0xb4] sm:$0xf]
    %v2435 = vld [vmem:[%s14 + $0xb8] sm:$0xf]
    %v2436 = vld [vmem:[%s14 + $0xbc] sm:$0xf]
    %v2437 = vld [vmem:[%s14 + $0xc0] sm:$0xf]
    %v2438 = vld [vmem:[%s14 + $0xc4] sm:$0xf]
    %v2439 = vld [vmem:[%s14 + $0xc8] sm:$0xf]
    %v2440 = vld [vmem:[%s14 + $0xcc] sm:$0xf]
    %v2441 = vld [vmem:[%s14 + $0xd0] sm:$0xf]
    %v2442 = vld [vmem:[%s14 + $0xd4] sm:$0xf]
    %v2443 = vld [vmem:[%s14 + $0xd8] sm:$0xf]
    %v2444 = vld [vmem:[%s14 + $0xdc] sm:$0xf]
    %v2445 = vld [vmem:[%s14 + $0xe0] sm:$0xf]
    %v2446 = vld [vmem:[%s14 + $0xe4] sm:$0xf]
    %v2447 = vld [vmem:[%s14 + $0xe8] sm:$0xf]
    %v2448 = vld [vmem:[%s14 + $0xec] sm:$0xf]
    %v2449 = vld [vmem:[%s14 + $0xf0] sm:$0xf]
    %v2450 = vld [vmem:[%s14 + $0xf4] sm:$0xf]
    %v2451 = vld [vmem:[%s14 + $0xf8] sm:$0xf]
    %v2452 = vld [vmem:[%s14 + $0xfc] sm:$0xf]
    %v2461 = vunpack.c.l.b16 %v2381
    %v2462 = vunpack.c.h.b16 %v2381
    %v2463 = vunpack.c.l.b16 %v2382
    %v2464 = vunpack.c.h.b16 %v2382
    %v2465 = vunpack.c.l.b16 %v2383
    %v2466 = vunpack.c.h.b16 %v2383
    %v2467 = vunpack.c.l.b16 %v2384
    %v2468 = vunpack.c.h.b16 %v2384
    %v2469 = vunpack.c.l.b16 %v2385
    %v2470 = vunpack.c.h.b16 %v2385
    %v2471 = vunpack.c.l.b16 %v2386
    %v2472 = vunpack.c.h.b16 %v2386
    %v2473 = vunpack.c.l.b16 %v2387
    %v2474 = vunpack.c.h.b16 %v2387
    %v2475 = vunpack.c.l.b16 %v2388
    %v2476 = vunpack.c.h.b16 %v2388
    %v2477 = vpack.c.b16 %v2465, %v2461
    %v2478 = vpack.c.b16 %v2466, %v2462
    %v2479 = vpack.c.b16 %v2467, %v2463
    %v2480 = vpack.c.b16 %v2468, %v2464
    %v2481 = vpack.c.b16 %v2473, %v2469
    %v2482 = vpack.c.b16 %v2474, %v2470
    %v2483 = vpack.c.b16 %v2475, %v2471
    %v2484 = vpack.c.b16 %v2476, %v2472
    %v2557 = vunpack.c.l.b16 %v2389
    %v2558 = vunpack.c.l.b16 %v2390
    %v2559 = vunpack.c.l.b16 %v2391
    %v2560 = vunpack.c.l.b16 %v2392
    %v2561 = vunpack.c.l.b16 %v2393
    %v2562 = vunpack.c.l.b16 %v2394
    %v2563 = vunpack.c.l.b16 %v2395
    %v2564 = vunpack.c.l.b16 %v2396
    %v2565 = vunpack.c.l.b16 %v2397
    %v2566 = vunpack.c.l.b16 %v2398
    %v2567 = vunpack.c.l.b16 %v2399
    %v2568 = vunpack.c.l.b16 %v2400
    %v2569 = vunpack.c.l.b16 %v2401
    %v2570 = vunpack.c.l.b16 %v2402
    %v2571 = vunpack.c.l.b16 %v2403
    %v2572 = vunpack.c.l.b16 %v2404
    %v2573 = vunpack.c.l.b16 %v2405
    %v2574 = vunpack.c.l.b16 %v2406
    %v2575 = vunpack.c.l.b16 %v2407
    %v2576 = vunpack.c.l.b16 %v2408
    %v2577 = vunpack.c.l.b16 %v2409
    %v2578 = vunpack.c.l.b16 %v2410
    %v2579 = vunpack.c.l.b16 %v2411
    %v2580 = vunpack.c.l.b16 %v2412
    %v2581 = vunpack.c.l.b16 %v2413
    %v2582 = vunpack.c.l.b16 %v2414
    %v2583 = vunpack.c.l.b16 %v2415
    %v2584 = vunpack.c.l.b16 %v2416
    %v2585 = vunpack.c.l.b16 %v2417
    %v2586 = vunpack.c.l.b16 %v2418
    %v2587 = vunpack.c.l.b16 %v2419
    %v2588 = vunpack.c.l.b16 %v2420
    %v2589 = vunpack.c.l.b16 %v2421
    %v2590 = vunpack.c.l.b16 %v2422
    %v2591 = vunpack.c.l.b16 %v2423
    %v2592 = vunpack.c.l.b16 %v2424
    %v2593 = vunpack.c.l.b16 %v2425
    %v2594 = vunpack.c.l.b16 %v2426
    %v2595 = vunpack.c.l.b16 %v2427
    %v2596 = vunpack.c.l.b16 %v2428
    %v2597 = vunpack.c.l.b16 %v2429
    %v2598 = vunpack.c.l.b16 %v2430
    %v2599 = vunpack.c.l.b16 %v2431
    %v2600 = vunpack.c.l.b16 %v2432
    %v2601 = vunpack.c.l.b16 %v2433
    %v2602 = vunpack.c.l.b16 %v2434
    %v2603 = vunpack.c.l.b16 %v2435
    %v2604 = vunpack.c.l.b16 %v2436
    %v2605 = vunpack.c.l.b16 %v2437
    %v2606 = vunpack.c.l.b16 %v2438
    %v2607 = vunpack.c.l.b16 %v2439
    %v2608 = vunpack.c.l.b16 %v2440
    %v2609 = vunpack.c.l.b16 %v2441
    %v2610 = vunpack.c.l.b16 %v2442
    %v2611 = vunpack.c.l.b16 %v2443
    %v2612 = vunpack.c.l.b16 %v2444
    %v2613 = vunpack.c.l.b16 %v2445
    %v2614 = vunpack.c.l.b16 %v2446
    %v2615 = vunpack.c.l.b16 %v2447
    %v2616 = vunpack.c.l.b16 %v2448
    %v2617 = vunpack.c.l.b16 %v2449
    %v2618 = vunpack.c.l.b16 %v2450
    %v2619 = vunpack.c.l.b16 %v2451
    %v2620 = vunpack.c.l.b16 %v2452
    %v2621 = vpack.c.b16 %v2558, %v2557
    %v2622 = vpack.c.b16 %v2560, %v2559
    %v2623 = vpack.c.b16 %v2562, %v2561
    %v2624 = vpack.c.b16 %v2564, %v2563
    %v2625 = vpack.c.b16 %v2566, %v2565
    %v2626 = vpack.c.b16 %v2568, %v2567
    %v2627 = vpack.c.b16 %v2570, %v2569
    %v2628 = vpack.c.b16 %v2572, %v2571
    %v2629 = vpack.c.b16 %v2574, %v2573
    %v2630 = vpack.c.b16 %v2576, %v2575
    %v2631 = vpack.c.b16 %v2578, %v2577
    %v2632 = vpack.c.b16 %v2580, %v2579
    %v2633 = vpack.c.b16 %v2582, %v2581
    %v2634 = vpack.c.b16 %v2584, %v2583
    %v2635 = vpack.c.b16 %v2586, %v2585
    %v2636 = vpack.c.b16 %v2588, %v2587
    %v2637 = vpack.c.b16 %v2590, %v2589
    %v2638 = vpack.c.b16 %v2592, %v2591
    %v2639 = vpack.c.b16 %v2594, %v2593
    %v2640 = vpack.c.b16 %v2596, %v2595
    %v2641 = vpack.c.b16 %v2598, %v2597
    %v2642 = vpack.c.b16 %v2600, %v2599
    %v2643 = vpack.c.b16 %v2602, %v2601
    %v2644 = vpack.c.b16 %v2604, %v2603
    %v2645 = vpack.c.b16 %v2606, %v2605
    %v2646 = vpack.c.b16 %v2608, %v2607
    %v2647 = vpack.c.b16 %v2610, %v2609
    %v2648 = vpack.c.b16 %v2612, %v2611
    %v2649 = vpack.c.b16 %v2614, %v2613
    %v2650 = vpack.c.b16 %v2616, %v2615
    %v2651 = vpack.c.b16 %v2618, %v2617
    %v2652 = vpack.c.b16 %v2620, %v2619
    %2685 = vmatpush.bf16.msra.mxu0 %v2628
    %2686 = vmatpush.bf16.msra.mxu0 %v2627
    %2687 = vmatpush.bf16.msra.mxu0 %v2626
    %2688 = vmatpush.bf16.msra.mxu0 %v2625
    %2689 = vmatpush.bf16.msra.mxu0 %v2624
    %2690 = vmatpush.bf16.msra.mxu0 %v2623
    %2691 = vmatpush.bf16.msra.mxu0 %v2622
    %2692 = vmatpush.bf16.msra.mxu0 %v2621
    %2693 = vmatmul.bf16.gmra.mxu0 %v2477
    %v2694 = vpop.f32.mrf.mxu0
    %v2695 = vadd.f32 0.0, %v2694
    %v2696 = vpop.f32.mrf.mxu0
    %v2697 = vadd.f32 0.0, %v2696
    %2698 = vmatmul.bf16.gmra.mxu0 %v2481
    %v2699 = vpop.f32.mrf.mxu0
    %v2700 = vadd.f32 0.0, %v2699
    %v2701 = vpop.f32.mrf.mxu0
    %v2702 = vadd.f32 0.0, %v2701
    %2703 = vdwg.mxu0
    %2704 = vmatpush.bf16.msra.mxu0 %v2636
    %2705 = vmatpush.bf16.msra.mxu0 %v2635
    %2706 = vmatpush.bf16.msra.mxu0 %v2634
    %2707 = vmatpush.bf16.msra.mxu0 %v2633
    %2708 = vmatpush.bf16.msra.mxu0 %v2632
    %2709 = vmatpush.bf16.msra.mxu0 %v2631
    %2710 = vmatpush.bf16.msra.mxu0 %v2630
    %2711 = vmatpush.bf16.msra.mxu0 %v2629
    %2712 = vmatmul.bf16.gmra.mxu0 %v2478
    %v2713 = vpop.f32.mrf.mxu0
    %v2714 = vadd.f32 %v2695, %v2713
    %v2715 = vpop.f32.mrf.mxu0
    %v2716 = vadd.f32 %v2697, %v2715
    %2717 = vmatmul.bf16.gmra.mxu0 %v2482
    %v2718 = vpop.f32.mrf.mxu0
    %v2719 = vadd.f32 %v2700, %v2718
    %v2720 = vpop.f32.mrf.mxu0
    %v2721 = vadd.f32 %v2702, %v2720
    %2722 = vdwg.mxu0
    %2723 = vmatpush.bf16.msra.mxu0 %v2644
    %2724 = vmatpush.bf16.msra.mxu0 %v2643
    %2725 = vmatpush.bf16.msra.mxu0 %v2642
    %2726 = vmatpush.bf16.msra.mxu0 %v2641
    %2727 = vmatpush.bf16.msra.mxu0 %v2640
    %2728 = vmatpush.bf16.msra.mxu0 %v2639
    %2729 = vmatpush.bf16.msra.mxu0 %v2638
    %2730 = vmatpush.bf16.msra.mxu0 %v2637
    %2731 = vmatmul.bf16.gmra.mxu0 %v2479
    %v2732 = vpop.f32.mrf.mxu0
    %v2733 = vadd.f32 %v2714, %v2732
    %v2734 = vpop.f32.mrf.mxu0
    %v2735 = vadd.f32 %v2716, %v2734
    %2736 = vmatmul.bf16.gmra.mxu0 %v2483
    %v2737 = vpop.f32.mrf.mxu0
    %v2738 = vadd.f32 %v2719, %v2737
    %v2739 = vpop.f32.mrf.mxu0
    %v2740 = vadd.f32 %v2721, %v2739
    %2741 = vdwg.mxu0
    %2742 = vmatpush.bf16.msra.mxu0 %v2652
    %2743 = vmatpush.bf16.msra.mxu0 %v2651
    %2744 = vmatpush.bf16.msra.mxu0 %v2650
    %2745 = vmatpush.bf16.msra.mxu0 %v2649
    %2746 = vmatpush.bf16.msra.mxu0 %v2648
    %2747 = vmatpush.bf16.msra.mxu0 %v2647
    %2748 = vmatpush.bf16.msra.mxu0 %v2646
    %2749 = vmatpush.bf16.msra.mxu0 %v2645
    %2750 = vmatmul.bf16.gmra.mxu0 %v2480
    %v2751 = vpop.f32.mrf.mxu0
    %v2752 = vadd.f32 %v2733, %v2751
    %v2753 = vpop.f32.mrf.mxu0
    %v2754 = vadd.f32 %v2735, %v2753
    %2755 = vmatmul.bf16.gmra.mxu0 %v2484
    %v2756 = vpop.f32.mrf.mxu0
    %v2757 = vadd.f32 %v2738, %v2756
    %v2758 = vpop.f32.mrf.mxu0
    %v2759 = vadd.f32 %v2740, %v2758
    %2760 = vdwg.mxu0
    %v2761 = vadd.f32 %v2377, %v2752
    %v2762 = vadd.f32 %v2378, %v2754
    %v2763 = vadd.f32 %v2379, %v2757
    %v2764 = vadd.f32 %v2380, %v2759
    %v2765 = vld [vmem:[%s15] sm:$0x7]
    %v2766 = vld [vmem:[%s16] sm:$0xff]
    %v2767 = vld [vmem:[%s16 + $0x8] sm:$0xff]
    %v2768 = vld [vmem:[%s16 + $0x10] sm:$0xff]
    %v2769 = vld [vmem:[%s16 + $0x18] sm:$0xff]
    %v2770 = vld [vmem:[%s16 + $0x20] sm:$0xff]
    %v2771 = vld [vmem:[%s16 + $0x28] sm:$0xff]
    %v2772 = vld [vmem:[%s16 + $0x30] sm:$0xff]
    %v2773 = vld [vmem:[%s16 + $0x38] sm:$0xff]
    %v2774 = vld [vmem:[%s16 + $0x40] sm:$0xff]
    %v2775 = vld [vmem:[%s16 + $0x48] sm:$0xff]
    %v2776 = vld [vmem:[%s16 + $0x50] sm:$0xff]
    %v2777 = vld [vmem:[%s16 + $0x58] sm:$0xff]
    %v2778 = vld [vmem:[%s16 + $0x60] sm:$0xff]
    %v2779 = vld [vmem:[%s16 + $0x68] sm:$0xff]
    %v2780 = vld [vmem:[%s16 + $0x70] sm:$0xff]
    %v2781 = vld [vmem:[%s16 + $0x78] sm:$0xff]
    %v2782 = vperm.slane %v2765, 0
    %v2783 = vadd.f32 %v2761, %v2782
    %v2784 = vadd.f32 %v2762, %v2782
    %v2785 = vadd.f32 %v2763, %v2782
    %v2786 = vadd.f32 %v2764, %v2782
    %v2787 = vadd.f32 %v2783, %v2784
    %v2788 = vrot.slane %v2787, 4
    %v2789 = vadd.f32 %v2787, %v2788
    %v2790 = vrot.slane %v2789, 2
    %v2791 = vadd.f32 %v2789, %v2790
    %v2792 = vrot.slane %v2791, 1
    %v2793 = vadd.f32 %v2791, %v2792
    %2794 = vmatpush.msra.mxu0 %v2781
    %2795 = vmatpush.msra.mxu0 %v2780
    %2796 = vmatpush.msra.mxu0 %v2779
    %2797 = vmatpush.msra.mxu0 %v2778
    %2798 = vmatpush.msra.mxu0 %v2777
    %2799 = vmatpush.msra.mxu0 %v2776
    %2800 = vmatpush.msra.mxu0 %v2775
    %2801 = vmatpush.msra.mxu0 %v2774
    %2802 = vmatpush.msra.mxu0 %v2773
    %2803 = vmatpush.msra.mxu0 %v2772
    %2804 = vmatpush.msra.mxu0 %v2771
    %2805 = vmatpush.msra.mxu0 %v2770
    %2806 = vmatpush.msra.mxu0 %v2769
    %2807 = vmatpush.msra.mxu0 %v2768
    %2808 = vmatpush.msra.mxu0 %v2767
    %2809 = vmatpush.msra.mxu0 %v2766
    %2810 = vmatmul.f32.gmra.mxu0 %v2793
    %v2811 = vpop.f32.mrf.mxu0
    %v2812 = vadd.f32 0.0, %v2811
    %2813 = vdwg.mxu0
    %v2814 = vperm.slane %v2812, 0
    %v2815 = vsub.f32 %v2783, %v2814
    %v2816 = vsub.f32 %v2784, %v2814
    %v2817 = vmul.f32 %v2815, %v2815
    %v2818 = vmul.f32 %v2816, %v2816
    %v2819 = vadd.f32 %v2817, %v2818
    %v2820 = vrot.slane %v2819, 4
    %v2821 = vadd.f32 %v2819, %v2820
    %v2822 = vrot.slane %v2821, 2
    %v2823 = vadd.f32 %v2821, %v2822
    %v2824 = vrot.slane %v2823, 1
    %v2825 = vadd.f32 %v2823, %v2824
    %2826 = vmatpush.msra.mxu0 %v2781
    %2827 = vmatpush.msra.mxu0 %v2780
    %2828 = vmatpush.msra.mxu0 %v2779
    %2829 = vmatpush.msra.mxu0 %v2778
    %2830 = vmatpush.msra.mxu0 %v2777
    %2831 = vmatpush.msra.mxu0 %v2776
    %2832 = vmatpush.msra.mxu0 %v2775
    %2833 = vmatpush.msra.mxu0 %v2774
    %2834 = vmatpush.msra.mxu0 %v2773
    %2835 = vmatpush.msra.mxu0 %v2772
    %2836 = vmatpush.msra.mxu0 %v2771
    %2837 = vmatpush.msra.mxu0 %v2770
    %2838 = vmatpush.msra.mxu0 %v2769
    %2839 = vmatpush.msra.mxu0 %v2768
    %2840 = vmatpush.msra.mxu0 %v2767
    %2841 = vmatpush.msra.mxu0 %v2766
    %2842 = vmatmul.f32.gmra.mxu0 %v2825
    %v2843 = vpop.f32.mrf.mxu0
    %v2844 = vadd.f32 1e-05, %v2843
    %2845 = vdwg.mxu0
    %v2846 = vrsqrt.pop %v2844
    %v2847 = vmul.f32 %v2846, %v2844
    %v2848 = vmul.f32 %v2847, %v2846
    %v2849 = vmul.f32 0.5, %v2848
    %v2850 = vsub.f32 1.5, %v2849
    %v2851 = vmul.f32 %v2846, %v2850
    %vm2852 = vweird.f32 %v2844
    %vm2853 = vweird.f32 %v2846
    %vm2854 = vmor %vm2852, %vm2853
    %v2855 = vsel %vm2854, %v2846, %v2851
    %v2856 = vperm.slane %v2855, 0
    %v2857 = vmul.f32 %v2815, %v2856
    %v2858 = vmul.f32 %v2816, %v2856
    %v2859 = vperm.slane %v2765, 1
    %v2860 = vmul.f32 %v2857, %v2859
    %v2861 = vmul.f32 %v2858, %v2859
    %v2862 = vperm.slane %v2765, 2
    %v2863 = vadd.f32 %v2860, %v2862
    %v2864 = vadd.f32 %v2861, %v2862
    %v2865 = vmax.f32 %v2863, 0.0
    %v2866 = vmax.f32 %v2864, 0.0
    %v2867 = vadd.f32 %v2785, %v2786
    %v2868 = vrot.slane %v2867, 4
    %v2869 = vadd.f32 %v2867, %v2868
    %v2870 = vrot.slane %v2869, 2
    %v2871 = vadd.f32 %v2869, %v2870
    %v2872 = vrot.slane %v2871, 1
    %v2873 = vadd.f32 %v2871, %v2872
    %2874 = vmatpush.msra.mxu0 %v2781
    %2875 = vmatpush.msra.mxu0 %v2780
    %2876 = vmatpush.msra.mxu0 %v2779
    %2877 = vmatpush.msra.mxu0 %v2778
    %2878 = vmatpush.msra.mxu0 %v2777
    %2879 = vmatpush.msra.mxu0 %v2776
    %2880 = vmatpush.msra.mxu0 %v2775
    %2881 = vmatpush.msra.mxu0 %v2774
    %2882 = vmatpush.msra.mxu0 %v2773
    %2883 = vmatpush.msra.mxu0 %v2772
    %2884 = vmatpush.msra.mxu0 %v2771
    %2885 = vmatpush.msra.mxu0 %v2770
    %2886 = vmatpush.msra.mxu0 %v2769
    %2887 = vmatpush.msra.mxu0 %v2768
    %2888 = vmatpush.msra.mxu0 %v2767
    %2889 = vmatpush.msra.mxu0 %v2766
    %2890 = vmatmul.f32.gmra.mxu0 %v2873
    %v2891 = vpop.f32.mrf.mxu0
    %v2892 = vadd.f32 0.0, %v2891
    %2893 = vdwg.mxu0
    %v2894 = vperm.slane %v2892, 0
    %v2895 = vsub.f32 %v2785, %v2894
    %v2896 = vsub.f32 %v2786, %v2894
    %v2897 = vmul.f32 %v2895, %v2895
    %v2898 = vmul.f32 %v2896, %v2896
    %v2899 = vadd.f32 %v2897, %v2898
    %v2900 = vrot.slane %v2899, 4
    %v2901 = vadd.f32 %v2899, %v2900
    %v2902 = vrot.slane %v2901, 2
    %v2903 = vadd.f32 %v2901, %v2902
    %v2904 = vrot.slane %v2903, 1
    %v2905 = vadd.f32 %v2903, %v2904
    %2906 = vmatpush.msra.mxu0 %v2781
    %2907 = vmatpush.msra.mxu0 %v2780
    %2908 = vmatpush.msra.mxu0 %v2779
    %2909 = vmatpush.msra.mxu0 %v2778
    %2910 = vmatpush.msra.mxu0 %v2777
    %2911 = vmatpush.msra.mxu0 %v2776
    %2912 = vmatpush.msra.mxu0 %v2775
    %2913 = vmatpush.msra.mxu0 %v2774
    %2914 = vmatpush.msra.mxu0 %v2773
    %2915 = vmatpush.msra.mxu0 %v2772
    %2916 = vmatpush.msra.mxu0 %v2771
    %2917 = vmatpush.msra.mxu0 %v2770
    %2918 = vmatpush.msra.mxu0 %v2769
    %2919 = vmatpush.msra.mxu0 %v2768
    %2920 = vmatpush.msra.mxu0 %v2767
    %2921 = vmatpush.msra.mxu0 %v2766
    %2922 = vmatmul.f32.gmra.mxu0 %v2905
    %v2923 = vpop.f32.mrf.mxu0
    %v2924 = vadd.f32 1e-05, %v2923
    %2925 = vdwg.mxu0
    %v2926 = vrsqrt.pop %v2924
    %v2927 = vmul.f32 %v2926, %v2924
    %v2928 = vmul.f32 %v2927, %v2926
    %v2929 = vmul.f32 0.5, %v2928
    %v2930 = vsub.f32 1.5, %v2929
    %v2931 = vmul.f32 %v2926, %v2930
    %vm2932 = vweird.f32 %v2924
    %vm2933 = vweird.f32 %v2926
    %vm2934 = vmor %vm2932, %vm2933
    %v2935 = vsel %vm2934, %v2926, %v2931
    %v2936 = vperm.slane %v2935, 0
    %v2937 = vmul.f32 %v2895, %v2936
    %v2938 = vmul.f32 %v2896, %v2936
    %v2939 = vmul.f32 %v2937, %v2859
    %v2940 = vmul.f32 %v2938, %v2859
    %v2941 = vadd.f32 %v2939, %v2862
    %v2942 = vadd.f32 %v2940, %v2862
    %v2943 = vmax.f32 %v2941, 0.0
    %v2944 = vmax.f32 %v2942, 0.0
    %2945 = vst [vmem:[%s17] sm:$0xff] %v2865
    %2946 = vst [vmem:[%s17 + $0x8] sm:$0xff] %v2866
    %2947 = vst [vmem:[%s17 + $0x10] sm:$0xff] %v2943
    %2948 = vst [vmem:[%s17 + $0x18] sm:$0xff] %v2944
    // Predicated region
    $region70: #{proposal_branch_loc_forward.1} parent=1 // pred_check
      _
    $region71: #{proposal_branch_loc_forward.1} parent=1 // pred_check_branch
      %2950 = sbr.rel (0) target = $region73
    $region72: #{proposal_branch_loc_forward.1} parent=1 // pred_region
      _
    $region73: #{proposal_branch_loc_forward.1} parent=1 // pred_fallthru
      _
    // Predicated region
    $region74: #{proposal_branch_loc_forward.1} parent=1 // pred_check
      _
    $region75: #{proposal_branch_loc_forward.1} parent=1 // pred_check_branch
      %2952 = sbr.rel (0) target = $region77
    $region76: #{proposal_branch_loc_forward.1} parent=1 // pred_region
      %2954 = vsyncadd [#allocation3], 0
      %s2955 = sshll.u32 [#allocation2], 4
      %s2956 = int_to_ptr.vmem [resolvable:$true] %s2955
      %s2957 = sshll.u32 %s18, 4
      %s2958 = int_to_ptr.hbm [resolvable:$true] %s2957
      %2963 = dma.vmem_to_hbm [thread:$0]  %s2956, 512, %s2958, [#allocation3], 128, 128, 8
    $region77: #{proposal_branch_loc_forward.1} parent=1 // pred_fallthru
      _
    // Predicated region
    $region78: #{proposal_branch_loc_forward.1} parent=1 // pred_check
      _
    $region79: #{proposal_branch_loc_forward.1} parent=1 // pred_check_branch
      %2965 = sbr.rel (0) target = $region81
    $region80: #{proposal_branch_loc_forward.1} parent=1 // pred_region
      _
    $region81: #{proposal_branch_loc_forward.1} parent=1 // pred_fallthru
      _
    // Predicated region
    $region82: #{proposal_branch_loc_forward.1} parent=1 // pred_check
      _
    $region83: #{proposal_branch_loc_forward.1} parent=1 // pred_check_branch
      %2967 = sbr.rel (0) target = $region85
    $region84: #{proposal_branch_loc_forward.1} parent=1 // pred_region
      %2969 = dma.done [#allocation3], 512
    $region85: #{proposal_branch_loc_forward.1} parent=1 // pred_fallthru
      _
    %2970 = vsyncpa [#allocation3], 1

</llo_original>
